<compile_context>
chip_gen: v6e
topology: v6e:2x2x1
jax: 0.10.0
libtpu: 0.0.40
codegen_flags: <defaults>
</compile_context>

<pallas_src>
import jax
import jax.numpy as jnp
from jax.experimental import pallas as pl
from jax.experimental.pallas import tpu as pltpu


def attention_kernel(xc_ref, wqkv_ref, wout_ref, bout_ref, o_ref,
                     q_s, k_s, v_s):
    """One (batch, q_tile) grid step.

    xc_ref   : (1, N, Dq)   full self-attention context for this batch
    wqkv_ref : (H, Dq, 3d)  fused per-head Q/K/V weights (Q columns pre-scaled)
    wout_ref : (H, d, Dq)   per-head output-projection weights
    bout_ref : (1, Dq)      output bias (f32)
    o_ref    : (1, tq, Dq)  output rows for this q tile
    q_s/k_s/v_s : (H, N, d) persistent VMEM scratch (valid across the q axis)
    """
    qi = pl.program_id(1)
    heads, _, d = k_s.shape
    tq = o_ref.shape[1]
    mm_dtype = xc_ref.dtype        # compute dtype (bf16 in production)

    # ---- once per batch: fused Q/K/V projection over the full context.
    # The q-tile axis is 'arbitrary' (sequential), so this is hoisted out of
    # the q-tile loop; xc_ref's block index is constant along that axis so
    # Pallas only re-DMAs the context when the batch index changes.
    @pl.when(qi == 0)
    def _project_qkv():
        xc = xc_ref[0]                                            # (N, Dq)
        # Leading-dim broadcast -> one batched dot_general over heads
        # (no per-head loop, no sub-128-lane weight slices).  Runs once per
        # batch; see TODO(synk) above for the very-long-N flash variant.
        xc_b = jnp.broadcast_to(xc, (heads,) + xc.shape)          # (H, N, Dq)
        qkv = jnp.einsum('hnc,hce->hne', xc_b, wqkv_ref[...],
                         preferred_element_type=jnp.float32)      # (H, N, 3d)
        q_s[...] = qkv[..., :d].astype(q_s.dtype)      # scale folded into Wq
        k_s[...] = qkv[..., d:2 * d].astype(k_s.dtype)
        v_s[...] = qkv[..., 2 * d:].astype(v_s.dtype)

    q0 = pl.multiple_of(qi * tq, tq)
    q = q_s[:, pl.ds(q0, tq), :]                                  # (H, tq, d)
    k = k_s[...]                                                  # (H, N, d)
    v = v_s[...]                                                  # (H, N, d)

    # Scaled-dot-product attention, batched over heads (f32 accumulation).
    sim = jnp.einsum('hnd,hmd->hnm', q, k,
                     preferred_element_type=jnp.float32)          # (H, tq, N)
    sim = sim - jnp.max(sim, axis=-1, keepdims=True)
    p = jnp.exp(sim)
    # EUP approximate reciprocal (~1e-3 rel error); acceptable for this
    # inference path.  TODO(synk): expose approx=False for tight accuracy.
    p = p * pl.reciprocal(jnp.sum(p, axis=-1, keepdims=True), approx=True)

    out = jnp.einsum('hnm,hmd->hnd', p.astype(mm_dtype), v,
                     preferred_element_type=jnp.float32)          # (H, tq, d)

    # Per-head output projection, then head sum on the VPU (see header note on
    # why the head reduction is not folded into a single MXU contraction).
    yh = jnp.einsum('hnd,hdq->hnq', out.astype(mm_dtype), wout_ref[...],
                    preferred_element_type=jnp.float32)           # (H, tq, Dq)
    y = jnp.sum(yh, axis=0) + bout_ref[...]                       # (tq, Dq)

    o_ref[0] = y.astype(o_ref.dtype)


def _vmem_capacity_bytes():
    """Best-effort query of per-core VMEM; conservative fallback (v7x = 64 MiB)."""
    try:
        return int(pltpu.get_tpu_info().vmem_capacity_bytes)
    except Exception:
        return 64 * 1024 * 1024


def attention_forward(x, wq, wkv, wout, bout, *, heads, dim_head,
                      q_tile=None, compute_dtype=None):
    B, N, Dq = x.shape
    inner = heads * dim_head
    scale = dim_head ** (-0.5)
    cdtype = jnp.dtype(compute_dtype) if compute_dtype is not None else jnp.dtype(x.dtype)

    vmem_cap = _vmem_capacity_bytes()
    if q_tile is None:
        # Smaller q tiles on 64 MiB-VMEM parts (v7x), larger on v5e/v6e (128 MiB).
        max_tile = 128 if vmem_cap <= 64 * 1024 * 1024 else 256
        if N <= max_tile:
            q_tile = N
        else:
            q_tile = max((t for t in range(8, max_tile + 1) if N % t == 0),
                         default=N)
    assert N % q_tile == 0, "sequence length must be divisible by q_tile"
    num_q_tiles = N // q_tile

    # Wrapper-side (free) per-head weight layout; inner dim is (h d) with h
    # outer, matching the PyTorch rearrange 'b n (h d) -> (b h) n d'.  The
    # softmax scale is folded into the Q weights (weights, not activations).
    wq_h = (wq * scale).reshape(Dq, heads, dim_head).transpose(1, 0, 2)
    wk_h = wkv[:, :inner].reshape(Dq, heads, dim_head).transpose(1, 0, 2)
    wv_h = wkv[:, inner:].reshape(Dq, heads, dim_head).transpose(1, 0, 2)
    wqkv_h = jnp.concatenate([wq_h, wk_h, wv_h], axis=-1).astype(cdtype)  # (H,Dq,3d)
    wout_h = wout.reshape(heads, dim_head, Dq).astype(cdtype)             # (H,d,Dq)
    bout2 = bout.reshape(1, Dq).astype(jnp.float32)
    x_c = x.astype(cdtype)

    # Per-generation VMEM budget: estimate the in-kernel footprint, leave
    # headroom, and stay below the device's capacity.
    isz = cdtype.itemsize
    est = (2 * N * Dq * isz                                    # context block (2-buf)
           + (heads * Dq * 3 * dim_head + heads * dim_head * Dq) * isz + Dq * 4
           + 3 * heads * N * dim_head * isz                    # persistent q/k/v scratch
           + heads * N * 3 * dim_head * 4                      # f32 fused-projection temp
           + heads * q_tile * N * 4                            # f32 score matrix
           + 2 * q_tile * Dq * jnp.dtype(x.dtype).itemsize)    # output block (2-buf)
    vmem_limit = int(min(max(2 * est, 16 * 1024 * 1024),
                         vmem_cap - 8 * 1024 * 1024))

    def call(single_buffer_weights):
        def const_spec(shape):
            idx = lambda b, i: (0,) * len(shape)
            if single_buffer_weights:
                # Grid-invariant operands: no point double-buffering them.
                return pl.BlockSpec(shape, idx, pipeline_mode=pl.Buffered(1))
            return pl.BlockSpec(shape, idx)

        return pl.pallas_call(
            attention_kernel,
            out_shape=jax.ShapeDtypeStruct((B, N, Dq), x.dtype),
            grid=(B, num_q_tiles),
            in_specs=[
                # Full self-attention context; constant along the q-tile axis,
                # so it is only re-fetched when the batch index changes.
                pl.BlockSpec((1, N, Dq), lambda b, i: (b, 0, 0)),
                const_spec((heads, Dq, 3 * dim_head)),   # fused Wqkv
                const_spec((heads, dim_head, Dq)),       # Wout
                const_spec((1, Dq)),                     # bias
            ],
            out_specs=pl.BlockSpec((1, q_tile, Dq), lambda b, i: (b, i, 0)),
            scratch_shapes=[pltpu.VMEM((heads, N, dim_head), cdtype)] * 3,
            compiler_params=pltpu.CompilerParams(
                # q-tile axis must be sequential ('arbitrary') so the q/k/v
                # scratch computed at q-tile 0 stays valid for later tiles.
                dimension_semantics=("parallel", "arbitrary"),
                vmem_limit_bytes=vmem_limit,
            ),
        )(x_c, wqkv_h, wout_h, bout2)

    try:
        return call(True)
    except Exception:
        # pl.Buffered(1) single-buffering not supported on this jax version;
        # fall back to default (double) buffering for the weight operands.
        return call(False)


def reference_forward(x, wq, wkv, wout, bout, *, heads, dim_head):
    """Plain-JAX reference matching the PyTorch forward (context=None, mask=None)."""
    B, N, Dq = x.shape
    inner = heads * dim_head
    scale = dim_head ** (-0.5)
    q = x @ wq                                   # (B, N, inner)
    kv = x @ wkv                                 # (B, N, 2*inner)
    k, v = kv[..., :inner], kv[..., inner:]

    def split_heads(t):                          # b n (h d) -> (b h) n d
        return t.reshape(B, N, heads, dim_head).transpose(0, 2, 1, 3).reshape(
            B * heads, N, dim_head)

    qh, kh, vh = map(split_heads, (q, k, v))
    sim = jnp.einsum('bid,bjd->bij', qh, kh) * scale
    attn = jax.nn.softmax(sim, axis=-1)
    out = jnp.einsum('bij,bjd->bid', attn, vh)   # (B*h, N, d)
    out = out.reshape(B, heads, N, dim_head).transpose(0, 2, 1, 3).reshape(B, N, inner)
    return out @ wout + bout


if __name__ == "__main__":
    # Small shapes consistent with the module's forward.
    B, N = 2, 8
    query_dim, heads, dim_head = 32, 4, 16
    inner_dim = heads * dim_head

    key = jax.random.PRNGKey(0)
    kx, kq, kkv, kw, kb = jax.random.split(key, 5)

    x = jax.random.normal(kx, (B, N, query_dim), dtype=jnp.float32)

    # Deterministic parameter init (weights stored as (in, out)).
    wq = jax.random.normal(kq, (query_dim, inner_dim), dtype=jnp.float32) * 0.05
    wkv = jax.random.normal(kkv, (query_dim, 2 * inner_dim), dtype=jnp.float32) * 0.05
    wout = jax.random.normal(kw, (inner_dim, query_dim), dtype=jnp.float32) * 0.05
    bout = jax.random.normal(kb, (1, query_dim), dtype=jnp.float32) * 0.05

    y = attention_forward(x, wq, wkv, wout, bout, heads=heads, dim_head=dim_head)
    y = jax.block_until_ready(y)

    y_ref = reference_forward(x, wq, wkv, wout, bout, heads=heads, dim_head=dim_head)
    assert y.shape == (B, N, query_dim)
    # approx-reciprocal softmax denominator -> slightly relaxed tolerance.
    assert jnp.allclose(y, y_ref, atol=1e-3, rtol=1e-3), "mismatch vs reference"

    print("KERNEL_OK")
</pallas_src>

<mosaic_0001>
module attributes {stable_mosaic.version = 11 : i64} {
  func.func @attention_kernel(%arg0: i32, %arg1: i32, %arg2: memref<1x8x32xf32, #tpu.memory_space<vmem>>, %arg3: memref<4x32x48xf32, #tpu.memory_space<vmem>>, %arg4: memref<4x16x32xf32, #tpu.memory_space<vmem>>, %arg5: memref<1x32xf32, #tpu.memory_space<vmem>>, %arg6: memref<1x8x32xf32, #tpu.memory_space<vmem>>, %arg7: memref<4x8x16xf32, #tpu.memory_space<vmem>>, %arg8: memref<4x8x16xf32, #tpu.memory_space<vmem>>, %arg9: memref<4x8x16xf32, #tpu.memory_space<vmem>>) attributes {dimension_semantics = [#tpu.dimension_semantics<parallel>, #tpu.dimension_semantics<arbitrary>], iteration_bounds = array<i64: 2, 1>, scalar_prefetch = 0 : i64, scratch_operands = 3 : i64, tpu.core_type = #tpu.core_type<tc>, window_params = [{transform_indices = @transform_0, window_bounds = array<i64: 1, 8, 32>}, {pipeline_mode = #tpu.pipeline_mode<synchronous>, transform_indices = @transform_1, window_bounds = array<i64: 4, 32, 48>}, {pipeline_mode = #tpu.pipeline_mode<synchronous>, transform_indices = @transform_2, window_bounds = array<i64: 4, 16, 32>}, {pipeline_mode = #tpu.pipeline_mode<synchronous>, transform_indices = @transform_3, window_bounds = array<i64: 1, 32>}, {transform_indices = @transform_4, window_bounds = array<i64: 1, 8, 32>}]} {
    %c0_i32 = arith.constant 0 : i32
    %0 = arith.cmpi eq, %arg1, %c0_i32 : i32
    %1 = arith.extui %0 : i1 to i32
    %c0_i32_0 = arith.constant 0 : i32
    %2 = arith.cmpi ne, %1, %c0_i32_0 : i32
    scf.if %2 {
      %c0_21 = arith.constant 0 : index
      %c0_22 = arith.constant 0 : index
      %c0_23 = arith.constant 0 : index
      %30 = vector.load %arg2[%c0_21, %c0_22, %c0_23] : memref<1x8x32xf32, #tpu.memory_space<vmem>>, vector<1x8x32xf32>
      %31 = vector.shape_cast %30 : vector<1x8x32xf32> to vector<8x32xf32>
      %32 = vector.shape_cast %31 : vector<8x32xf32> to vector<1x8x32xf32>
      %33 = vector.broadcast %32 : vector<1x8x32xf32> to vector<4x8x32xf32>
      %c0_24 = arith.constant 0 : index
      %c0_25 = arith.constant 0 : index
      %c0_26 = arith.constant 0 : index
      %34 = vector.load %arg3[%c0_24, %c0_25, %c0_26] : memref<4x32x48xf32, #tpu.memory_space<vmem>>, vector<4x32x48xf32>
      "tpu.trace_start"() <{level = 10 : i32, message = "hnc,hce->hne"}> : () -> ()
      %cst_27 = arith.constant dense<0.000000e+00> : vector<4x8x48xf32>
      %35 = tpu.matmul %33, %34, %cst_27 {dimension_numbers = #tpu.dot_dimension_numbers<[2], [1], [1], [2], [0, 0, 0, 1, 1, 2], [0], [0]>} : vector<4x8x32xf32>, vector<4x32x48xf32>, vector<4x8x48xf32> -> vector<4x8x48xf32>
      "tpu.trace_stop"() : () -> ()
      %36 = vector.extract_strided_slice %35 {offsets = [0, 0, 0], sizes = [4, 8, 16], strides = [1, 1, 1]} : vector<4x8x48xf32> to vector<4x8x16xf32>
      %c0_28 = arith.constant 0 : index
      %c0_29 = arith.constant 0 : index
      %c0_30 = arith.constant 0 : index
      %37 = vector.load %arg7[%c0_28, %c0_29, %c0_30] : memref<4x8x16xf32, #tpu.memory_space<vmem>>, vector<4x8x16xf32>
      tpu.vector_store %arg7[%c0_28, %c0_29, %c0_30], %36 {strides = array<i32>} : memref<4x8x16xf32, #tpu.memory_space<vmem>>, vector<4x8x16xf32>,
      %38 = vector.extract_strided_slice %35 {offsets = [0, 0, 16], sizes = [4, 8, 16], strides = [1, 1, 1]} : vector<4x8x48xf32> to vector<4x8x16xf32>
      %c0_31 = arith.constant 0 : index
      %c0_32 = arith.constant 0 : index
      %c0_33 = arith.constant 0 : index
      %39 = vector.load %arg8[%c0_31, %c0_32, %c0_33] : memref<4x8x16xf32, #tpu.memory_space<vmem>>, vector<4x8x16xf32>
      tpu.vector_store %arg8[%c0_31, %c0_32, %c0_33], %38 {strides = array<i32>} : memref<4x8x16xf32, #tpu.memory_space<vmem>>, vector<4x8x16xf32>,
      %40 = vector.extract_strided_slice %35 {offsets = [0, 0, 32], sizes = [4, 8, 16], strides = [1, 1, 1]} : vector<4x8x48xf32> to vector<4x8x16xf32>
      %c0_34 = arith.constant 0 : index
      %c0_35 = arith.constant 0 : index
      %c0_36 = arith.constant 0 : index
      %41 = vector.load %arg9[%c0_34, %c0_35, %c0_36] : memref<4x8x16xf32, #tpu.memory_space<vmem>>, vector<4x8x16xf32>
      tpu.vector_store %arg9[%c0_34, %c0_35, %c0_36], %40 {strides = array<i32>} : memref<4x8x16xf32, #tpu.memory_space<vmem>>, vector<4x8x16xf32>,
    } else {
    }
    %c8_i32 = arith.constant 8 : i32
    %3 = arith.muli %arg1, %c8_i32 : i32
    %4 = tpu.assume_multiple %3, 8 : i32
    %c0 = arith.constant 0 : index
    %5 = arith.index_cast %4 : i32 to index
    %c0_1 = arith.constant 0 : index
    %6 = vector.load %arg7[%c0, %5, %c0_1] : memref<4x8x16xf32, #tpu.memory_space<vmem>>, vector<4x8x16xf32>
    %c0_2 = arith.constant 0 : index
    %c0_3 = arith.constant 0 : index
    %c0_4 = arith.constant 0 : index
    %7 = vector.load %arg8[%c0_2, %c0_3, %c0_4] : memref<4x8x16xf32, #tpu.memory_space<vmem>>, vector<4x8x16xf32>
    %c0_5 = arith.constant 0 : index
    %c0_6 = arith.constant 0 : index
    %c0_7 = arith.constant 0 : index
    %8 = vector.load %arg9[%c0_5, %c0_6, %c0_7] : memref<4x8x16xf32, #tpu.memory_space<vmem>>, vector<4x8x16xf32>
    "tpu.trace_start"() <{level = 10 : i32, message = "hnd,hmd->hnm"}> : () -> ()
    %cst = arith.constant dense<0.000000e+00> : vector<4x8x8xf32>
    %9 = tpu.matmul %6, %7, %cst {dimension_numbers = #tpu.dot_dimension_numbers<[2], [2], [1], [1], [0, 0, 0, 1, 1, 1], [0], [0]>} : vector<4x8x16xf32>, vector<4x8x16xf32>, vector<4x8x8xf32> -> vector<4x8x8xf32>
    "tpu.trace_stop"() : () -> ()
    %cst_8 = arith.constant dense<0xFF800000> : vector<4x8xf32>
    %10 = vector.multi_reduction <maximumf>, %9, %cst_8 [2] : vector<4x8x8xf32> to vector<4x8xf32>
    %11 = vector.shape_cast %10 : vector<4x8xf32> to vector<4x8x1xf32>
    %12 = vector.broadcast %11 : vector<4x8x1xf32> to vector<4x8x8xf32>
    %13 = arith.subf %9, %12 : vector<4x8x8xf32>
    %14 = math.exp %13 : vector<4x8x8xf32>
    %cst_9 = arith.constant dense<0.000000e+00> : vector<4x8xf32>
    %15 = vector.multi_reduction <add>, %14, %cst_9 [2] : vector<4x8x8xf32> to vector<4x8xf32>
    %16 = vector.shape_cast %15 : vector<4x8xf32> to vector<4x8x1xf32>
    %17 = tpu.reciprocal %16 {approx = true} : vector<4x8x1xf32> -> vector<4x8x1xf32>
    %18 = vector.broadcast %17 : vector<4x8x1xf32> to vector<4x8x8xf32>
    %19 = arith.mulf %14, %18 : vector<4x8x8xf32>
    "tpu.trace_start"() <{level = 10 : i32, message = "hnm,hmd->hnd"}> : () -> ()
    %cst_10 = arith.constant dense<0.000000e+00> : vector<4x8x16xf32>
    %20 = tpu.matmul %19, %8, %cst_10 {dimension_numbers = #tpu.dot_dimension_numbers<[2], [1], [1], [2], [0, 0, 0, 1, 1, 2], [0], [0]>} : vector<4x8x8xf32>, vector<4x8x16xf32>, vector<4x8x16xf32> -> vector<4x8x16xf32>
    "tpu.trace_stop"() : () -> ()
    %c0_11 = arith.constant 0 : index
    %c0_12 = arith.constant 0 : index
    %c0_13 = arith.constant 0 : index
    %21 = vector.load %arg4[%c0_11, %c0_12, %c0_13] : memref<4x16x32xf32, #tpu.memory_space<vmem>>, vector<4x16x32xf32>
    "tpu.trace_start"() <{level = 10 : i32, message = "hnd,hdq->hnq"}> : () -> ()
    %cst_14 = arith.constant dense<0.000000e+00> : vector<4x8x32xf32>
    %22 = tpu.matmul %20, %21, %cst_14 {dimension_numbers = #tpu.dot_dimension_numbers<[2], [1], [1], [2], [0, 0, 0, 1, 1, 2], [0], [0]>} : vector<4x8x16xf32>, vector<4x16x32xf32>, vector<4x8x32xf32> -> vector<4x8x32xf32>
    "tpu.trace_stop"() : () -> ()
    %cst_15 = arith.constant dense<0.000000e+00> : vector<8x32xf32>
    %23 = vector.multi_reduction <add>, %22, %cst_15 [0] : vector<4x8x32xf32> to vector<8x32xf32>
    %c0_16 = arith.constant 0 : index
    %c0_17 = arith.constant 0 : index
    %24 = vector.load %arg5[%c0_16, %c0_17] : memref<1x32xf32, #tpu.memory_space<vmem>>, vector<1x32xf32>
    %25 = vector.broadcast %24 : vector<1x32xf32> to vector<8x32xf32>
    %26 = arith.addf %23, %25 : vector<8x32xf32>
    %c0_18 = arith.constant 0 : index
    %c0_19 = arith.constant 0 : index
    %c0_20 = arith.constant 0 : index
    %27 = vector.load %arg6[%c0_18, %c0_19, %c0_20] : memref<1x8x32xf32, #tpu.memory_space<vmem>>, vector<1x8x32xf32>
    %28 = vector.shape_cast %27 : vector<1x8x32xf32> to vector<8x32xf32>
    %29 = vector.shape_cast %26 : vector<8x32xf32> to vector<1x8x32xf32>
    tpu.vector_store %arg6[%c0_18, %c0_19, %c0_20], %29 {strides = array<i32>} : memref<1x8x32xf32, #tpu.memory_space<vmem>>, vector<1x8x32xf32>,
    return
  }
  func.func @transform_0(%arg0: i32, %arg1: i32) -> (i32, i32, i32) {
    %c0_i32 = arith.constant 0 : i32
    %c0_i32_0 = arith.constant 0 : i32
    %c0_i32_1 = arith.constant 0 : i32
    return %arg0, %c0_i32, %c0_i32_0 : i32, i32, i32
  }
  func.func @transform_1(%arg0: i32, %arg1: i32) -> (i32, i32, i32) {
    %c0_i32 = arith.constant 0 : i32
    %c0_i32_0 = arith.constant 0 : i32
    %c0_i32_1 = arith.constant 0 : i32
    %c0_i32_2 = arith.constant 0 : i32
    return %c0_i32, %c0_i32_0, %c0_i32_1 : i32, i32, i32
  }
  func.func @transform_2(%arg0: i32, %arg1: i32) -> (i32, i32, i32) {
    %c0_i32 = arith.constant 0 : i32
    %c0_i32_0 = arith.constant 0 : i32
    %c0_i32_1 = arith.constant 0 : i32
    %c0_i32_2 = arith.constant 0 : i32
    return %c0_i32, %c0_i32_0, %c0_i32_1 : i32, i32, i32
  }
  func.func @transform_3(%arg0: i32, %arg1: i32) -> (i32, i32) {
    %c0_i32 = arith.constant 0 : i32
    %c0_i32_0 = arith.constant 0 : i32
    %c0_i32_1 = arith.constant 0 : i32
    return %c0_i32, %c0_i32_0 : i32, i32
  }
  func.func @transform_4(%arg0: i32, %arg1: i32) -> (i32, i32, i32) {
    %c0_i32 = arith.constant 0 : i32
    %c0_i32_0 = arith.constant 0 : i32
    return %arg0, %arg1, %c0_i32 : i32, i32, i32
  }
}

module attributes {stable_mosaic.version = 11 : i64} {
  func.func @attention_kernel(%arg0: i32, %arg1: i32, %arg2: memref<1x8x32xf32, #tpu.memory_space<vmem>>, %arg3: memref<4x32x48xf32, #tpu.memory_space<vmem>>, %arg4: memref<4x16x32xf32, #tpu.memory_space<vmem>>, %arg5: memref<1x32xf32, #tpu.memory_space<vmem>>, %arg6: memref<1x8x32xf32, #tpu.memory_space<vmem>>, %arg7: memref<4x8x16xf32, #tpu.memory_space<vmem>>, %arg8: memref<4x8x16xf32, #tpu.memory_space<vmem>>, %arg9: memref<4x8x16xf32, #tpu.memory_space<vmem>>) attributes {dimension_semantics = [#tpu.dimension_semantics<parallel>, #tpu.dimension_semantics<arbitrary>], iteration_bounds = array<i64: 2, 1>, scalar_prefetch = 0 : i64, scratch_operands = 3 : i64, tpu.core_type = #tpu.core_type<tc>, window_params = [{transform_indices = @transform_0, window_bounds = array<i64: 1, 8, 32>}, {pipeline_mode = #tpu.pipeline_mode<synchronous>, transform_indices = @transform_1, window_bounds = array<i64: 4, 32, 48>}, {pipeline_mode = #tpu.pipeline_mode<synchronous>, transform_indices = @transform_2, window_bounds = array<i64: 4, 16, 32>}, {pipeline_mode = #tpu.pipeline_mode<synchronous>, transform_indices = @transform_3, window_bounds = array<i64: 1, 32>}, {transform_indices = @transform_4, window_bounds = array<i64: 1, 8, 32>}]} {
    %c0_i32 = arith.constant 0 : i32
    %0 = arith.cmpi eq, %arg1, %c0_i32 : i32
    %1 = arith.extui %0 : i1 to i32
    %c0_i32_0 = arith.constant 0 : i32
    %2 = arith.cmpi ne, %1, %c0_i32_0 : i32
    scf.if %2 {
      %c0_21 = arith.constant 0 : index
      %c0_22 = arith.constant 0 : index
      %c0_23 = arith.constant 0 : index
      %30 = vector.load %arg2[%c0_21, %c0_22, %c0_23] : memref<1x8x32xf32, #tpu.memory_space<vmem>>, vector<1x8x32xf32>
      %31 = vector.shape_cast %30 : vector<1x8x32xf32> to vector<8x32xf32>
      %32 = vector.shape_cast %31 : vector<8x32xf32> to vector<1x8x32xf32>
      %33 = vector.broadcast %32 : vector<1x8x32xf32> to vector<4x8x32xf32>
      %c0_24 = arith.constant 0 : index
      %c0_25 = arith.constant 0 : index
      %c0_26 = arith.constant 0 : index
      %34 = vector.load %arg3[%c0_24, %c0_25, %c0_26] : memref<4x32x48xf32, #tpu.memory_space<vmem>>, vector<4x32x48xf32>
      "tpu.trace_start"() <{level = 10 : i32, message = "hnc,hce->hne"}> : () -> ()
      %cst_27 = arith.constant dense<0.000000e+00> : vector<4x8x48xf32>
      %35 = tpu.matmul %33, %34, %cst_27 {dimension_numbers = #tpu.dot_dimension_numbers<[2], [1], [1], [2], [0, 0, 0, 1, 1, 2], [0], [0]>} : vector<4x8x32xf32>, vector<4x32x48xf32>, vector<4x8x48xf32> -> vector<4x8x48xf32>
      "tpu.trace_stop"() : () -> ()
      %36 = vector.extract_strided_slice %35 {offsets = [0, 0, 0], sizes = [4, 8, 16], strides = [1, 1, 1]} : vector<4x8x48xf32> to vector<4x8x16xf32>
      %c0_28 = arith.constant 0 : index
      %c0_29 = arith.constant 0 : index
      %c0_30 = arith.constant 0 : index
      %37 = vector.load %arg7[%c0_28, %c0_29, %c0_30] : memref<4x8x16xf32, #tpu.memory_space<vmem>>, vector<4x8x16xf32>
      tpu.vector_store %arg7[%c0_28, %c0_29, %c0_30], %36 {strides = array<i32>} : memref<4x8x16xf32, #tpu.memory_space<vmem>>, vector<4x8x16xf32>,
      %38 = vector.extract_strided_slice %35 {offsets = [0, 0, 16], sizes = [4, 8, 16], strides = [1, 1, 1]} : vector<4x8x48xf32> to vector<4x8x16xf32>
      %c0_31 = arith.constant 0 : index
      %c0_32 = arith.constant 0 : index
      %c0_33 = arith.constant 0 : index
      %39 = vector.load %arg8[%c0_31, %c0_32, %c0_33] : memref<4x8x16xf32, #tpu.memory_space<vmem>>, vector<4x8x16xf32>
      tpu.vector_store %arg8[%c0_31, %c0_32, %c0_33], %38 {strides = array<i32>} : memref<4x8x16xf32, #tpu.memory_space<vmem>>, vector<4x8x16xf32>,
      %40 = vector.extract_strided_slice %35 {offsets = [0, 0, 32], sizes = [4, 8, 16], strides = [1, 1, 1]} : vector<4x8x48xf32> to vector<4x8x16xf32>
      %c0_34 = arith.constant 0 : index
      %c0_35 = arith.constant 0 : index
      %c0_36 = arith.constant 0 : index
      %41 = vector.load %arg9[%c0_34, %c0_35, %c0_36] : memref<4x8x16xf32, #tpu.memory_space<vmem>>, vector<4x8x16xf32>
      tpu.vector_store %arg9[%c0_34, %c0_35, %c0_36], %40 {strides = array<i32>} : memref<4x8x16xf32, #tpu.memory_space<vmem>>, vector<4x8x16xf32>,
    } else {
    }
    %c8_i32 = arith.constant 8 : i32
    %3 = arith.muli %arg1, %c8_i32 : i32
    %4 = tpu.assume_multiple %3, 8 : i32
    %c0 = arith.constant 0 : index
    %5 = arith.index_cast %4 : i32 to index
    %c0_1 = arith.constant 0 : index
    %6 = vector.load %arg7[%c0, %5, %c0_1] : memref<4x8x16xf32, #tpu.memory_space<vmem>>, vector<4x8x16xf32>
    %c0_2 = arith.constant 0 : index
    %c0_3 = arith.constant 0 : index
    %c0_4 = arith.constant 0 : index
    %7 = vector.load %arg8[%c0_2, %c0_3, %c0_4] : memref<4x8x16xf32, #tpu.memory_space<vmem>>, vector<4x8x16xf32>
    %c0_5 = arith.constant 0 : index
    %c0_6 = arith.constant 0 : index
    %c0_7 = arith.constant 0 : index
    %8 = vector.load %arg9[%c0_5, %c0_6, %c0_7] : memref<4x8x16xf32, #tpu.memory_space<vmem>>, vector<4x8x16xf32>
    "tpu.trace_start"() <{level = 10 : i32, message = "hnd,hmd->hnm"}> : () -> ()
    %cst = arith.constant dense<0.000000e+00> : vector<4x8x8xf32>
    %9 = tpu.matmul %6, %7, %cst {dimension_numbers = #tpu.dot_dimension_numbers<[2], [2], [1], [1], [0, 0, 0, 1, 1, 1], [0], [0]>} : vector<4x8x16xf32>, vector<4x8x16xf32>, vector<4x8x8xf32> -> vector<4x8x8xf32>
    "tpu.trace_stop"() : () -> ()
    %cst_8 = arith.constant dense<0xFF800000> : vector<4x8xf32>
    %10 = vector.multi_reduction <maximumf>, %9, %cst_8 [2] : vector<4x8x8xf32> to vector<4x8xf32>
    %11 = vector.shape_cast %10 : vector<4x8xf32> to vector<4x8x1xf32>
    %12 = vector.broadcast %11 : vector<4x8x1xf32> to vector<4x8x8xf32>
    %13 = arith.subf %9, %12 : vector<4x8x8xf32>
    %14 = math.exp %13 : vector<4x8x8xf32>
    %cst_9 = arith.constant dense<0.000000e+00> : vector<4x8xf32>
    %15 = vector.multi_reduction <add>, %14, %cst_9 [2] : vector<4x8x8xf32> to vector<4x8xf32>
    %16 = vector.shape_cast %15 : vector<4x8xf32> to vector<4x8x1xf32>
    %17 = tpu.reciprocal %16 {approx = true} : vector<4x8x1xf32> -> vector<4x8x1xf32>
    %18 = vector.broadcast %17 : vector<4x8x1xf32> to vector<4x8x8xf32>
    %19 = arith.mulf %14, %18 : vector<4x8x8xf32>
    "tpu.trace_start"() <{level = 10 : i32, message = "hnm,hmd->hnd"}> : () -> ()
    %cst_10 = arith.constant dense<0.000000e+00> : vector<4x8x16xf32>
    %20 = tpu.matmul %19, %8, %cst_10 {dimension_numbers = #tpu.dot_dimension_numbers<[2], [1], [1], [2], [0, 0, 0, 1, 1, 2], [0], [0]>} : vector<4x8x8xf32>, vector<4x8x16xf32>, vector<4x8x16xf32> -> vector<4x8x16xf32>
    "tpu.trace_stop"() : () -> ()
    %c0_11 = arith.constant 0 : index
    %c0_12 = arith.constant 0 : index
    %c0_13 = arith.constant 0 : index
    %21 = vector.load %arg4[%c0_11, %c0_12, %c0_13] : memref<4x16x32xf32, #tpu.memory_space<vmem>>, vector<4x16x32xf32>
    "tpu.trace_start"() <{level = 10 : i32, message = "hnd,hdq->hnq"}> : () -> ()
    %cst_14 = arith.constant dense<0.000000e+00> : vector<4x8x32xf32>
    %22 = tpu.matmul %20, %21, %cst_14 {dimension_numbers = #tpu.dot_dimension_numbers<[2], [1], [1], [2], [0, 0, 0, 1, 1, 2], [0], [0]>} : vector<4x8x16xf32>, vector<4x16x32xf32>, vector<4x8x32xf32> -> vector<4x8x32xf32>
    "tpu.trace_stop"() : () -> ()
    %cst_15 = arith.constant dense<0.000000e+00> : vector<8x32xf32>
    %23 = vector.multi_reduction <add>, %22, %cst_15 [0] : vector<4x8x32xf32> to vector<8x32xf32>
    %c0_16 = arith.constant 0 : index
    %c0_17 = arith.constant 0 : index
    %24 = vector.load %arg5[%c0_16, %c0_17] : memref<1x32xf32, #tpu.memory_space<vmem>>, vector<1x32xf32>
    %25 = vector.broadcast %24 : vector<1x32xf32> to vector<8x32xf32>
    %26 = arith.addf %23, %25 : vector<8x32xf32>
    %c0_18 = arith.constant 0 : index
    %c0_19 = arith.constant 0 : index
    %c0_20 = arith.constant 0 : index
    %27 = vector.load %arg6[%c0_18, %c0_19, %c0_20] : memref<1x8x32xf32, #tpu.memory_space<vmem>>, vector<1x8x32xf32>
    %28 = vector.shape_cast %27 : vector<1x8x32xf32> to vector<8x32xf32>
    %29 = vector.shape_cast %26 : vector<8x32xf32> to vector<1x8x32xf32>
    tpu.vector_store %arg6[%c0_18, %c0_19, %c0_20], %29 {strides = array<i32>} : memref<1x8x32xf32, #tpu.memory_space<vmem>>, vector<1x8x32xf32>,
    return
  }
  func.func @transform_0(%arg0: i32, %arg1: i32) -> (i32, i32, i32) {
    %c0_i32 = arith.constant 0 : i32
    %c0_i32_0 = arith.constant 0 : i32
    %c0_i32_1 = arith.constant 0 : i32
    return %arg0, %c0_i32, %c0_i32_0 : i32, i32, i32
  }
  func.func @transform_1(%arg0: i32, %arg1: i32) -> (i32, i32, i32) {
    %c0_i32 = arith.constant 0 : i32
    %c0_i32_0 = arith.constant 0 : i32
    %c0_i32_1 = arith.constant 0 : i32
    %c0_i32_2 = arith.constant 0 : i32
    return %c0_i32, %c0_i32_0, %c0_i32_1 : i32, i32, i32
  }
  func.func @transform_2(%arg0: i32, %arg1: i32) -> (i32, i32, i32) {
    %c0_i32 = arith.constant 0 : i32
    %c0_i32_0 = arith.constant 0 : i32
    %c0_i32_1 = arith.constant 0 : i32
    %c0_i32_2 = arith.constant 0 : i32
    return %c0_i32, %c0_i32_0, %c0_i32_1 : i32, i32, i32
  }
  func.func @transform_3(%arg0: i32, %arg1: i32) -> (i32, i32) {
    %c0_i32 = arith.constant 0 : i32
    %c0_i32_0 = arith.constant 0 : i32
    %c0_i32_1 = arith.constant 0 : i32
    return %c0_i32, %c0_i32_0 : i32, i32
  }
  func.func @transform_4(%arg0: i32, %arg1: i32) -> (i32, i32, i32) {
    %c0_i32 = arith.constant 0 : i32
    %c0_i32_0 = arith.constant 0 : i32
    return %arg0, %arg1, %c0_i32 : i32, i32, i32
  }
}

</mosaic_0001>

<llo_original>
// kernel: tpu_custom_call.1
$region0: #{tpu_custom_call.1}
  #allocation0 [shape = 'u32[]', space=smem, size = 0x4, offset = 0x4, fixed_abs, tag = 'smem constant byte address 0x4 - core index']
  #allocation1 [shape = 'u32[144,128]{1,0:T(1,128)}', space=vmem, size = 0x12000, scoped, tag = 'internal scratch']
  #allocation2 [shape = 'f32[4,8,16]{2,1,0:T(8,128)}', space=vmem, size = 0x4000, scoped, tag = 'scratch operand']
  #allocation3 [shape = 'f32[4,8,16]{2,1,0:T(8,128)}', space=vmem, size = 0x4000, scoped, tag = 'scratch operand']
  #allocation4 [shape = 'f32[4,8,16]{2,1,0:T(8,128)}', space=vmem, size = 0x4000, scoped, tag = 'scratch operand']
  %s0 = inlined_call_operand.hbm [shape: f32[2,8,32], index: 0, kind: input, shape index: {}]
  %s1 = inlined_call_operand.hbm [shape: f32[4,32,48], index: 1, kind: input, shape index: {}]
  %s2 = inlined_call_operand.hbm [shape: f32[4,16,32], index: 2, kind: input, shape index: {}]
  %s3 = inlined_call_operand.vmem [shape: f32[1,32], index: 3, kind: input, shape index: {}]
  %s4 = inlined_call_operand.hbm [shape: f32[2,8,32], index: 4, kind: output, shape index: {}]
  %s5 = sld [smem:[#allocation0]]
  $region65: #{tpu_custom_call.1} parent=0
    _
  %s7 = ssub.s32 1, %s5
  %s8 = scalar_select 0, %s7, %s5
  $region1: #{tpu_custom_call.1} parent=0
    #allocation5 [shape = 'u8[8192]{0}', space=vmem, size = 0x2000, scoped, tag = 'input window, operand 0']
    #allocation6 [shape = 's32[2]{0}', space=sflag, size = 0x8, scoped, tag = 'scoped memory for tpu_custom_call.1']
    #allocation7 [shape = 's32[2]{0}', space=sflag, size = 0x8, scoped, tag = 'scoped memory for tpu_custom_call.1']
    #allocation8 [shape = 'u8[65536]{0}', space=vmem, size = 0x10000, scoped, tag = 'input window, operand 1, single buffered']
    #allocation9 [shape = 's32[1]{0}', space=sflag, size = 0x4, scoped, tag = 'scoped memory for tpu_custom_call.1']
    #allocation10 [shape = 'u8[32768]{0}', space=vmem, size = 0x8000, scoped, tag = 'input window, operand 2, single buffered']
    #allocation11 [shape = 'u8[8192]{0}', space=vmem, size = 0x2000, scoped, tag = 'output window, operand 0']
    %9 = vsyncpa [#allocation6], 0
    %s10 = scalar_lea.sflag [#allocation6], 1
    %11 = vsyncpa %s10, 0
    %12 = vsyncpa [#allocation9], 0
    %13 = vsyncpa [#allocation7], 0
    %s14 = scalar_lea.sflag [#allocation7], 1
    %15 = vsyncpa %s14, 0
    loop: start=0, step=1, limit=4
    $region2: #{tpu_custom_call.1} parent=1 // loop_pre_header
      _
    $region3: #{tpu_custom_call.1} parent=1 // loop_header
      %s17 = sphi 0, %s21
      %p18 = scmp.ge.s32.totalorder %s17, 4
      %s24 = sphi 0, %s36
      %s25 = sphi 0, %s32
      %s26 = sphi 0, %s24
      %s27 = sphi 0, %s25
      %s28 = sphi 0, %s26
      %s29 = sphi 0, %s27
      %s39 = sphi 0, %s41
      %s42 = sphi 0, %s39
      %s43 = sphi 0, %s42
      %s59 = sphi 0, %s43
      %s63 = sphi 0, %s63
      %s65 = sphi 0, %s63
      %s66 = sphi 0, %s65
      %s80 = sphi 0, %s66
      %s84 = sphi 0, %s84
      %s86 = sphi 0, %s84
      %s87 = sphi 0, %s86
      %s101 = sphi 0, %s87
      %s105 = sphi 0, %s105
      %s107 = sphi 0, %s105
      %s108 = sphi 0, %s107
      %s122 = sphi 0, %s108
      %s130 = sphi 0, %s132
      %s133 = sphi 0, %s130
      %s134 = sphi 0, %s133
      %s150 = sphi 0, %s134
    $region4: #{tpu_custom_call.1} parent=1 // loop_header_branch
      %20 = sbr.rel (%p18) target = $region8
    $region5: #{tpu_custom_call.1} parent=1 // loop_body
      %s22 = ssub.s32 %s17, 1
      %s23 = ssub.s32 %s17, 2
      %s30 = sadd.s32 1, %s25
      %p31 = scmp.ge.s32.totalorder %s30, 1
      %s32 = scalar_select %p31, 0, %s30
      %s33 = sadd.s32 1, %s24
      %s34 = scalar_select %p31, %s33, %s24
      %p35 = scmp.ge.s32.totalorder %s34, 2
      %s36 = scalar_select %p35, 0, %s34
      %s37 = ssub.s32 %s24, %s36
      %p38 = scmp.eq.s32.totalorder %s37, 0
      %s40 = sadd.s32 %s39, 1
      %s41 = scalar_select %p38, %s39, %s40
      %p44 = pneg %p38
      %p45 = scmp.eq.s32.totalorder %s17, 1
      %p46 = por %p44, %p45
      %p47 = scmp.ne.s32.totalorder %s39, %s42
      %p48 = scmp.eq.s32.totalorder %s17, 0
      %p49 = por %p47, %p48
      %p50 = scmp.ne.s32.totalorder %s39, %s42
      %p51 = scmp.eq.s32.totalorder %s22, 1
      %p52 = por %p50, %p51
      %p53 = scmp.ne.s32.totalorder %s42, %s43
      %p54 = scmp.eq.s32.totalorder %s22, 0
      %p55 = por %p53, %p54
      %p56 = scmp.ne.s32.totalorder %s42, %s43
      %p57 = scmp.eq.s32.totalorder %s23, 1
      %p58 = por %p56, %p57
      %p60 = scmp.ne.s32.totalorder %s43, %s59
      %p61 = scmp.eq.s32.totalorder %s23, 0
      %p62 = por %p60, %p61
      %s64 = sadd.s32 %s63, 1
      %p67 = scmp.eq.s32.totalorder %s17, 1
      %p68 = scmp.ne.s32.totalorder %s63, %s65
      %p69 = scmp.eq.s32.totalorder %s17, 0
      %p70 = por %p68, %p69
      %p71 = scmp.ne.s32.totalorder %s63, %s65
      %p72 = scmp.eq.s32.totalorder %s22, 1
      %p73 = por %p71, %p72
      %p74 = scmp.ne.s32.totalorder %s65, %s66
      %p75 = scmp.eq.s32.totalorder %s22, 0
      %p76 = por %p74, %p75
      %p77 = scmp.ne.s32.totalorder %s65, %s66
      %p78 = scmp.eq.s32.totalorder %s23, 1
      %p79 = por %p77, %p78
      %p81 = scmp.ne.s32.totalorder %s66, %s80
      %p82 = scmp.eq.s32.totalorder %s23, 0
      %p83 = por %p81, %p82
      %s85 = sadd.s32 %s84, 1
      %p88 = scmp.eq.s32.totalorder %s17, 1
      %p89 = scmp.ne.s32.totalorder %s84, %s86
      %p90 = scmp.eq.s32.totalorder %s17, 0
      %p91 = por %p89, %p90
      %p92 = scmp.ne.s32.totalorder %s84, %s86
      %p93 = scmp.eq.s32.totalorder %s22, 1
      %p94 = por %p92, %p93
      %p95 = scmp.ne.s32.totalorder %s86, %s87
      %p96 = scmp.eq.s32.totalorder %s22, 0
      %p97 = por %p95, %p96
      %p98 = scmp.ne.s32.totalorder %s86, %s87
      %p99 = scmp.eq.s32.totalorder %s23, 1
      %p100 = por %p98, %p99
      %p102 = scmp.ne.s32.totalorder %s87, %s101
      %p103 = scmp.eq.s32.totalorder %s23, 0
      %p104 = por %p102, %p103
      %s106 = sadd.s32 %s105, 1
      %p109 = scmp.eq.s32.totalorder %s17, 1
      %p110 = scmp.ne.s32.totalorder %s105, %s107
      %p111 = scmp.eq.s32.totalorder %s17, 0
      %p112 = por %p110, %p111
      %p113 = scmp.ne.s32.totalorder %s105, %s107
      %p114 = scmp.eq.s32.totalorder %s22, 1
      %p115 = por %p113, %p114
      %p116 = scmp.ne.s32.totalorder %s107, %s108
      %p117 = scmp.eq.s32.totalorder %s22, 0
      %p118 = por %p116, %p117
      %p119 = scmp.ne.s32.totalorder %s107, %s108
      %p120 = scmp.eq.s32.totalorder %s23, 1
      %p121 = por %p119, %p120
      %p123 = scmp.ne.s32.totalorder %s108, %s122
      %p124 = scmp.eq.s32.totalorder %s23, 0
      %p125 = por %p123, %p124
      %s126 = ssub.s32 %s24, %s36
      %s127 = ssub.s32 %s25, %s32
      %s128 = sor.u32 %s126, %s127
      %p129 = scmp.eq.s32.totalorder %s128, 0
      %s131 = sadd.s32 %s130, 1
      %s132 = scalar_select %p129, %s130, %s131
      %p135 = pneg %p129
      %p136 = scmp.eq.s32.totalorder %s17, 1
      %p137 = por %p135, %p136
      %p138 = scmp.ne.s32.totalorder %s130, %s133
      %p139 = scmp.eq.s32.totalorder %s17, 0
      %p140 = por %p138, %p139
      %p141 = scmp.ne.s32.totalorder %s130, %s133
      %p142 = scmp.eq.s32.totalorder %s22, 1
      %p143 = por %p141, %p142
      %p144 = scmp.ne.s32.totalorder %s133, %s134
      %p145 = scmp.eq.s32.totalorder %s22, 0
      %p146 = por %p144, %p145
      %p147 = scmp.ne.s32.totalorder %s133, %s134
      %p148 = scmp.eq.s32.totalorder %s23, 1
      %p149 = por %p147, %p148
      %p151 = scmp.ne.s32.totalorder %s134, %s150
      %p152 = scmp.eq.s32.totalorder %s23, 0
      %p153 = por %p151, %p152
      %p154 = scmp.le.s32.totalorder 1, %s17
      %p155 = scmp.lt.s32.totalorder %s17, 3
      %p156 = pnand %p154, %p155
      %p157 = pneg %p156
      // Predicated region
      $region9: #{tpu_custom_call.1} parent=5 // pred_check
        _
      $region10: #{tpu_custom_call.1} parent=5 // pred_check_branch
        %159 = sbr.rel (%p156) target = $region12
      $region11: #{tpu_custom_call.1} parent=5 // pred_region
        %s160 = ssub.s32 %s17, 1
        // Predicated region
        $region13: #{tpu_custom_call.1} parent=11 // pred_check
          %p161 = pneg %p76
        $region14: #{tpu_custom_call.1} parent=11 // pred_check_branch
          %163 = sbr.rel (%p161) target = $region16
        $region15: #{tpu_custom_call.1} parent=11 // pred_region
          %s165 = ssub.s32 2048, 2048
          %166 = vsyncadd [#allocation9], %s165
          %s167 = sshll.u32 [#allocation8], 4
          %s168 = int_to_ptr.vmem [resolvable:$true] %s167
          %173 = dma.hbm_to_vmem [thread:$0]  %s1, 2048, %s168, [#allocation9], 128, 128, 8
        $region16: #{tpu_custom_call.1} parent=11 // pred_fallthru
          _
        // Predicated region
        $region17: #{tpu_custom_call.1} parent=11 // pred_check
          %p174 = pneg %p97
        $region18: #{tpu_custom_call.1} parent=11 // pred_check_branch
          %176 = sbr.rel (%p174) target = $region20
        $region19: #{tpu_custom_call.1} parent=11 // pred_region
          %s178 = ssub.s32 1024, 1024
          %179 = vsyncadd [#allocation9], %s178
          %s180 = sshll.u32 [#allocation10], 4
          %s181 = int_to_ptr.vmem [resolvable:$true] %s180
          %186 = dma.hbm_to_vmem [thread:$0]  %s2, 1024, %s181, [#allocation9], 128, 128, 8
        $region20: #{tpu_custom_call.1} parent=11 // pred_fallthru
          _
        // Predicated region
        $region21: #{tpu_custom_call.1} parent=11 // pred_check
          %p187 = pneg %p118
        $region22: #{tpu_custom_call.1} parent=11 // pred_check_branch
          %189 = sbr.rel (%p187) target = $region24
        $region23: #{tpu_custom_call.1} parent=11 // pred_region
          _
        $region24: #{tpu_custom_call.1} parent=11 // pred_fallthru
          _
      $region12: #{tpu_custom_call.1} parent=5 // pred_fallthru
        _
      %p190 = scmp.lt.s32.totalorder %s17, 2
      // Predicated region
      $region25: #{tpu_custom_call.1} parent=5 // pred_check
        %p191 = pneg %p190
      $region26: #{tpu_custom_call.1} parent=5 // pred_check_branch
        %193 = sbr.rel (%p191) target = $region28
      $region27: #{tpu_custom_call.1} parent=5 // pred_region
        // Predicated region
        $region29: #{tpu_custom_call.1} parent=27 // pred_check
          %p194 = pneg %p49
        $region30: #{tpu_custom_call.1} parent=27 // pred_check_branch
          %196 = sbr.rel (%p194) target = $region32
        $region31: #{tpu_custom_call.1} parent=27 // pred_region
          %s197 = sand.u32 %s39, 1
          %s198 = scalar_lea.sflag [#allocation6], %s197
          %s199 = sand.u32 %s39, 1
          %s200 = smul.addr %s199, 8
          %s201 = scalar_lea.vmem [#allocation5], %s200
          %s203 = ssub.s32 128, 128
          %204 = vsyncadd %s198, %s203
          %s205 = smul.addr %s24, 128
          %s206 = scalar_lea.hbm %s0, %s205
          %s208 = sshll.u32 %s201, 4
          %s209 = int_to_ptr.vmem [resolvable:$true] %s208
          %211 = dma.hbm_to_vmem [thread:$0]  %s206, 128, %s209, %s198
        $region32: #{tpu_custom_call.1} parent=27 // pred_fallthru
          _
      $region28: #{tpu_custom_call.1} parent=5 // pred_fallthru
        _
      %p212 = scmp.le.s32.totalorder 1, %s17
      %p213 = scmp.lt.s32.totalorder %s17, 3
      %p214 = pnand %p212, %p213
      %p215 = pneg %p214
      // Predicated region
      $region33: #{tpu_custom_call.1} parent=5 // pred_check
        _
      $region34: #{tpu_custom_call.1} parent=5 // pred_check_branch
        %217 = sbr.rel (%p214) target = $region36
      $region35: #{tpu_custom_call.1} parent=5 // pred_region
        %s218 = ssub.s32 %s17, 1
        %s219 = sand.u32 %s42, 1
        %s220 = scalar_lea.sflag [#allocation6], %s219
        %s221 = sand.u32 %s42, 1
        %s222 = smul.addr %s221, 8
        %s223 = scalar_lea.vmem [#allocation5], %s222
        // Predicated region
        $region37: #{tpu_custom_call.1} parent=35 // pred_check
          %p224 = pneg %p55
        $region38: #{tpu_custom_call.1} parent=35 // pred_check_branch
          %226 = sbr.rel (%p224) target = $region40
        $region39: #{tpu_custom_call.1} parent=35 // pred_region
          %227 = dma.done %s220, 128
        $region40: #{tpu_custom_call.1} parent=35 // pred_fallthru
          _
        // Predicated region
        $region41: #{tpu_custom_call.1} parent=35 // pred_check
          %p228 = pneg %p76
        $region42: #{tpu_custom_call.1} parent=35 // pred_check_branch
          %230 = sbr.rel (%p228) target = $region44
        $region43: #{tpu_custom_call.1} parent=35 // pred_region
          %231 = dma.done [#allocation9], 2048
        $region44: #{tpu_custom_call.1} parent=35 // pred_fallthru
          _
        // Predicated region
        $region45: #{tpu_custom_call.1} parent=35 // pred_check
          %p232 = pneg %p97
        $region46: #{tpu_custom_call.1} parent=35 // pred_check_branch
          %234 = sbr.rel (%p232) target = $region48
        $region47: #{tpu_custom_call.1} parent=35 // pred_region
          %235 = dma.done [#allocation9], 1024
        $region48: #{tpu_custom_call.1} parent=35 // pred_fallthru
          _
        %s236 = sand.u32 %s42, 1
        %s237 = scalar_lea.sflag [#allocation6], %s236
        %s238 = sand.u32 %s42, 1
        %s239 = smul.addr %s238, 8
        %s240 = scalar_lea.vmem [#allocation5], %s239
        %p241 = pneg %p55
        %p242 = pneg %p52
        %p243 = pneg %p76
        %p244 = pneg %p73
        %p245 = pneg %p97
        %p246 = pneg %p94
        %p247 = pneg %p118
        %p248 = pneg %p115
        %p249 = pneg %p146
        %p250 = pneg %p143
        %s251 = sand.u32 %s133, 1
        %s252 = scalar_lea.sflag [#allocation7], %s251
        %s253 = sand.u32 %s133, 1
        %s254 = smul.addr %s253, 8
        %s255 = scalar_lea.vmem [#allocation11], %s254
        %p256 = scmp.eq.s32.totalorder %s27, 0
        // Predicated region
        $region49: #{tpu_custom_call.1} parent=35 // pred_check
          %p257 = pneg %p256
        $region50: #{tpu_custom_call.1} parent=35 // pred_check_branch
          %259 = sbr.rel (%p257) target = $region52
        $region51: #{tpu_custom_call.1} parent=35 // pred_region
          %v260 = vld [vmem:[%s223] sm:$0xff]
          %v261 = vld [vmem:[#allocation8] sm:$0xff]
          %v262 = vld [vmem:[#allocation8 + $0x8] sm:$0xff]
          %v263 = vld [vmem:[#allocation8 + $0x10] sm:$0xff]
          %v264 = vld [vmem:[#allocation8 + $0x18] sm:$0xff]
          %v265 = vld [vmem:[#allocation8 + $0x20] sm:$0xff]
          %v266 = vld [vmem:[#allocation8 + $0x28] sm:$0xff]
          %v267 = vld [vmem:[#allocation8 + $0x30] sm:$0xff]
          %v268 = vld [vmem:[#allocation8 + $0x38] sm:$0xff]
          %v269 = vld [vmem:[#allocation8 + $0x40] sm:$0xff]
          %v270 = vld [vmem:[#allocation8 + $0x48] sm:$0xff]
          %v271 = vld [vmem:[#allocation8 + $0x50] sm:$0xff]
          %v272 = vld [vmem:[#allocation8 + $0x58] sm:$0xff]
          %v273 = vld [vmem:[#allocation8 + $0x60] sm:$0xff]
          %v274 = vld [vmem:[#allocation8 + $0x68] sm:$0xff]
          %v275 = vld [vmem:[#allocation8 + $0x70] sm:$0xff]
          %v276 = vld [vmem:[#allocation8 + $0x78] sm:$0xff]
          %vm277 = vcmask 261120
          %v279 = vsel %vm277, %v260, 0
          %281 = vmatprep.subr.mxu0 0.0
          %282 = vmatpush1.msra.mxu0 0.0
          %283 = vmatprep.subr.mxu0 0.0
          %284 = vmatpush1.msra.mxu0 0.0
          %285 = vmatprep.subr.mxu0 0.0
          %286 = vmatpush1.msra.mxu0 0.0
          %287 = vmatprep.subr.mxu0 0.0
          %288 = vmatpush1.msra.mxu0 0.0
          %289 = vmatprep.subr.mxu0 0.0
          %290 = vmatpush1.msra.mxu0 0.0
          %291 = vmatprep.subr.mxu0 0.0
          %292 = vmatpush1.msra.mxu0 0.0
          %293 = vmatprep.subr.mxu0 0.0
          %294 = vmatpush1.msra.mxu0 0.0
          %295 = vmatprep.subr.mxu0 0.0
          %296 = vmatpush1.msra.mxu0 0.0
          %297 = vmatprep.subr.mxu0 0.0
          %298 = vmatpush1.msra.mxu0 0.0
          %299 = vmatprep.subr.mxu0 0.0
          %300 = vmatpush1.msra.mxu0 0.0
          %301 = vmatprep.subr.mxu0 0.0
          %302 = vmatpush1.msra.mxu0 0.0
          %303 = vmatprep.subr.mxu0 0.0
          %304 = vmatpush1.msra.mxu0 0.0
          %305 = vmatprep.subr.mxu0 0.0
          %306 = vmatpush1.msra.mxu0 %v264
          %307 = vmatprep.subr.mxu0 0.0
          %308 = vmatpush1.msra.mxu0 %v263
          %309 = vmatprep.subr.mxu0 0.0
          %310 = vmatpush1.msra.mxu0 %v262
          %311 = vmatprep.subr.mxu0 0.0
          %312 = vmatpush1.msra.mxu0 %v261
          %313 = vmatprep.subr.mxu0 0.0
          %314 = vmatpush2.msra.mxu0 0.0
          %315 = vmatprep.subr.mxu0 0.0
          %316 = vmatpush2.msra.mxu0 0.0
          %317 = vmatprep.subr.mxu0 0.0
          %318 = vmatpush2.msra.mxu0 0.0
          %319 = vmatprep.subr.mxu0 0.0
          %320 = vmatpush2.msra.mxu0 0.0
          %321 = vmatprep.subr.mxu0 0.0
          %322 = vmatpush2.msra.mxu0 0.0
          %323 = vmatprep.subr.mxu0 0.0
          %324 = vmatpush2.msra.mxu0 0.0
          %325 = vmatprep.subr.mxu0 0.0
          %326 = vmatpush2.msra.mxu0 0.0
          %327 = vmatprep.subr.mxu0 0.0
          %328 = vmatpush2.msra.mxu0 0.0
          %329 = vmatprep.subr.mxu0 0.0
          %330 = vmatpush2.msra.mxu0 0.0
          %331 = vmatprep.subr.mxu0 0.0
          %332 = vmatpush2.msra.mxu0 0.0
          %333 = vmatprep.subr.mxu0 0.0
          %334 = vmatpush2.msra.mxu0 0.0
          %335 = vmatprep.subr.mxu0 0.0
          %336 = vmatpush2.msra.mxu0 0.0
          %337 = vmatprep.subr.mxu0 0.0
          %338 = vmatpush2.msra.mxu0 0.0
          %339 = vmatprep.subr.mxu0 0.0
          %340 = vmatpush2.msra.mxu0 0.0
          %341 = vmatprep.subr.mxu0 0.0
          %342 = vmatpush2.msra.mxu0 0.0
          %343 = vmatprep.subr.mxu0 0.0
          %344 = vmatpush2.msra.mxu0 0.0
          %345 = vmatprep.mubr.f32.mxu0 0.0
          %346 = vmatmul.mubr.f32.gmra.mxu0 %v279
          %v347 = vpop.f32.mrf.mxu0
          %v348 = vadd.f32 0.0, %v347
          %v349 = vpop.f32.mrf.mxu0
          %350 = vdwg.mxu0
          %351 = vmatprep.subr.mxu0 0.0
          %352 = vmatpush1.msra.mxu0 0.0
          %353 = vmatprep.subr.mxu0 0.0
          %354 = vmatpush1.msra.mxu0 0.0
          %355 = vmatprep.subr.mxu0 0.0
          %356 = vmatpush1.msra.mxu0 0.0
          %357 = vmatprep.subr.mxu0 0.0
          %358 = vmatpush1.msra.mxu0 0.0
          %359 = vmatprep.subr.mxu0 0.0
          %360 = vmatpush1.msra.mxu0 0.0
          %361 = vmatprep.subr.mxu0 0.0
          %362 = vmatpush1.msra.mxu0 0.0
          %363 = vmatprep.subr.mxu0 0.0
          %364 = vmatpush1.msra.mxu0 0.0
          %365 = vmatprep.subr.mxu0 0.0
          %366 = vmatpush1.msra.mxu0 0.0
          %367 = vmatprep.subr.mxu0 0.0
          %368 = vmatpush1.msra.mxu0 0.0
          %369 = vmatprep.subr.mxu0 0.0
          %370 = vmatpush1.msra.mxu0 0.0
          %371 = vmatprep.subr.mxu0 0.0
          %372 = vmatpush1.msra.mxu0 0.0
          %373 = vmatprep.subr.mxu0 0.0
          %374 = vmatpush1.msra.mxu0 0.0
          %375 = vmatprep.subr.mxu0 0.0
          %376 = vmatpush1.msra.mxu0 %v268
          %377 = vmatprep.subr.mxu0 0.0
          %378 = vmatpush1.msra.mxu0 %v267
          %379 = vmatprep.subr.mxu0 0.0
          %380 = vmatpush1.msra.mxu0 %v266
          %381 = vmatprep.subr.mxu0 0.0
          %382 = vmatpush1.msra.mxu0 %v265
          %383 = vmatprep.subr.mxu0 0.0
          %384 = vmatpush2.msra.mxu0 0.0
          %385 = vmatprep.subr.mxu0 0.0
          %386 = vmatpush2.msra.mxu0 0.0
          %387 = vmatprep.subr.mxu0 0.0
          %388 = vmatpush2.msra.mxu0 0.0
          %389 = vmatprep.subr.mxu0 0.0
          %390 = vmatpush2.msra.mxu0 0.0
          %391 = vmatprep.subr.mxu0 0.0
          %392 = vmatpush2.msra.mxu0 0.0
          %393 = vmatprep.subr.mxu0 0.0
          %394 = vmatpush2.msra.mxu0 0.0
          %395 = vmatprep.subr.mxu0 0.0
          %396 = vmatpush2.msra.mxu0 0.0
          %397 = vmatprep.subr.mxu0 0.0
          %398 = vmatpush2.msra.mxu0 0.0
          %399 = vmatprep.subr.mxu0 0.0
          %400 = vmatpush2.msra.mxu0 0.0
          %401 = vmatprep.subr.mxu0 0.0
          %402 = vmatpush2.msra.mxu0 0.0
          %403 = vmatprep.subr.mxu0 0.0
          %404 = vmatpush2.msra.mxu0 0.0
          %405 = vmatprep.subr.mxu0 0.0
          %406 = vmatpush2.msra.mxu0 0.0
          %407 = vmatprep.subr.mxu0 0.0
          %408 = vmatpush2.msra.mxu0 0.0
          %409 = vmatprep.subr.mxu0 0.0
          %410 = vmatpush2.msra.mxu0 0.0
          %411 = vmatprep.subr.mxu0 0.0
          %412 = vmatpush2.msra.mxu0 0.0
          %413 = vmatprep.subr.mxu0 0.0
          %414 = vmatpush2.msra.mxu0 0.0
          %415 = vmatprep.mubr.f32.mxu0 0.0
          %416 = vmatmul.mubr.f32.gmra.mxu0 %v279
          %v417 = vpop.f32.mrf.mxu0
          %v418 = vadd.f32 0.0, %v417
          %v419 = vpop.f32.mrf.mxu0
          %420 = vdwg.mxu0
          %421 = vmatprep.subr.mxu0 0.0
          %422 = vmatpush1.msra.mxu0 0.0
          %423 = vmatprep.subr.mxu0 0.0
          %424 = vmatpush1.msra.mxu0 0.0
          %425 = vmatprep.subr.mxu0 0.0
          %426 = vmatpush1.msra.mxu0 0.0
          %427 = vmatprep.subr.mxu0 0.0
          %428 = vmatpush1.msra.mxu0 0.0
          %429 = vmatprep.subr.mxu0 0.0
          %430 = vmatpush1.msra.mxu0 0.0
          %431 = vmatprep.subr.mxu0 0.0
          %432 = vmatpush1.msra.mxu0 0.0
          %433 = vmatprep.subr.mxu0 0.0
          %434 = vmatpush1.msra.mxu0 0.0
          %435 = vmatprep.subr.mxu0 0.0
          %436 = vmatpush1.msra.mxu0 0.0
          %437 = vmatprep.subr.mxu0 0.0
          %438 = vmatpush1.msra.mxu0 0.0
          %439 = vmatprep.subr.mxu0 0.0
          %440 = vmatpush1.msra.mxu0 0.0
          %441 = vmatprep.subr.mxu0 0.0
          %442 = vmatpush1.msra.mxu0 0.0
          %443 = vmatprep.subr.mxu0 0.0
          %444 = vmatpush1.msra.mxu0 0.0
          %445 = vmatprep.subr.mxu0 0.0
          %446 = vmatpush1.msra.mxu0 %v272
          %447 = vmatprep.subr.mxu0 0.0
          %448 = vmatpush1.msra.mxu0 %v271
          %449 = vmatprep.subr.mxu0 0.0
          %450 = vmatpush1.msra.mxu0 %v270
          %451 = vmatprep.subr.mxu0 0.0
          %452 = vmatpush1.msra.mxu0 %v269
          %453 = vmatprep.subr.mxu0 0.0
          %454 = vmatpush2.msra.mxu0 0.0
          %455 = vmatprep.subr.mxu0 0.0
          %456 = vmatpush2.msra.mxu0 0.0
          %457 = vmatprep.subr.mxu0 0.0
          %458 = vmatpush2.msra.mxu0 0.0
          %459 = vmatprep.subr.mxu0 0.0
          %460 = vmatpush2.msra.mxu0 0.0
          %461 = vmatprep.subr.mxu0 0.0
          %462 = vmatpush2.msra.mxu0 0.0
          %463 = vmatprep.subr.mxu0 0.0
          %464 = vmatpush2.msra.mxu0 0.0
          %465 = vmatprep.subr.mxu0 0.0
          %466 = vmatpush2.msra.mxu0 0.0
          %467 = vmatprep.subr.mxu0 0.0
          %468 = vmatpush2.msra.mxu0 0.0
          %469 = vmatprep.subr.mxu0 0.0
          %470 = vmatpush2.msra.mxu0 0.0
          %471 = vmatprep.subr.mxu0 0.0
          %472 = vmatpush2.msra.mxu0 0.0
          %473 = vmatprep.subr.mxu0 0.0
          %474 = vmatpush2.msra.mxu0 0.0
          %475 = vmatprep.subr.mxu0 0.0
          %476 = vmatpush2.msra.mxu0 0.0
          %477 = vmatprep.subr.mxu0 0.0
          %478 = vmatpush2.msra.mxu0 0.0
          %479 = vmatprep.subr.mxu0 0.0
          %480 = vmatpush2.msra.mxu0 0.0
          %481 = vmatprep.subr.mxu0 0.0
          %482 = vmatpush2.msra.mxu0 0.0
          %483 = vmatprep.subr.mxu0 0.0
          %484 = vmatpush2.msra.mxu0 0.0
          %485 = vmatprep.mubr.f32.mxu0 0.0
          %486 = vmatmul.mubr.f32.gmra.mxu0 %v279
          %v487 = vpop.f32.mrf.mxu0
          %v488 = vadd.f32 0.0, %v487
          %v489 = vpop.f32.mrf.mxu0
          %490 = vdwg.mxu0
          %491 = vmatprep.subr.mxu0 0.0
          %492 = vmatpush1.msra.mxu0 0.0
          %493 = vmatprep.subr.mxu0 0.0
          %494 = vmatpush1.msra.mxu0 0.0
          %495 = vmatprep.subr.mxu0 0.0
          %496 = vmatpush1.msra.mxu0 0.0
          %497 = vmatprep.subr.mxu0 0.0
          %498 = vmatpush1.msra.mxu0 0.0
          %499 = vmatprep.subr.mxu0 0.0
          %500 = vmatpush1.msra.mxu0 0.0
          %501 = vmatprep.subr.mxu0 0.0
          %502 = vmatpush1.msra.mxu0 0.0
          %503 = vmatprep.subr.mxu0 0.0
          %504 = vmatpush1.msra.mxu0 0.0
          %505 = vmatprep.subr.mxu0 0.0
          %506 = vmatpush1.msra.mxu0 0.0
          %507 = vmatprep.subr.mxu0 0.0
          %508 = vmatpush1.msra.mxu0 0.0
          %509 = vmatprep.subr.mxu0 0.0
          %510 = vmatpush1.msra.mxu0 0.0
          %511 = vmatprep.subr.mxu0 0.0
          %512 = vmatpush1.msra.mxu0 0.0
          %513 = vmatprep.subr.mxu0 0.0
          %514 = vmatpush1.msra.mxu0 0.0
          %515 = vmatprep.subr.mxu0 0.0
          %516 = vmatpush1.msra.mxu0 %v276
          %517 = vmatprep.subr.mxu0 0.0
          %518 = vmatpush1.msra.mxu0 %v275
          %519 = vmatprep.subr.mxu0 0.0
          %520 = vmatpush1.msra.mxu0 %v274
          %521 = vmatprep.subr.mxu0 0.0
          %522 = vmatpush1.msra.mxu0 %v273
          %523 = vmatprep.subr.mxu0 0.0
          %524 = vmatpush2.msra.mxu0 0.0
          %525 = vmatprep.subr.mxu0 0.0
          %526 = vmatpush2.msra.mxu0 0.0
          %527 = vmatprep.subr.mxu0 0.0
          %528 = vmatpush2.msra.mxu0 0.0
          %529 = vmatprep.subr.mxu0 0.0
          %530 = vmatpush2.msra.mxu0 0.0
          %531 = vmatprep.subr.mxu0 0.0
          %532 = vmatpush2.msra.mxu0 0.0
          %533 = vmatprep.subr.mxu0 0.0
          %534 = vmatpush2.msra.mxu0 0.0
          %535 = vmatprep.subr.mxu0 0.0
          %536 = vmatpush2.msra.mxu0 0.0
          %537 = vmatprep.subr.mxu0 0.0
          %538 = vmatpush2.msra.mxu0 0.0
          %539 = vmatprep.subr.mxu0 0.0
          %540 = vmatpush2.msra.mxu0 0.0
          %541 = vmatprep.subr.mxu0 0.0
          %542 = vmatpush2.msra.mxu0 0.0
          %543 = vmatprep.subr.mxu0 0.0
          %544 = vmatpush2.msra.mxu0 0.0
          %545 = vmatprep.subr.mxu0 0.0
          %546 = vmatpush2.msra.mxu0 0.0
          %547 = vmatprep.subr.mxu0 0.0
          %548 = vmatpush2.msra.mxu0 0.0
          %549 = vmatprep.subr.mxu0 0.0
          %550 = vmatpush2.msra.mxu0 0.0
          %551 = vmatprep.subr.mxu0 0.0
          %552 = vmatpush2.msra.mxu0 0.0
          %553 = vmatprep.subr.mxu0 0.0
          %554 = vmatpush2.msra.mxu0 0.0
          %555 = vmatprep.mubr.f32.mxu0 0.0
          %556 = vmatmul.mubr.f32.gmra.mxu0 %v279
          %v557 = vpop.f32.mrf.mxu0
          %v558 = vadd.f32 0.0, %v557
          %v559 = vpop.f32.mrf.mxu0
          %560 = vdwg.mxu0
          %vm561 = vcmask 130048
          %562 = vst.msk [vmem:[#allocation2] sm:$0xff] %vm561, %v348
          %563 = vst.msk [vmem:[#allocation2 + $0x8] sm:$0xff] %vm561, %v418
          %564 = vst.msk [vmem:[#allocation2 + $0x10] sm:$0xff] %vm561, %v488
          %565 = vst.msk [vmem:[#allocation2 + $0x18] sm:$0xff] %vm561, %v558
          %570 = vrot.lane.b32.xlu0 %v348, 112
          %v571 = vpop.permute.xlu0 %570
          %572 = vrot.lane.b32.xlu0 %v418, 112
          %v573 = vpop.permute.xlu0 %572
          %574 = vrot.lane.b32.xlu0 %v488, 112
          %v575 = vpop.permute.xlu0 %574
          %576 = vrot.lane.b32.xlu0 %v558, 112
          %v577 = vpop.permute.xlu0 %576
          %582 = vst.msk [vmem:[#allocation3] sm:$0xff] %vm561, %v571
          %583 = vst.msk [vmem:[#allocation3 + $0x8] sm:$0xff] %vm561, %v573
          %584 = vst.msk [vmem:[#allocation3 + $0x10] sm:$0xff] %vm561, %v575
          %585 = vst.msk [vmem:[#allocation3 + $0x18] sm:$0xff] %vm561, %v577
          %586 = vrot.lane.b32.xlu0 %v348, 96
          %v587 = vpop.permute.xlu0 %586
          %588 = vrot.lane.b32.xlu0 %v418, 96
          %v589 = vpop.permute.xlu0 %588
          %590 = vrot.lane.b32.xlu0 %v488, 96
          %v591 = vpop.permute.xlu0 %590
          %592 = vrot.lane.b32.xlu0 %v558, 96
          %v593 = vpop.permute.xlu0 %592
          %598 = vst.msk [vmem:[#allocation4] sm:$0xff] %vm561, %v587
          %599 = vst.msk [vmem:[#allocation4 + $0x8] sm:$0xff] %vm561, %v589
          %600 = vst.msk [vmem:[#allocation4 + $0x10] sm:$0xff] %vm561, %v591
          %601 = vst.msk [vmem:[#allocation4 + $0x18] sm:$0xff] %vm561, %v593
        $region52: #{tpu_custom_call.1} parent=35 // pred_fallthru
          _
        %s602 = smul.u32 %s27, 8
        %s603 = scalar_lea.vmem [#allocation2], %s602
        %v604 = vld [vmem:[%s603] sm:$0xff]
        %v605 = vld [vmem:[%s603 + $0x8] sm:$0xff]
        %v606 = vld [vmem:[%s603 + $0x10] sm:$0xff]
        %v607 = vld [vmem:[%s603 + $0x18] sm:$0xff]
        %v608 = vld [vmem:[#allocation3] sm:$0xff]
        %v609 = vld [vmem:[#allocation3 + $0x8] sm:$0xff]
        %v610 = vld [vmem:[#allocation3 + $0x10] sm:$0xff]
        %v611 = vld [vmem:[#allocation3 + $0x18] sm:$0xff]
        %v612 = vld [vmem:[#allocation4] sm:$0xff]
        %v613 = vld [vmem:[#allocation4 + $0x8] sm:$0xff]
        %v614 = vld [vmem:[#allocation4 + $0x10] sm:$0xff]
        %v615 = vld [vmem:[#allocation4 + $0x18] sm:$0xff]
        %vm616 = vcmask 130048
        %v618 = vsel %vm616, %v604, 0
        %v621 = vsel %vm616, %v608, 0
        %623 = vmatprep.subr.mxu0 0.0
        %624 = vmatpush1.xpose.msra.mxu0 0.0
        %625 = vmatprep.subr.mxu0 0.0
        %626 = vmatpush1.xpose.msra.mxu0 0.0
        %627 = vmatprep.subr.mxu0 0.0
        %628 = vmatpush1.xpose.msra.mxu0 0.0
        %629 = vmatprep.subr.mxu0 0.0
        %630 = vmatpush1.xpose.msra.mxu0 0.0
        %631 = vmatprep.subr.mxu0 0.0
        %632 = vmatpush1.xpose.msra.mxu0 0.0
        %633 = vmatprep.subr.mxu0 0.0
        %634 = vmatpush1.xpose.msra.mxu0 0.0
        %635 = vmatprep.subr.mxu0 0.0
        %636 = vmatpush1.xpose.msra.mxu0 0.0
        %637 = vmatprep.subr.mxu0 0.0
        %638 = vmatpush1.xpose.msra.mxu0 0.0
        %639 = vmatprep.subr.mxu0 0.0
        %640 = vmatpush1.xpose.msra.mxu0 0.0
        %641 = vmatprep.subr.mxu0 0.0
        %642 = vmatpush1.xpose.msra.mxu0 0.0
        %643 = vmatprep.subr.mxu0 0.0
        %644 = vmatpush1.xpose.msra.mxu0 0.0
        %645 = vmatprep.subr.mxu0 0.0
        %646 = vmatpush1.xpose.msra.mxu0 0.0
        %647 = vmatprep.subr.mxu0 0.0
        %648 = vmatpush1.xpose.msra.mxu0 0.0
        %649 = vmatprep.subr.mxu0 0.0
        %650 = vmatpush1.xpose.msra.mxu0 0.0
        %651 = vmatprep.subr.mxu0 0.0
        %652 = vmatpush1.xpose.msra.mxu0 0.0
        %653 = vmatprep.subr.mxu0 0.0
        %654 = vmatpush1.xpose.msra.mxu0 %v621
        %655 = vmatprep.subr.mxu0 0.0
        %656 = vmatpush2.xpose.msra.mxu0 0.0
        %657 = vmatprep.subr.mxu0 0.0
        %658 = vmatpush2.xpose.msra.mxu0 0.0
        %659 = vmatprep.subr.mxu0 0.0
        %660 = vmatpush2.xpose.msra.mxu0 0.0
        %661 = vmatprep.subr.mxu0 0.0
        %662 = vmatpush2.xpose.msra.mxu0 0.0
        %663 = vmatprep.subr.mxu0 0.0
        %664 = vmatpush2.xpose.msra.mxu0 0.0
        %665 = vmatprep.subr.mxu0 0.0
        %666 = vmatpush2.xpose.msra.mxu0 0.0
        %667 = vmatprep.subr.mxu0 0.0
        %668 = vmatpush2.xpose.msra.mxu0 0.0
        %669 = vmatprep.subr.mxu0 0.0
        %670 = vmatpush2.xpose.msra.mxu0 0.0
        %671 = vmatprep.subr.mxu0 0.0
        %672 = vmatpush2.xpose.msra.mxu0 0.0
        %673 = vmatprep.subr.mxu0 0.0
        %674 = vmatpush2.xpose.msra.mxu0 0.0
        %675 = vmatprep.subr.mxu0 0.0
        %676 = vmatpush2.xpose.msra.mxu0 0.0
        %677 = vmatprep.subr.mxu0 0.0
        %678 = vmatpush2.xpose.msra.mxu0 0.0
        %679 = vmatprep.subr.mxu0 0.0
        %680 = vmatpush2.xpose.msra.mxu0 0.0
        %681 = vmatprep.subr.mxu0 0.0
        %682 = vmatpush2.xpose.msra.mxu0 0.0
        %683 = vmatprep.subr.mxu0 0.0
        %684 = vmatpush2.xpose.msra.mxu0 0.0
        %685 = vmatprep.subr.mxu0 0.0
        %686 = vmatpush2.xpose.msra.mxu0 0.0
        %687 = vmatprep.mubr.f32.mxu0 0.0
        %688 = vmatmul.mubr.f32.gmra.mxu0 %v618
        %v689 = vpop.f32.mrf.mxu0
        %v690 = vadd.f32 0.0, %v689
        %v691 = vpop.f32.mrf.mxu0
        %692 = vdwg.mxu0
        %v694 = vsel %vm616, %v605, 0
        %v697 = vsel %vm616, %v609, 0
        %699 = vmatprep.subr.mxu0 0.0
        %700 = vmatpush1.xpose.msra.mxu0 0.0
        %701 = vmatprep.subr.mxu0 0.0
        %702 = vmatpush1.xpose.msra.mxu0 0.0
        %703 = vmatprep.subr.mxu0 0.0
        %704 = vmatpush1.xpose.msra.mxu0 0.0
        %705 = vmatprep.subr.mxu0 0.0
        %706 = vmatpush1.xpose.msra.mxu0 0.0
        %707 = vmatprep.subr.mxu0 0.0
        %708 = vmatpush1.xpose.msra.mxu0 0.0
        %709 = vmatprep.subr.mxu0 0.0
        %710 = vmatpush1.xpose.msra.mxu0 0.0
        %711 = vmatprep.subr.mxu0 0.0
        %712 = vmatpush1.xpose.msra.mxu0 0.0
        %713 = vmatprep.subr.mxu0 0.0
        %714 = vmatpush1.xpose.msra.mxu0 0.0
        %715 = vmatprep.subr.mxu0 0.0
        %716 = vmatpush1.xpose.msra.mxu0 0.0
        %717 = vmatprep.subr.mxu0 0.0
        %718 = vmatpush1.xpose.msra.mxu0 0.0
        %719 = vmatprep.subr.mxu0 0.0
        %720 = vmatpush1.xpose.msra.mxu0 0.0
        %721 = vmatprep.subr.mxu0 0.0
        %722 = vmatpush1.xpose.msra.mxu0 0.0
        %723 = vmatprep.subr.mxu0 0.0
        %724 = vmatpush1.xpose.msra.mxu0 0.0
        %725 = vmatprep.subr.mxu0 0.0
        %726 = vmatpush1.xpose.msra.mxu0 0.0
        %727 = vmatprep.subr.mxu0 0.0
        %728 = vmatpush1.xpose.msra.mxu0 0.0
        %729 = vmatprep.subr.mxu0 0.0
        %730 = vmatpush1.xpose.msra.mxu0 %v697
        %731 = vmatprep.subr.mxu0 0.0
        %732 = vmatpush2.xpose.msra.mxu0 0.0
        %733 = vmatprep.subr.mxu0 0.0
        %734 = vmatpush2.xpose.msra.mxu0 0.0
        %735 = vmatprep.subr.mxu0 0.0
        %736 = vmatpush2.xpose.msra.mxu0 0.0
        %737 = vmatprep.subr.mxu0 0.0
        %738 = vmatpush2.xpose.msra.mxu0 0.0
        %739 = vmatprep.subr.mxu0 0.0
        %740 = vmatpush2.xpose.msra.mxu0 0.0
        %741 = vmatprep.subr.mxu0 0.0
        %742 = vmatpush2.xpose.msra.mxu0 0.0
        %743 = vmatprep.subr.mxu0 0.0
        %744 = vmatpush2.xpose.msra.mxu0 0.0
        %745 = vmatprep.subr.mxu0 0.0
        %746 = vmatpush2.xpose.msra.mxu0 0.0
        %747 = vmatprep.subr.mxu0 0.0
        %748 = vmatpush2.xpose.msra.mxu0 0.0
        %749 = vmatprep.subr.mxu0 0.0
        %750 = vmatpush2.xpose.msra.mxu0 0.0
        %751 = vmatprep.subr.mxu0 0.0
        %752 = vmatpush2.xpose.msra.mxu0 0.0
        %753 = vmatprep.subr.mxu0 0.0
        %754 = vmatpush2.xpose.msra.mxu0 0.0
        %755 = vmatprep.subr.mxu0 0.0
        %756 = vmatpush2.xpose.msra.mxu0 0.0
        %757 = vmatprep.subr.mxu0 0.0
        %758 = vmatpush2.xpose.msra.mxu0 0.0
        %759 = vmatprep.subr.mxu0 0.0
        %760 = vmatpush2.xpose.msra.mxu0 0.0
        %761 = vmatprep.subr.mxu0 0.0
        %762 = vmatpush2.xpose.msra.mxu0 0.0
        %763 = vmatprep.mubr.f32.mxu0 0.0
        %764 = vmatmul.mubr.f32.gmra.mxu0 %v694
        %v765 = vpop.f32.mrf.mxu0
        %v766 = vadd.f32 0.0, %v765
        %v767 = vpop.f32.mrf.mxu0
        %768 = vdwg.mxu0
        %v770 = vsel %vm616, %v606, 0
        %v773 = vsel %vm616, %v610, 0
        %775 = vmatprep.subr.mxu0 0.0
        %776 = vmatpush1.xpose.msra.mxu0 0.0
        %777 = vmatprep.subr.mxu0 0.0
        %778 = vmatpush1.xpose.msra.mxu0 0.0
        %779 = vmatprep.subr.mxu0 0.0
        %780 = vmatpush1.xpose.msra.mxu0 0.0
        %781 = vmatprep.subr.mxu0 0.0
        %782 = vmatpush1.xpose.msra.mxu0 0.0
        %783 = vmatprep.subr.mxu0 0.0
        %784 = vmatpush1.xpose.msra.mxu0 0.0
        %785 = vmatprep.subr.mxu0 0.0
        %786 = vmatpush1.xpose.msra.mxu0 0.0
        %787 = vmatprep.subr.mxu0 0.0
        %788 = vmatpush1.xpose.msra.mxu0 0.0
        %789 = vmatprep.subr.mxu0 0.0
        %790 = vmatpush1.xpose.msra.mxu0 0.0
        %791 = vmatprep.subr.mxu0 0.0
        %792 = vmatpush1.xpose.msra.mxu0 0.0
        %793 = vmatprep.subr.mxu0 0.0
        %794 = vmatpush1.xpose.msra.mxu0 0.0
        %795 = vmatprep.subr.mxu0 0.0
        %796 = vmatpush1.xpose.msra.mxu0 0.0
        %797 = vmatprep.subr.mxu0 0.0
        %798 = vmatpush1.xpose.msra.mxu0 0.0
        %799 = vmatprep.subr.mxu0 0.0
        %800 = vmatpush1.xpose.msra.mxu0 0.0
        %801 = vmatprep.subr.mxu0 0.0
        %802 = vmatpush1.xpose.msra.mxu0 0.0
        %803 = vmatprep.subr.mxu0 0.0
        %804 = vmatpush1.xpose.msra.mxu0 0.0
        %805 = vmatprep.subr.mxu0 0.0
        %806 = vmatpush1.xpose.msra.mxu0 %v773
        %807 = vmatprep.subr.mxu0 0.0
        %808 = vmatpush2.xpose.msra.mxu0 0.0
        %809 = vmatprep.subr.mxu0 0.0
        %810 = vmatpush2.xpose.msra.mxu0 0.0
        %811 = vmatprep.subr.mxu0 0.0
        %812 = vmatpush2.xpose.msra.mxu0 0.0
        %813 = vmatprep.subr.mxu0 0.0
        %814 = vmatpush2.xpose.msra.mxu0 0.0
        %815 = vmatprep.subr.mxu0 0.0
        %816 = vmatpush2.xpose.msra.mxu0 0.0
        %817 = vmatprep.subr.mxu0 0.0
        %818 = vmatpush2.xpose.msra.mxu0 0.0
        %819 = vmatprep.subr.mxu0 0.0
        %820 = vmatpush2.xpose.msra.mxu0 0.0
        %821 = vmatprep.subr.mxu0 0.0
        %822 = vmatpush2.xpose.msra.mxu0 0.0
        %823 = vmatprep.subr.mxu0 0.0
        %824 = vmatpush2.xpose.msra.mxu0 0.0
        %825 = vmatprep.subr.mxu0 0.0
        %826 = vmatpush2.xpose.msra.mxu0 0.0
        %827 = vmatprep.subr.mxu0 0.0
        %828 = vmatpush2.xpose.msra.mxu0 0.0
        %829 = vmatprep.subr.mxu0 0.0
        %830 = vmatpush2.xpose.msra.mxu0 0.0
        %831 = vmatprep.subr.mxu0 0.0
        %832 = vmatpush2.xpose.msra.mxu0 0.0
        %833 = vmatprep.subr.mxu0 0.0
        %834 = vmatpush2.xpose.msra.mxu0 0.0
        %835 = vmatprep.subr.mxu0 0.0
        %836 = vmatpush2.xpose.msra.mxu0 0.0
        %837 = vmatprep.subr.mxu0 0.0
        %838 = vmatpush2.xpose.msra.mxu0 0.0
        %839 = vmatprep.mubr.f32.mxu0 0.0
        %840 = vmatmul.mubr.f32.gmra.mxu0 %v770
        %v841 = vpop.f32.mrf.mxu0
        %v842 = vadd.f32 0.0, %v841
        %v843 = vpop.f32.mrf.mxu0
        %844 = vdwg.mxu0
        %v846 = vsel %vm616, %v607, 0
        %v849 = vsel %vm616, %v611, 0
        %851 = vmatprep.subr.mxu0 0.0
        %852 = vmatpush1.xpose.msra.mxu0 0.0
        %853 = vmatprep.subr.mxu0 0.0
        %854 = vmatpush1.xpose.msra.mxu0 0.0
        %855 = vmatprep.subr.mxu0 0.0
        %856 = vmatpush1.xpose.msra.mxu0 0.0
        %857 = vmatprep.subr.mxu0 0.0
        %858 = vmatpush1.xpose.msra.mxu0 0.0
        %859 = vmatprep.subr.mxu0 0.0
        %860 = vmatpush1.xpose.msra.mxu0 0.0
        %861 = vmatprep.subr.mxu0 0.0
        %862 = vmatpush1.xpose.msra.mxu0 0.0
        %863 = vmatprep.subr.mxu0 0.0
        %864 = vmatpush1.xpose.msra.mxu0 0.0
        %865 = vmatprep.subr.mxu0 0.0
        %866 = vmatpush1.xpose.msra.mxu0 0.0
        %867 = vmatprep.subr.mxu0 0.0
        %868 = vmatpush1.xpose.msra.mxu0 0.0
        %869 = vmatprep.subr.mxu0 0.0
        %870 = vmatpush1.xpose.msra.mxu0 0.0
        %871 = vmatprep.subr.mxu0 0.0
        %872 = vmatpush1.xpose.msra.mxu0 0.0
        %873 = vmatprep.subr.mxu0 0.0
        %874 = vmatpush1.xpose.msra.mxu0 0.0
        %875 = vmatprep.subr.mxu0 0.0
        %876 = vmatpush1.xpose.msra.mxu0 0.0
        %877 = vmatprep.subr.mxu0 0.0
        %878 = vmatpush1.xpose.msra.mxu0 0.0
        %879 = vmatprep.subr.mxu0 0.0
        %880 = vmatpush1.xpose.msra.mxu0 0.0
        %881 = vmatprep.subr.mxu0 0.0
        %882 = vmatpush1.xpose.msra.mxu0 %v849
        %883 = vmatprep.subr.mxu0 0.0
        %884 = vmatpush2.xpose.msra.mxu0 0.0
        %885 = vmatprep.subr.mxu0 0.0
        %886 = vmatpush2.xpose.msra.mxu0 0.0
        %887 = vmatprep.subr.mxu0 0.0
        %888 = vmatpush2.xpose.msra.mxu0 0.0
        %889 = vmatprep.subr.mxu0 0.0
        %890 = vmatpush2.xpose.msra.mxu0 0.0
        %891 = vmatprep.subr.mxu0 0.0
        %892 = vmatpush2.xpose.msra.mxu0 0.0
        %893 = vmatprep.subr.mxu0 0.0
        %894 = vmatpush2.xpose.msra.mxu0 0.0
        %895 = vmatprep.subr.mxu0 0.0
        %896 = vmatpush2.xpose.msra.mxu0 0.0
        %897 = vmatprep.subr.mxu0 0.0
        %898 = vmatpush2.xpose.msra.mxu0 0.0
        %899 = vmatprep.subr.mxu0 0.0
        %900 = vmatpush2.xpose.msra.mxu0 0.0
        %901 = vmatprep.subr.mxu0 0.0
        %902 = vmatpush2.xpose.msra.mxu0 0.0
        %903 = vmatprep.subr.mxu0 0.0
        %904 = vmatpush2.xpose.msra.mxu0 0.0
        %905 = vmatprep.subr.mxu0 0.0
        %906 = vmatpush2.xpose.msra.mxu0 0.0
        %907 = vmatprep.subr.mxu0 0.0
        %908 = vmatpush2.xpose.msra.mxu0 0.0
        %909 = vmatprep.subr.mxu0 0.0
        %910 = vmatpush2.xpose.msra.mxu0 0.0
        %911 = vmatprep.subr.mxu0 0.0
        %912 = vmatpush2.xpose.msra.mxu0 0.0
        %913 = vmatprep.subr.mxu0 0.0
        %914 = vmatpush2.xpose.msra.mxu0 0.0
        %915 = vmatprep.mubr.f32.mxu0 0.0
        %916 = vmatmul.mubr.f32.gmra.mxu0 %v846
        %v917 = vpop.f32.mrf.mxu0
        %v918 = vadd.f32 0.0, %v917
        %v919 = vpop.f32.mrf.mxu0
        %920 = vdwg.mxu0
        %vm921 = vcmask 64512
        %v922 = vsel %vm921, %v690, -inf
        %923 = vmax.xlane.f32.xlu0 %v922
        %v924 = vpop.xlane.xlu0 %923
        %v925 = vsel %vm921, %v766, -inf
        %926 = vmax.xlane.f32.xlu0 %v925
        %v927 = vpop.xlane.xlu0 %926
        %v928 = vsel %vm921, %v842, -inf
        %929 = vmax.xlane.f32.xlu0 %v928
        %v930 = vpop.xlane.xlu0 %929
        %v931 = vsel %vm921, %v918, -inf
        %932 = vmax.xlane.f32.xlu0 %v931
        %v933 = vpop.xlane.xlu0 %932
        %v934 = vsub.f32 %v690, %v924
        %v935 = vsub.f32 %v766, %v927
        %v936 = vsub.f32 %v842, %v930
        %v937 = vsub.f32 %v918, %v933
        %v938 = vmul.f32 %v934, 1.442695
        %v939 = vpow.pop %v938
        %v940 = vmul.f32 %v935, 1.442695
        %v941 = vpow.pop %v940
        %v942 = vmul.f32 %v936, 1.442695
        %v943 = vpow.pop %v942
        %v944 = vmul.f32 %v937, 1.442695
        %v945 = vpow.pop %v944
        %v946 = vsel %vm921, %v939, 0.0
        %947 = vadd.xlane.f32.xlu0 %v946
        %v948 = vpop.xlane.xlu0 %947
        %v949 = vsel %vm921, %v941, 0.0
        %950 = vadd.xlane.f32.xlu0 %v949
        %v951 = vpop.xlane.xlu0 %950
        %v952 = vsel %vm921, %v943, 0.0
        %953 = vadd.xlane.f32.xlu0 %v952
        %v954 = vpop.xlane.xlu0 %953
        %v955 = vsel %vm921, %v945, 0.0
        %956 = vadd.xlane.f32.xlu0 %v955
        %v957 = vpop.xlane.xlu0 %956
        %v958 = vrcp.pop %v948
        %v959 = vrcp.pop %v951
        %v960 = vrcp.pop %v954
        %v961 = vrcp.pop %v957
        %v962 = vmul.f32 %v939, %v958
        %v963 = vmul.f32 %v941, %v959
        %v964 = vmul.f32 %v943, %v960
        %v965 = vmul.f32 %v945, %v961
        %v967 = vsel %vm921, %v962, 0
        %969 = vmatprep.subr.mxu0 0.0
        %970 = vmatpush1.msra.mxu0 0.0
        %971 = vmatprep.subr.mxu0 0.0
        %972 = vmatpush1.msra.mxu0 0.0
        %973 = vmatprep.subr.mxu0 0.0
        %974 = vmatpush1.msra.mxu0 0.0
        %975 = vmatprep.subr.mxu0 0.0
        %976 = vmatpush1.msra.mxu0 0.0
        %977 = vmatprep.subr.mxu0 0.0
        %978 = vmatpush1.msra.mxu0 0.0
        %979 = vmatprep.subr.mxu0 0.0
        %980 = vmatpush1.msra.mxu0 0.0
        %981 = vmatprep.subr.mxu0 0.0
        %982 = vmatpush1.msra.mxu0 0.0
        %983 = vmatprep.subr.mxu0 0.0
        %984 = vmatpush1.msra.mxu0 0.0
        %985 = vmatprep.subr.mxu0 0.0
        %986 = vmatpush1.msra.mxu0 0.0
        %987 = vmatprep.subr.mxu0 0.0
        %988 = vmatpush1.msra.mxu0 0.0
        %989 = vmatprep.subr.mxu0 0.0
        %990 = vmatpush1.msra.mxu0 0.0
        %991 = vmatprep.subr.mxu0 0.0
        %992 = vmatpush1.msra.mxu0 0.0
        %993 = vmatprep.subr.mxu0 0.0
        %994 = vmatpush1.msra.mxu0 0.0
        %995 = vmatprep.subr.mxu0 0.0
        %996 = vmatpush1.msra.mxu0 0.0
        %997 = vmatprep.subr.mxu0 0.0
        %998 = vmatpush1.msra.mxu0 0.0
        %999 = vmatprep.subr.mxu0 0.0
        %1000 = vmatpush1.msra.mxu0 %v612
        %1001 = vmatprep.subr.mxu0 0.0
        %1002 = vmatpush2.msra.mxu0 0.0
        %1003 = vmatprep.subr.mxu0 0.0
        %1004 = vmatpush2.msra.mxu0 0.0
        %1005 = vmatprep.subr.mxu0 0.0
        %1006 = vmatpush2.msra.mxu0 0.0
        %1007 = vmatprep.subr.mxu0 0.0
        %1008 = vmatpush2.msra.mxu0 0.0
        %1009 = vmatprep.subr.mxu0 0.0
        %1010 = vmatpush2.msra.mxu0 0.0
        %1011 = vmatprep.subr.mxu0 0.0
        %1012 = vmatpush2.msra.mxu0 0.0
        %1013 = vmatprep.subr.mxu0 0.0
        %1014 = vmatpush2.msra.mxu0 0.0
        %1015 = vmatprep.subr.mxu0 0.0
        %1016 = vmatpush2.msra.mxu0 0.0
        %1017 = vmatprep.subr.mxu0 0.0
        %1018 = vmatpush2.msra.mxu0 0.0
        %1019 = vmatprep.subr.mxu0 0.0
        %1020 = vmatpush2.msra.mxu0 0.0
        %1021 = vmatprep.subr.mxu0 0.0
        %1022 = vmatpush2.msra.mxu0 0.0
        %1023 = vmatprep.subr.mxu0 0.0
        %1024 = vmatpush2.msra.mxu0 0.0
        %1025 = vmatprep.subr.mxu0 0.0
        %1026 = vmatpush2.msra.mxu0 0.0
        %1027 = vmatprep.subr.mxu0 0.0
        %1028 = vmatpush2.msra.mxu0 0.0
        %1029 = vmatprep.subr.mxu0 0.0
        %1030 = vmatpush2.msra.mxu0 0.0
        %1031 = vmatprep.subr.mxu0 0.0
        %1032 = vmatpush2.msra.mxu0 0.0
        %1033 = vmatprep.mubr.f32.mxu0 0.0
        %1034 = vmatmul.mubr.f32.gmra.mxu0 %v967
        %v1035 = vpop.f32.mrf.mxu0
        %v1036 = vadd.f32 0.0, %v1035
        %v1037 = vpop.f32.mrf.mxu0
        %1038 = vdwg.mxu0
        %v1040 = vsel %vm921, %v963, 0
        %1042 = vmatprep.subr.mxu0 0.0
        %1043 = vmatpush1.msra.mxu0 0.0
        %1044 = vmatprep.subr.mxu0 0.0
        %1045 = vmatpush1.msra.mxu0 0.0
        %1046 = vmatprep.subr.mxu0 0.0
        %1047 = vmatpush1.msra.mxu0 0.0
        %1048 = vmatprep.subr.mxu0 0.0
        %1049 = vmatpush1.msra.mxu0 0.0
        %1050 = vmatprep.subr.mxu0 0.0
        %1051 = vmatpush1.msra.mxu0 0.0
        %1052 = vmatprep.subr.mxu0 0.0
        %1053 = vmatpush1.msra.mxu0 0.0
        %1054 = vmatprep.subr.mxu0 0.0
        %1055 = vmatpush1.msra.mxu0 0.0
        %1056 = vmatprep.subr.mxu0 0.0
        %1057 = vmatpush1.msra.mxu0 0.0
        %1058 = vmatprep.subr.mxu0 0.0
        %1059 = vmatpush1.msra.mxu0 0.0
        %1060 = vmatprep.subr.mxu0 0.0
        %1061 = vmatpush1.msra.mxu0 0.0
        %1062 = vmatprep.subr.mxu0 0.0
        %1063 = vmatpush1.msra.mxu0 0.0
        %1064 = vmatprep.subr.mxu0 0.0
        %1065 = vmatpush1.msra.mxu0 0.0
        %1066 = vmatprep.subr.mxu0 0.0
        %1067 = vmatpush1.msra.mxu0 0.0
        %1068 = vmatprep.subr.mxu0 0.0
        %1069 = vmatpush1.msra.mxu0 0.0
        %1070 = vmatprep.subr.mxu0 0.0
        %1071 = vmatpush1.msra.mxu0 0.0
        %1072 = vmatprep.subr.mxu0 0.0
        %1073 = vmatpush1.msra.mxu0 %v613
        %1074 = vmatprep.subr.mxu0 0.0
        %1075 = vmatpush2.msra.mxu0 0.0
        %1076 = vmatprep.subr.mxu0 0.0
        %1077 = vmatpush2.msra.mxu0 0.0
        %1078 = vmatprep.subr.mxu0 0.0
        %1079 = vmatpush2.msra.mxu0 0.0
        %1080 = vmatprep.subr.mxu0 0.0
        %1081 = vmatpush2.msra.mxu0 0.0
        %1082 = vmatprep.subr.mxu0 0.0
        %1083 = vmatpush2.msra.mxu0 0.0
        %1084 = vmatprep.subr.mxu0 0.0
        %1085 = vmatpush2.msra.mxu0 0.0
        %1086 = vmatprep.subr.mxu0 0.0
        %1087 = vmatpush2.msra.mxu0 0.0
        %1088 = vmatprep.subr.mxu0 0.0
        %1089 = vmatpush2.msra.mxu0 0.0
        %1090 = vmatprep.subr.mxu0 0.0
        %1091 = vmatpush2.msra.mxu0 0.0
        %1092 = vmatprep.subr.mxu0 0.0
        %1093 = vmatpush2.msra.mxu0 0.0
        %1094 = vmatprep.subr.mxu0 0.0
        %1095 = vmatpush2.msra.mxu0 0.0
        %1096 = vmatprep.subr.mxu0 0.0
        %1097 = vmatpush2.msra.mxu0 0.0
        %1098 = vmatprep.subr.mxu0 0.0
        %1099 = vmatpush2.msra.mxu0 0.0
        %1100 = vmatprep.subr.mxu0 0.0
        %1101 = vmatpush2.msra.mxu0 0.0
        %1102 = vmatprep.subr.mxu0 0.0
        %1103 = vmatpush2.msra.mxu0 0.0
        %1104 = vmatprep.subr.mxu0 0.0
        %1105 = vmatpush2.msra.mxu0 0.0
        %1106 = vmatprep.mubr.f32.mxu0 0.0
        %1107 = vmatmul.mubr.f32.gmra.mxu0 %v1040
        %v1108 = vpop.f32.mrf.mxu0
        %v1109 = vadd.f32 0.0, %v1108
        %v1110 = vpop.f32.mrf.mxu0
        %1111 = vdwg.mxu0
        %v1113 = vsel %vm921, %v964, 0
        %1115 = vmatprep.subr.mxu0 0.0
        %1116 = vmatpush1.msra.mxu0 0.0
        %1117 = vmatprep.subr.mxu0 0.0
        %1118 = vmatpush1.msra.mxu0 0.0
        %1119 = vmatprep.subr.mxu0 0.0
        %1120 = vmatpush1.msra.mxu0 0.0
        %1121 = vmatprep.subr.mxu0 0.0
        %1122 = vmatpush1.msra.mxu0 0.0
        %1123 = vmatprep.subr.mxu0 0.0
        %1124 = vmatpush1.msra.mxu0 0.0
        %1125 = vmatprep.subr.mxu0 0.0
        %1126 = vmatpush1.msra.mxu0 0.0
        %1127 = vmatprep.subr.mxu0 0.0
        %1128 = vmatpush1.msra.mxu0 0.0
        %1129 = vmatprep.subr.mxu0 0.0
        %1130 = vmatpush1.msra.mxu0 0.0
        %1131 = vmatprep.subr.mxu0 0.0
        %1132 = vmatpush1.msra.mxu0 0.0
        %1133 = vmatprep.subr.mxu0 0.0
        %1134 = vmatpush1.msra.mxu0 0.0
        %1135 = vmatprep.subr.mxu0 0.0
        %1136 = vmatpush1.msra.mxu0 0.0
        %1137 = vmatprep.subr.mxu0 0.0
        %1138 = vmatpush1.msra.mxu0 0.0
        %1139 = vmatprep.subr.mxu0 0.0
        %1140 = vmatpush1.msra.mxu0 0.0
        %1141 = vmatprep.subr.mxu0 0.0
        %1142 = vmatpush1.msra.mxu0 0.0
        %1143 = vmatprep.subr.mxu0 0.0
        %1144 = vmatpush1.msra.mxu0 0.0
        %1145 = vmatprep.subr.mxu0 0.0
        %1146 = vmatpush1.msra.mxu0 %v614
        %1147 = vmatprep.subr.mxu0 0.0
        %1148 = vmatpush2.msra.mxu0 0.0
        %1149 = vmatprep.subr.mxu0 0.0
        %1150 = vmatpush2.msra.mxu0 0.0
        %1151 = vmatprep.subr.mxu0 0.0
        %1152 = vmatpush2.msra.mxu0 0.0
        %1153 = vmatprep.subr.mxu0 0.0
        %1154 = vmatpush2.msra.mxu0 0.0
        %1155 = vmatprep.subr.mxu0 0.0
        %1156 = vmatpush2.msra.mxu0 0.0
        %1157 = vmatprep.subr.mxu0 0.0
        %1158 = vmatpush2.msra.mxu0 0.0
        %1159 = vmatprep.subr.mxu0 0.0
        %1160 = vmatpush2.msra.mxu0 0.0
        %1161 = vmatprep.subr.mxu0 0.0
        %1162 = vmatpush2.msra.mxu0 0.0
        %1163 = vmatprep.subr.mxu0 0.0
        %1164 = vmatpush2.msra.mxu0 0.0
        %1165 = vmatprep.subr.mxu0 0.0
        %1166 = vmatpush2.msra.mxu0 0.0
        %1167 = vmatprep.subr.mxu0 0.0
        %1168 = vmatpush2.msra.mxu0 0.0
        %1169 = vmatprep.subr.mxu0 0.0
        %1170 = vmatpush2.msra.mxu0 0.0
        %1171 = vmatprep.subr.mxu0 0.0
        %1172 = vmatpush2.msra.mxu0 0.0
        %1173 = vmatprep.subr.mxu0 0.0
        %1174 = vmatpush2.msra.mxu0 0.0
        %1175 = vmatprep.subr.mxu0 0.0
        %1176 = vmatpush2.msra.mxu0 0.0
        %1177 = vmatprep.subr.mxu0 0.0
        %1178 = vmatpush2.msra.mxu0 0.0
        %1179 = vmatprep.mubr.f32.mxu0 0.0
        %1180 = vmatmul.mubr.f32.gmra.mxu0 %v1113
        %v1181 = vpop.f32.mrf.mxu0
        %v1182 = vadd.f32 0.0, %v1181
        %v1183 = vpop.f32.mrf.mxu0
        %1184 = vdwg.mxu0
        %v1186 = vsel %vm921, %v965, 0
        %1188 = vmatprep.subr.mxu0 0.0
        %1189 = vmatpush1.msra.mxu0 0.0
        %1190 = vmatprep.subr.mxu0 0.0
        %1191 = vmatpush1.msra.mxu0 0.0
        %1192 = vmatprep.subr.mxu0 0.0
        %1193 = vmatpush1.msra.mxu0 0.0
        %1194 = vmatprep.subr.mxu0 0.0
        %1195 = vmatpush1.msra.mxu0 0.0
        %1196 = vmatprep.subr.mxu0 0.0
        %1197 = vmatpush1.msra.mxu0 0.0
        %1198 = vmatprep.subr.mxu0 0.0
        %1199 = vmatpush1.msra.mxu0 0.0
        %1200 = vmatprep.subr.mxu0 0.0
        %1201 = vmatpush1.msra.mxu0 0.0
        %1202 = vmatprep.subr.mxu0 0.0
        %1203 = vmatpush1.msra.mxu0 0.0
        %1204 = vmatprep.subr.mxu0 0.0
        %1205 = vmatpush1.msra.mxu0 0.0
        %1206 = vmatprep.subr.mxu0 0.0
        %1207 = vmatpush1.msra.mxu0 0.0
        %1208 = vmatprep.subr.mxu0 0.0
        %1209 = vmatpush1.msra.mxu0 0.0
        %1210 = vmatprep.subr.mxu0 0.0
        %1211 = vmatpush1.msra.mxu0 0.0
        %1212 = vmatprep.subr.mxu0 0.0
        %1213 = vmatpush1.msra.mxu0 0.0
        %1214 = vmatprep.subr.mxu0 0.0
        %1215 = vmatpush1.msra.mxu0 0.0
        %1216 = vmatprep.subr.mxu0 0.0
        %1217 = vmatpush1.msra.mxu0 0.0
        %1218 = vmatprep.subr.mxu0 0.0
        %1219 = vmatpush1.msra.mxu0 %v615
        %1220 = vmatprep.subr.mxu0 0.0
        %1221 = vmatpush2.msra.mxu0 0.0
        %1222 = vmatprep.subr.mxu0 0.0
        %1223 = vmatpush2.msra.mxu0 0.0
        %1224 = vmatprep.subr.mxu0 0.0
        %1225 = vmatpush2.msra.mxu0 0.0
        %1226 = vmatprep.subr.mxu0 0.0
        %1227 = vmatpush2.msra.mxu0 0.0
        %1228 = vmatprep.subr.mxu0 0.0
        %1229 = vmatpush2.msra.mxu0 0.0
        %1230 = vmatprep.subr.mxu0 0.0
        %1231 = vmatpush2.msra.mxu0 0.0
        %1232 = vmatprep.subr.mxu0 0.0
        %1233 = vmatpush2.msra.mxu0 0.0
        %1234 = vmatprep.subr.mxu0 0.0
        %1235 = vmatpush2.msra.mxu0 0.0
        %1236 = vmatprep.subr.mxu0 0.0
        %1237 = vmatpush2.msra.mxu0 0.0
        %1238 = vmatprep.subr.mxu0 0.0
        %1239 = vmatpush2.msra.mxu0 0.0
        %1240 = vmatprep.subr.mxu0 0.0
        %1241 = vmatpush2.msra.mxu0 0.0
        %1242 = vmatprep.subr.mxu0 0.0
        %1243 = vmatpush2.msra.mxu0 0.0
        %1244 = vmatprep.subr.mxu0 0.0
        %1245 = vmatpush2.msra.mxu0 0.0
        %1246 = vmatprep.subr.mxu0 0.0
        %1247 = vmatpush2.msra.mxu0 0.0
        %1248 = vmatprep.subr.mxu0 0.0
        %1249 = vmatpush2.msra.mxu0 0.0
        %1250 = vmatprep.subr.mxu0 0.0
        %1251 = vmatpush2.msra.mxu0 0.0
        %1252 = vmatprep.mubr.f32.mxu0 0.0
        %1253 = vmatmul.mubr.f32.gmra.mxu0 %v1186
        %v1254 = vpop.f32.mrf.mxu0
        %v1255 = vadd.f32 0.0, %v1254
        %v1256 = vpop.f32.mrf.mxu0
        %1257 = vdwg.mxu0
        %v1258 = vld [vmem:[#allocation10] sm:$0xff]
        %v1259 = vld [vmem:[#allocation10 + $0x8] sm:$0xff]
        %v1260 = vld [vmem:[#allocation10 + $0x10] sm:$0xff]
        %v1261 = vld [vmem:[#allocation10 + $0x18] sm:$0xff]
        %v1262 = vld [vmem:[#allocation10 + $0x20] sm:$0xff]
        %v1263 = vld [vmem:[#allocation10 + $0x28] sm:$0xff]
        %v1264 = vld [vmem:[#allocation10 + $0x30] sm:$0xff]
        %v1265 = vld [vmem:[#allocation10 + $0x38] sm:$0xff]
        %v1267 = vsel %vm616, %v1036, 0
        %1269 = vmatprep.subr.mxu0 0.0
        %1270 = vmatpush1.msra.mxu0 0.0
        %1271 = vmatprep.subr.mxu0 0.0
        %1272 = vmatpush1.msra.mxu0 0.0
        %1273 = vmatprep.subr.mxu0 0.0
        %1274 = vmatpush1.msra.mxu0 0.0
        %1275 = vmatprep.subr.mxu0 0.0
        %1276 = vmatpush1.msra.mxu0 0.0
        %1277 = vmatprep.subr.mxu0 0.0
        %1278 = vmatpush1.msra.mxu0 0.0
        %1279 = vmatprep.subr.mxu0 0.0
        %1280 = vmatpush1.msra.mxu0 0.0
        %1281 = vmatprep.subr.mxu0 0.0
        %1282 = vmatpush1.msra.mxu0 0.0
        %1283 = vmatprep.subr.mxu0 0.0
        %1284 = vmatpush1.msra.mxu0 0.0
        %1285 = vmatprep.subr.mxu0 0.0
        %1286 = vmatpush1.msra.mxu0 0.0
        %1287 = vmatprep.subr.mxu0 0.0
        %1288 = vmatpush1.msra.mxu0 0.0
        %1289 = vmatprep.subr.mxu0 0.0
        %1290 = vmatpush1.msra.mxu0 0.0
        %1291 = vmatprep.subr.mxu0 0.0
        %1292 = vmatpush1.msra.mxu0 0.0
        %1293 = vmatprep.subr.mxu0 0.0
        %1294 = vmatpush1.msra.mxu0 0.0
        %1295 = vmatprep.subr.mxu0 0.0
        %1296 = vmatpush1.msra.mxu0 0.0
        %1297 = vmatprep.subr.mxu0 0.0
        %1298 = vmatpush1.msra.mxu0 %v1259
        %1299 = vmatprep.subr.mxu0 0.0
        %1300 = vmatpush1.msra.mxu0 %v1258
        %1301 = vmatprep.subr.mxu0 0.0
        %1302 = vmatpush2.msra.mxu0 0.0
        %1303 = vmatprep.subr.mxu0 0.0
        %1304 = vmatpush2.msra.mxu0 0.0
        %1305 = vmatprep.subr.mxu0 0.0
        %1306 = vmatpush2.msra.mxu0 0.0
        %1307 = vmatprep.subr.mxu0 0.0
        %1308 = vmatpush2.msra.mxu0 0.0
        %1309 = vmatprep.subr.mxu0 0.0
        %1310 = vmatpush2.msra.mxu0 0.0
        %1311 = vmatprep.subr.mxu0 0.0
        %1312 = vmatpush2.msra.mxu0 0.0
        %1313 = vmatprep.subr.mxu0 0.0
        %1314 = vmatpush2.msra.mxu0 0.0
        %1315 = vmatprep.subr.mxu0 0.0
        %1316 = vmatpush2.msra.mxu0 0.0
        %1317 = vmatprep.subr.mxu0 0.0
        %1318 = vmatpush2.msra.mxu0 0.0
        %1319 = vmatprep.subr.mxu0 0.0
        %1320 = vmatpush2.msra.mxu0 0.0
        %1321 = vmatprep.subr.mxu0 0.0
        %1322 = vmatpush2.msra.mxu0 0.0
        %1323 = vmatprep.subr.mxu0 0.0
        %1324 = vmatpush2.msra.mxu0 0.0
        %1325 = vmatprep.subr.mxu0 0.0
        %1326 = vmatpush2.msra.mxu0 0.0
        %1327 = vmatprep.subr.mxu0 0.0
        %1328 = vmatpush2.msra.mxu0 0.0
        %1329 = vmatprep.subr.mxu0 0.0
        %1330 = vmatpush2.msra.mxu0 0.0
        %1331 = vmatprep.subr.mxu0 0.0
        %1332 = vmatpush2.msra.mxu0 0.0
        %1333 = vmatprep.mubr.f32.mxu0 0.0
        %1334 = vmatmul.mubr.f32.gmra.mxu0 %v1267
        %v1335 = vpop.f32.mrf.mxu0
        %v1336 = vadd.f32 0.0, %v1335
        %v1337 = vpop.f32.mrf.mxu0
        %1338 = vdwg.mxu0
        %v1340 = vsel %vm616, %v1109, 0
        %1342 = vmatprep.subr.mxu0 0.0
        %1343 = vmatpush1.msra.mxu0 0.0
        %1344 = vmatprep.subr.mxu0 0.0
        %1345 = vmatpush1.msra.mxu0 0.0
        %1346 = vmatprep.subr.mxu0 0.0
        %1347 = vmatpush1.msra.mxu0 0.0
        %1348 = vmatprep.subr.mxu0 0.0
        %1349 = vmatpush1.msra.mxu0 0.0
        %1350 = vmatprep.subr.mxu0 0.0
        %1351 = vmatpush1.msra.mxu0 0.0
        %1352 = vmatprep.subr.mxu0 0.0
        %1353 = vmatpush1.msra.mxu0 0.0
        %1354 = vmatprep.subr.mxu0 0.0
        %1355 = vmatpush1.msra.mxu0 0.0
        %1356 = vmatprep.subr.mxu0 0.0
        %1357 = vmatpush1.msra.mxu0 0.0
        %1358 = vmatprep.subr.mxu0 0.0
        %1359 = vmatpush1.msra.mxu0 0.0
        %1360 = vmatprep.subr.mxu0 0.0
        %1361 = vmatpush1.msra.mxu0 0.0
        %1362 = vmatprep.subr.mxu0 0.0
        %1363 = vmatpush1.msra.mxu0 0.0
        %1364 = vmatprep.subr.mxu0 0.0
        %1365 = vmatpush1.msra.mxu0 0.0
        %1366 = vmatprep.subr.mxu0 0.0
        %1367 = vmatpush1.msra.mxu0 0.0
        %1368 = vmatprep.subr.mxu0 0.0
        %1369 = vmatpush1.msra.mxu0 0.0
        %1370 = vmatprep.subr.mxu0 0.0
        %1371 = vmatpush1.msra.mxu0 %v1261
        %1372 = vmatprep.subr.mxu0 0.0
        %1373 = vmatpush1.msra.mxu0 %v1260
        %1374 = vmatprep.subr.mxu0 0.0
        %1375 = vmatpush2.msra.mxu0 0.0
        %1376 = vmatprep.subr.mxu0 0.0
        %1377 = vmatpush2.msra.mxu0 0.0
        %1378 = vmatprep.subr.mxu0 0.0
        %1379 = vmatpush2.msra.mxu0 0.0
        %1380 = vmatprep.subr.mxu0 0.0
        %1381 = vmatpush2.msra.mxu0 0.0
        %1382 = vmatprep.subr.mxu0 0.0
        %1383 = vmatpush2.msra.mxu0 0.0
        %1384 = vmatprep.subr.mxu0 0.0
        %1385 = vmatpush2.msra.mxu0 0.0
        %1386 = vmatprep.subr.mxu0 0.0
        %1387 = vmatpush2.msra.mxu0 0.0
        %1388 = vmatprep.subr.mxu0 0.0
        %1389 = vmatpush2.msra.mxu0 0.0
        %1390 = vmatprep.subr.mxu0 0.0
        %1391 = vmatpush2.msra.mxu0 0.0
        %1392 = vmatprep.subr.mxu0 0.0
        %1393 = vmatpush2.msra.mxu0 0.0
        %1394 = vmatprep.subr.mxu0 0.0
        %1395 = vmatpush2.msra.mxu0 0.0
        %1396 = vmatprep.subr.mxu0 0.0
        %1397 = vmatpush2.msra.mxu0 0.0
        %1398 = vmatprep.subr.mxu0 0.0
        %1399 = vmatpush2.msra.mxu0 0.0
        %1400 = vmatprep.subr.mxu0 0.0
        %1401 = vmatpush2.msra.mxu0 0.0
        %1402 = vmatprep.subr.mxu0 0.0
        %1403 = vmatpush2.msra.mxu0 0.0
        %1404 = vmatprep.subr.mxu0 0.0
        %1405 = vmatpush2.msra.mxu0 0.0
        %1406 = vmatprep.mubr.f32.mxu0 0.0
        %1407 = vmatmul.mubr.f32.gmra.mxu0 %v1340
        %v1408 = vpop.f32.mrf.mxu0
        %v1409 = vadd.f32 0.0, %v1408
        %v1410 = vpop.f32.mrf.mxu0
        %1411 = vdwg.mxu0
        %v1413 = vsel %vm616, %v1182, 0
        %1415 = vmatprep.subr.mxu0 0.0
        %1416 = vmatpush1.msra.mxu0 0.0
        %1417 = vmatprep.subr.mxu0 0.0
        %1418 = vmatpush1.msra.mxu0 0.0
        %1419 = vmatprep.subr.mxu0 0.0
        %1420 = vmatpush1.msra.mxu0 0.0
        %1421 = vmatprep.subr.mxu0 0.0
        %1422 = vmatpush1.msra.mxu0 0.0
        %1423 = vmatprep.subr.mxu0 0.0
        %1424 = vmatpush1.msra.mxu0 0.0
        %1425 = vmatprep.subr.mxu0 0.0
        %1426 = vmatpush1.msra.mxu0 0.0
        %1427 = vmatprep.subr.mxu0 0.0
        %1428 = vmatpush1.msra.mxu0 0.0
        %1429 = vmatprep.subr.mxu0 0.0
        %1430 = vmatpush1.msra.mxu0 0.0
        %1431 = vmatprep.subr.mxu0 0.0
        %1432 = vmatpush1.msra.mxu0 0.0
        %1433 = vmatprep.subr.mxu0 0.0
        %1434 = vmatpush1.msra.mxu0 0.0
        %1435 = vmatprep.subr.mxu0 0.0
        %1436 = vmatpush1.msra.mxu0 0.0
        %1437 = vmatprep.subr.mxu0 0.0
        %1438 = vmatpush1.msra.mxu0 0.0
        %1439 = vmatprep.subr.mxu0 0.0
        %1440 = vmatpush1.msra.mxu0 0.0
        %1441 = vmatprep.subr.mxu0 0.0
        %1442 = vmatpush1.msra.mxu0 0.0
        %1443 = vmatprep.subr.mxu0 0.0
        %1444 = vmatpush1.msra.mxu0 %v1263
        %1445 = vmatprep.subr.mxu0 0.0
        %1446 = vmatpush1.msra.mxu0 %v1262
        %1447 = vmatprep.subr.mxu0 0.0
        %1448 = vmatpush2.msra.mxu0 0.0
        %1449 = vmatprep.subr.mxu0 0.0
        %1450 = vmatpush2.msra.mxu0 0.0
        %1451 = vmatprep.subr.mxu0 0.0
        %1452 = vmatpush2.msra.mxu0 0.0
        %1453 = vmatprep.subr.mxu0 0.0
        %1454 = vmatpush2.msra.mxu0 0.0
        %1455 = vmatprep.subr.mxu0 0.0
        %1456 = vmatpush2.msra.mxu0 0.0
        %1457 = vmatprep.subr.mxu0 0.0
        %1458 = vmatpush2.msra.mxu0 0.0
        %1459 = vmatprep.subr.mxu0 0.0
        %1460 = vmatpush2.msra.mxu0 0.0
        %1461 = vmatprep.subr.mxu0 0.0
        %1462 = vmatpush2.msra.mxu0 0.0
        %1463 = vmatprep.subr.mxu0 0.0
        %1464 = vmatpush2.msra.mxu0 0.0
        %1465 = vmatprep.subr.mxu0 0.0
        %1466 = vmatpush2.msra.mxu0 0.0
        %1467 = vmatprep.subr.mxu0 0.0
        %1468 = vmatpush2.msra.mxu0 0.0
        %1469 = vmatprep.subr.mxu0 0.0
        %1470 = vmatpush2.msra.mxu0 0.0
        %1471 = vmatprep.subr.mxu0 0.0
        %1472 = vmatpush2.msra.mxu0 0.0
        %1473 = vmatprep.subr.mxu0 0.0
        %1474 = vmatpush2.msra.mxu0 0.0
        %1475 = vmatprep.subr.mxu0 0.0
        %1476 = vmatpush2.msra.mxu0 0.0
        %1477 = vmatprep.subr.mxu0 0.0
        %1478 = vmatpush2.msra.mxu0 0.0
        %1479 = vmatprep.mubr.f32.mxu0 0.0
        %1480 = vmatmul.mubr.f32.gmra.mxu0 %v1413
        %v1481 = vpop.f32.mrf.mxu0
        %v1482 = vadd.f32 0.0, %v1481
        %v1483 = vpop.f32.mrf.mxu0
        %1484 = vdwg.mxu0
        %v1486 = vsel %vm616, %v1255, 0
        %1488 = vmatprep.subr.mxu0 0.0
        %1489 = vmatpush1.msra.mxu0 0.0
        %1490 = vmatprep.subr.mxu0 0.0
        %1491 = vmatpush1.msra.mxu0 0.0
        %1492 = vmatprep.subr.mxu0 0.0
        %1493 = vmatpush1.msra.mxu0 0.0
        %1494 = vmatprep.subr.mxu0 0.0
        %1495 = vmatpush1.msra.mxu0 0.0
        %1496 = vmatprep.subr.mxu0 0.0
        %1497 = vmatpush1.msra.mxu0 0.0
        %1498 = vmatprep.subr.mxu0 0.0
        %1499 = vmatpush1.msra.mxu0 0.0
        %1500 = vmatprep.subr.mxu0 0.0
        %1501 = vmatpush1.msra.mxu0 0.0
        %1502 = vmatprep.subr.mxu0 0.0
        %1503 = vmatpush1.msra.mxu0 0.0
        %1504 = vmatprep.subr.mxu0 0.0
        %1505 = vmatpush1.msra.mxu0 0.0
        %1506 = vmatprep.subr.mxu0 0.0
        %1507 = vmatpush1.msra.mxu0 0.0
        %1508 = vmatprep.subr.mxu0 0.0
        %1509 = vmatpush1.msra.mxu0 0.0
        %1510 = vmatprep.subr.mxu0 0.0
        %1511 = vmatpush1.msra.mxu0 0.0
        %1512 = vmatprep.subr.mxu0 0.0
        %1513 = vmatpush1.msra.mxu0 0.0
        %1514 = vmatprep.subr.mxu0 0.0
        %1515 = vmatpush1.msra.mxu0 0.0
        %1516 = vmatprep.subr.mxu0 0.0
        %1517 = vmatpush1.msra.mxu0 %v1265
        %1518 = vmatprep.subr.mxu0 0.0
        %1519 = vmatpush1.msra.mxu0 %v1264
        %1520 = vmatprep.subr.mxu0 0.0
        %1521 = vmatpush2.msra.mxu0 0.0
        %1522 = vmatprep.subr.mxu0 0.0
        %1523 = vmatpush2.msra.mxu0 0.0
        %1524 = vmatprep.subr.mxu0 0.0
        %1525 = vmatpush2.msra.mxu0 0.0
        %1526 = vmatprep.subr.mxu0 0.0
        %1527 = vmatpush2.msra.mxu0 0.0
        %1528 = vmatprep.subr.mxu0 0.0
        %1529 = vmatpush2.msra.mxu0 0.0
        %1530 = vmatprep.subr.mxu0 0.0
        %1531 = vmatpush2.msra.mxu0 0.0
        %1532 = vmatprep.subr.mxu0 0.0
        %1533 = vmatpush2.msra.mxu0 0.0
        %1534 = vmatprep.subr.mxu0 0.0
        %1535 = vmatpush2.msra.mxu0 0.0
        %1536 = vmatprep.subr.mxu0 0.0
        %1537 = vmatpush2.msra.mxu0 0.0
        %1538 = vmatprep.subr.mxu0 0.0
        %1539 = vmatpush2.msra.mxu0 0.0
        %1540 = vmatprep.subr.mxu0 0.0
        %1541 = vmatpush2.msra.mxu0 0.0
        %1542 = vmatprep.subr.mxu0 0.0
        %1543 = vmatpush2.msra.mxu0 0.0
        %1544 = vmatprep.subr.mxu0 0.0
        %1545 = vmatpush2.msra.mxu0 0.0
        %1546 = vmatprep.subr.mxu0 0.0
        %1547 = vmatpush2.msra.mxu0 0.0
        %1548 = vmatprep.subr.mxu0 0.0
        %1549 = vmatpush2.msra.mxu0 0.0
        %1550 = vmatprep.subr.mxu0 0.0
        %1551 = vmatpush2.msra.mxu0 0.0
        %1552 = vmatprep.mubr.f32.mxu0 0.0
        %1553 = vmatmul.mubr.f32.gmra.mxu0 %v1486
        %v1554 = vpop.f32.mrf.mxu0
        %v1555 = vadd.f32 0.0, %v1554
        %v1556 = vpop.f32.mrf.mxu0
        %1557 = vdwg.mxu0
        %vm1558 = vcmask 261120
        %v1559 = vsel %vm1558, %v1336, 0.0
        %v1560 = vsel %vm1558, %v1409, 0.0
        %v1561 = vadd.f32 %v1559, %v1560
        %v1562 = vsel %vm1558, %v1482, 0.0
        %v1563 = vadd.f32 %v1561, %v1562
        %v1564 = vsel %vm1558, %v1555, 0.0
        %v1565 = vadd.f32 %v1563, %v1564
        %v1566 = vld [vmem:[%s3] sm:$0x1]
        %v1568 = vlaneseq
        %v1569 = vshrl.u32 %v1568, 7
        %v1570 = vsub.s32 0, %v1569
        %v1571 = vrot.slane %v1566, %v1570
        %v1573 = vadd.f32 %v1565, %v1571
        %1574 = vst.msk [vmem:[%s255] sm:$0xff] %vm1558, %v1573
        %s1575 = sand.u32 %s133, 1
        %s1576 = scalar_lea.sflag [#allocation7], %s1575
        %s1577 = sand.u32 %s133, 1
        %s1578 = smul.addr %s1577, 8
        %s1579 = scalar_lea.vmem [#allocation11], %s1578
        // Predicated region
        $region53: #{tpu_custom_call.1} parent=35 // pred_check
          %p1580 = pneg %p143
        $region54: #{tpu_custom_call.1} parent=35 // pred_check_branch
          %1582 = sbr.rel (%p1580) target = $region56
        $region55: #{tpu_custom_call.1} parent=35 // pred_region
          %s1584 = ssub.s32 128, 128
          %1585 = vsyncadd %s1576, %s1584
          %s1586 = sadd.s32 %s27, %s26
          %s1587 = smul.addr %s1586, 128
          %s1588 = scalar_lea.hbm %s4, %s1587
          %s1590 = sshll.u32 %s1579, 4
          %s1591 = int_to_ptr.vmem [resolvable:$true] %s1590
          %1593 = dma.vmem_to_hbm [thread:$0]  %s1591, 128, %s1588, %s1576
        $region56: #{tpu_custom_call.1} parent=35 // pred_fallthru
          _
      $region36: #{tpu_custom_call.1} parent=5 // pred_fallthru
        _
      %p1594 = scmp.le.s32.totalorder 2, %s17
      // Predicated region
      $region57: #{tpu_custom_call.1} parent=5 // pred_check
        %p1595 = pneg %p1594
      $region58: #{tpu_custom_call.1} parent=5 // pred_check_branch
        %1597 = sbr.rel (%p1595) target = $region60
      $region59: #{tpu_custom_call.1} parent=5 // pred_region
        %s1598 = ssub.s32 %s17, 2
        // Predicated region
        $region61: #{tpu_custom_call.1} parent=59 // pred_check
          %p1599 = pneg %p149
        $region62: #{tpu_custom_call.1} parent=59 // pred_check_branch
          %1601 = sbr.rel (%p1599) target = $region64
        $region63: #{tpu_custom_call.1} parent=59 // pred_region
          %s1602 = sand.u32 %s134, 1
          %s1603 = scalar_lea.sflag [#allocation7], %s1602
          %s1604 = sand.u32 %s134, 1
          %s1605 = smul.addr %s1604, 8
          %s1606 = scalar_lea.vmem [#allocation11], %s1605
          %1607 = dma.done %s1603, 128
        $region64: #{tpu_custom_call.1} parent=59 // pred_fallthru
          _
      $region60: #{tpu_custom_call.1} parent=5 // pred_fallthru
        _
    $region6: #{tpu_custom_call.1} parent=1 // loop_footer
      %s21 = sadd.s32 1, %s17
    $region7: #{tpu_custom_call.1} parent=1 // loop_footer_branch
      %16 = sbr.rel target = $region3
    $region8: #{tpu_custom_call.1} parent=1 // loop_exit
      _
    %1608 = vsyncpa [#allocation6], 1
    %s1609 = scalar_lea.sflag [#allocation6], 1
    %1610 = vsyncpa %s1609, 1
    %1611 = vsyncpa [#allocation9], 1
    %1612 = vsyncpa [#allocation7], 1
    %s1613 = scalar_lea.sflag [#allocation7], 1
    %1614 = vsyncpa %s1613, 1

// kernel: tpu_custom_call.1
$region0: #{tpu_custom_call.1}
  #allocation0 [shape = 'u32[]', space=smem, size = 0x4, offset = 0x4, fixed_abs, tag = 'smem constant byte address 0x4 - core index']
  #allocation1 [shape = 'u32[144,128]{1,0:T(1,128)}', space=vmem, size = 0x12000, scoped, tag = 'internal scratch']
  #allocation2 [shape = 'f32[4,8,16]{2,1,0:T(8,128)}', space=vmem, size = 0x4000, scoped, tag = 'scratch operand']
  #allocation3 [shape = 'f32[4,8,16]{2,1,0:T(8,128)}', space=vmem, size = 0x4000, scoped, tag = 'scratch operand']
  #allocation4 [shape = 'f32[4,8,16]{2,1,0:T(8,128)}', space=vmem, size = 0x4000, scoped, tag = 'scratch operand']
  %s0 = inlined_call_operand.hbm [shape: f32[2,8,32], index: 0, kind: input, shape index: {}]
  %s1 = inlined_call_operand.hbm [shape: f32[4,32,48], index: 1, kind: input, shape index: {}]
  %s2 = inlined_call_operand.hbm [shape: f32[4,16,32], index: 2, kind: input, shape index: {}]
  %s3 = inlined_call_operand.vmem [shape: f32[1,32], index: 3, kind: input, shape index: {}]
  %s4 = inlined_call_operand.hbm [shape: f32[2,8,32], index: 4, kind: output, shape index: {}]
  %s5 = sld [smem:[#allocation0]]
  $region65: #{tpu_custom_call.1} parent=0
    _
  %s7 = ssub.s32 1, %s5
  %s8 = scalar_select 0, %s7, %s5
  $region1: #{tpu_custom_call.1} parent=0
    #allocation5 [shape = 'u8[8192]{0}', space=vmem, size = 0x2000, scoped, tag = 'input window, operand 0']
    #allocation6 [shape = 's32[2]{0}', space=sflag, size = 0x8, scoped, tag = 'scoped memory for tpu_custom_call.1']
    #allocation7 [shape = 's32[2]{0}', space=sflag, size = 0x8, scoped, tag = 'scoped memory for tpu_custom_call.1']
    #allocation8 [shape = 'u8[65536]{0}', space=vmem, size = 0x10000, scoped, tag = 'input window, operand 1, single buffered']
    #allocation9 [shape = 's32[1]{0}', space=sflag, size = 0x4, scoped, tag = 'scoped memory for tpu_custom_call.1']
    #allocation10 [shape = 'u8[32768]{0}', space=vmem, size = 0x8000, scoped, tag = 'input window, operand 2, single buffered']
    #allocation11 [shape = 'u8[8192]{0}', space=vmem, size = 0x2000, scoped, tag = 'output window, operand 0']
    %9 = vsyncpa [#allocation6], 0
    %s10 = scalar_lea.sflag [#allocation6], 1
    %11 = vsyncpa %s10, 0
    %12 = vsyncpa [#allocation9], 0
    %13 = vsyncpa [#allocation7], 0
    %s14 = scalar_lea.sflag [#allocation7], 1
    %15 = vsyncpa %s14, 0
    loop: start=0, step=1, limit=4
    $region2: #{tpu_custom_call.1} parent=1 // loop_pre_header
      _
    $region3: #{tpu_custom_call.1} parent=1 // loop_header
      %s17 = sphi 0, %s21
      %p18 = scmp.ge.s32.totalorder %s17, 4
      %s24 = sphi 0, %s36
      %s25 = sphi 0, %s32
      %s26 = sphi 0, %s24
      %s27 = sphi 0, %s25
      %s28 = sphi 0, %s26
      %s29 = sphi 0, %s27
      %s39 = sphi 0, %s41
      %s42 = sphi 0, %s39
      %s43 = sphi 0, %s42
      %s59 = sphi 0, %s43
      %s63 = sphi 0, %s63
      %s65 = sphi 0, %s63
      %s66 = sphi 0, %s65
      %s80 = sphi 0, %s66
      %s84 = sphi 0, %s84
      %s86 = sphi 0, %s84
      %s87 = sphi 0, %s86
      %s101 = sphi 0, %s87
      %s105 = sphi 0, %s105
      %s107 = sphi 0, %s105
      %s108 = sphi 0, %s107
      %s122 = sphi 0, %s108
      %s130 = sphi 0, %s132
      %s133 = sphi 0, %s130
      %s134 = sphi 0, %s133
      %s150 = sphi 0, %s134
    $region4: #{tpu_custom_call.1} parent=1 // loop_header_branch
      %20 = sbr.rel (%p18) target = $region8
    $region5: #{tpu_custom_call.1} parent=1 // loop_body
      %s22 = ssub.s32 %s17, 1
      %s23 = ssub.s32 %s17, 2
      %s30 = sadd.s32 1, %s25
      %p31 = scmp.ge.s32.totalorder %s30, 1
      %s32 = scalar_select %p31, 0, %s30
      %s33 = sadd.s32 1, %s24
      %s34 = scalar_select %p31, %s33, %s24
      %p35 = scmp.ge.s32.totalorder %s34, 2
      %s36 = scalar_select %p35, 0, %s34
      %s37 = ssub.s32 %s24, %s36
      %p38 = scmp.eq.s32.totalorder %s37, 0
      %s40 = sadd.s32 %s39, 1
      %s41 = scalar_select %p38, %s39, %s40
      %p44 = pneg %p38
      %p45 = scmp.eq.s32.totalorder %s17, 1
      %p46 = por %p44, %p45
      %p47 = scmp.ne.s32.totalorder %s39, %s42
      %p48 = scmp.eq.s32.totalorder %s17, 0
      %p49 = por %p47, %p48
      %p50 = scmp.ne.s32.totalorder %s39, %s42
      %p51 = scmp.eq.s32.totalorder %s22, 1
      %p52 = por %p50, %p51
      %p53 = scmp.ne.s32.totalorder %s42, %s43
      %p54 = scmp.eq.s32.totalorder %s22, 0
      %p55 = por %p53, %p54
      %p56 = scmp.ne.s32.totalorder %s42, %s43
      %p57 = scmp.eq.s32.totalorder %s23, 1
      %p58 = por %p56, %p57
      %p60 = scmp.ne.s32.totalorder %s43, %s59
      %p61 = scmp.eq.s32.totalorder %s23, 0
      %p62 = por %p60, %p61
      %s64 = sadd.s32 %s63, 1
      %p67 = scmp.eq.s32.totalorder %s17, 1
      %p68 = scmp.ne.s32.totalorder %s63, %s65
      %p69 = scmp.eq.s32.totalorder %s17, 0
      %p70 = por %p68, %p69
      %p71 = scmp.ne.s32.totalorder %s63, %s65
      %p72 = scmp.eq.s32.totalorder %s22, 1
      %p73 = por %p71, %p72
      %p74 = scmp.ne.s32.totalorder %s65, %s66
      %p75 = scmp.eq.s32.totalorder %s22, 0
      %p76 = por %p74, %p75
      %p77 = scmp.ne.s32.totalorder %s65, %s66
      %p78 = scmp.eq.s32.totalorder %s23, 1
      %p79 = por %p77, %p78
      %p81 = scmp.ne.s32.totalorder %s66, %s80
      %p82 = scmp.eq.s32.totalorder %s23, 0
      %p83 = por %p81, %p82
      %s85 = sadd.s32 %s84, 1
      %p88 = scmp.eq.s32.totalorder %s17, 1
      %p89 = scmp.ne.s32.totalorder %s84, %s86
      %p90 = scmp.eq.s32.totalorder %s17, 0
      %p91 = por %p89, %p90
      %p92 = scmp.ne.s32.totalorder %s84, %s86
      %p93 = scmp.eq.s32.totalorder %s22, 1
      %p94 = por %p92, %p93
      %p95 = scmp.ne.s32.totalorder %s86, %s87
      %p96 = scmp.eq.s32.totalorder %s22, 0
      %p97 = por %p95, %p96
      %p98 = scmp.ne.s32.totalorder %s86, %s87
      %p99 = scmp.eq.s32.totalorder %s23, 1
      %p100 = por %p98, %p99
      %p102 = scmp.ne.s32.totalorder %s87, %s101
      %p103 = scmp.eq.s32.totalorder %s23, 0
      %p104 = por %p102, %p103
      %s106 = sadd.s32 %s105, 1
      %p109 = scmp.eq.s32.totalorder %s17, 1
      %p110 = scmp.ne.s32.totalorder %s105, %s107
      %p111 = scmp.eq.s32.totalorder %s17, 0
      %p112 = por %p110, %p111
      %p113 = scmp.ne.s32.totalorder %s105, %s107
      %p114 = scmp.eq.s32.totalorder %s22, 1
      %p115 = por %p113, %p114
      %p116 = scmp.ne.s32.totalorder %s107, %s108
      %p117 = scmp.eq.s32.totalorder %s22, 0
      %p118 = por %p116, %p117
      %p119 = scmp.ne.s32.totalorder %s107, %s108
      %p120 = scmp.eq.s32.totalorder %s23, 1
      %p121 = por %p119, %p120
      %p123 = scmp.ne.s32.totalorder %s108, %s122
      %p124 = scmp.eq.s32.totalorder %s23, 0
      %p125 = por %p123, %p124
      %s126 = ssub.s32 %s24, %s36
      %s127 = ssub.s32 %s25, %s32
      %s128 = sor.u32 %s126, %s127
      %p129 = scmp.eq.s32.totalorder %s128, 0
      %s131 = sadd.s32 %s130, 1
      %s132 = scalar_select %p129, %s130, %s131
      %p135 = pneg %p129
      %p136 = scmp.eq.s32.totalorder %s17, 1
      %p137 = por %p135, %p136
      %p138 = scmp.ne.s32.totalorder %s130, %s133
      %p139 = scmp.eq.s32.totalorder %s17, 0
      %p140 = por %p138, %p139
      %p141 = scmp.ne.s32.totalorder %s130, %s133
      %p142 = scmp.eq.s32.totalorder %s22, 1
      %p143 = por %p141, %p142
      %p144 = scmp.ne.s32.totalorder %s133, %s134
      %p145 = scmp.eq.s32.totalorder %s22, 0
      %p146 = por %p144, %p145
      %p147 = scmp.ne.s32.totalorder %s133, %s134
      %p148 = scmp.eq.s32.totalorder %s23, 1
      %p149 = por %p147, %p148
      %p151 = scmp.ne.s32.totalorder %s134, %s150
      %p152 = scmp.eq.s32.totalorder %s23, 0
      %p153 = por %p151, %p152
      %p154 = scmp.le.s32.totalorder 1, %s17
      %p155 = scmp.lt.s32.totalorder %s17, 3
      %p156 = pnand %p154, %p155
      %p157 = pneg %p156
      // Predicated region
      $region9: #{tpu_custom_call.1} parent=5 // pred_check
        _
      $region10: #{tpu_custom_call.1} parent=5 // pred_check_branch
        %159 = sbr.rel (%p156) target = $region12
      $region11: #{tpu_custom_call.1} parent=5 // pred_region
        %s160 = ssub.s32 %s17, 1
        // Predicated region
        $region13: #{tpu_custom_call.1} parent=11 // pred_check
          %p161 = pneg %p76
        $region14: #{tpu_custom_call.1} parent=11 // pred_check_branch
          %163 = sbr.rel (%p161) target = $region16
        $region15: #{tpu_custom_call.1} parent=11 // pred_region
          %s165 = ssub.s32 2048, 2048
          %166 = vsyncadd [#allocation9], %s165
          %s167 = sshll.u32 [#allocation8], 4
          %s168 = int_to_ptr.vmem [resolvable:$true] %s167
          %173 = dma.hbm_to_vmem [thread:$0]  %s1, 2048, %s168, [#allocation9], 128, 128, 8
        $region16: #{tpu_custom_call.1} parent=11 // pred_fallthru
          _
        // Predicated region
        $region17: #{tpu_custom_call.1} parent=11 // pred_check
          %p174 = pneg %p97
        $region18: #{tpu_custom_call.1} parent=11 // pred_check_branch
          %176 = sbr.rel (%p174) target = $region20
        $region19: #{tpu_custom_call.1} parent=11 // pred_region
          %s178 = ssub.s32 1024, 1024
          %179 = vsyncadd [#allocation9], %s178
          %s180 = sshll.u32 [#allocation10], 4
          %s181 = int_to_ptr.vmem [resolvable:$true] %s180
          %186 = dma.hbm_to_vmem [thread:$0]  %s2, 1024, %s181, [#allocation9], 128, 128, 8
        $region20: #{tpu_custom_call.1} parent=11 // pred_fallthru
          _
        // Predicated region
        $region21: #{tpu_custom_call.1} parent=11 // pred_check
          %p187 = pneg %p118
        $region22: #{tpu_custom_call.1} parent=11 // pred_check_branch
          %189 = sbr.rel (%p187) target = $region24
        $region23: #{tpu_custom_call.1} parent=11 // pred_region
          _
        $region24: #{tpu_custom_call.1} parent=11 // pred_fallthru
          _
      $region12: #{tpu_custom_call.1} parent=5 // pred_fallthru
        _
      %p190 = scmp.lt.s32.totalorder %s17, 2
      // Predicated region
      $region25: #{tpu_custom_call.1} parent=5 // pred_check
        %p191 = pneg %p190
      $region26: #{tpu_custom_call.1} parent=5 // pred_check_branch
        %193 = sbr.rel (%p191) target = $region28
      $region27: #{tpu_custom_call.1} parent=5 // pred_region
        // Predicated region
        $region29: #{tpu_custom_call.1} parent=27 // pred_check
          %p194 = pneg %p49
        $region30: #{tpu_custom_call.1} parent=27 // pred_check_branch
          %196 = sbr.rel (%p194) target = $region32
        $region31: #{tpu_custom_call.1} parent=27 // pred_region
          %s197 = sand.u32 %s39, 1
          %s198 = scalar_lea.sflag [#allocation6], %s197
          %s199 = sand.u32 %s39, 1
          %s200 = smul.addr %s199, 8
          %s201 = scalar_lea.vmem [#allocation5], %s200
          %s203 = ssub.s32 128, 128
          %204 = vsyncadd %s198, %s203
          %s205 = smul.addr %s24, 128
          %s206 = scalar_lea.hbm %s0, %s205
          %s208 = sshll.u32 %s201, 4
          %s209 = int_to_ptr.vmem [resolvable:$true] %s208
          %211 = dma.hbm_to_vmem [thread:$0]  %s206, 128, %s209, %s198
        $region32: #{tpu_custom_call.1} parent=27 // pred_fallthru
          _
      $region28: #{tpu_custom_call.1} parent=5 // pred_fallthru
        _
      %p212 = scmp.le.s32.totalorder 1, %s17
      %p213 = scmp.lt.s32.totalorder %s17, 3
      %p214 = pnand %p212, %p213
      %p215 = pneg %p214
      // Predicated region
      $region33: #{tpu_custom_call.1} parent=5 // pred_check
        _
      $region34: #{tpu_custom_call.1} parent=5 // pred_check_branch
        %217 = sbr.rel (%p214) target = $region36
      $region35: #{tpu_custom_call.1} parent=5 // pred_region
        %s218 = ssub.s32 %s17, 1
        %s219 = sand.u32 %s42, 1
        %s220 = scalar_lea.sflag [#allocation6], %s219
        %s221 = sand.u32 %s42, 1
        %s222 = smul.addr %s221, 8
        %s223 = scalar_lea.vmem [#allocation5], %s222
        // Predicated region
        $region37: #{tpu_custom_call.1} parent=35 // pred_check
          %p224 = pneg %p55
        $region38: #{tpu_custom_call.1} parent=35 // pred_check_branch
          %226 = sbr.rel (%p224) target = $region40
        $region39: #{tpu_custom_call.1} parent=35 // pred_region
          %227 = dma.done %s220, 128
        $region40: #{tpu_custom_call.1} parent=35 // pred_fallthru
          _
        // Predicated region
        $region41: #{tpu_custom_call.1} parent=35 // pred_check
          %p228 = pneg %p76
        $region42: #{tpu_custom_call.1} parent=35 // pred_check_branch
          %230 = sbr.rel (%p228) target = $region44
        $region43: #{tpu_custom_call.1} parent=35 // pred_region
          %231 = dma.done [#allocation9], 2048
        $region44: #{tpu_custom_call.1} parent=35 // pred_fallthru
          _
        // Predicated region
        $region45: #{tpu_custom_call.1} parent=35 // pred_check
          %p232 = pneg %p97
        $region46: #{tpu_custom_call.1} parent=35 // pred_check_branch
          %234 = sbr.rel (%p232) target = $region48
        $region47: #{tpu_custom_call.1} parent=35 // pred_region
          %235 = dma.done [#allocation9], 1024
        $region48: #{tpu_custom_call.1} parent=35 // pred_fallthru
          _
        %s236 = sand.u32 %s42, 1
        %s237 = scalar_lea.sflag [#allocation6], %s236
        %s238 = sand.u32 %s42, 1
        %s239 = smul.addr %s238, 8
        %s240 = scalar_lea.vmem [#allocation5], %s239
        %p241 = pneg %p55
        %p242 = pneg %p52
        %p243 = pneg %p76
        %p244 = pneg %p73
        %p245 = pneg %p97
        %p246 = pneg %p94
        %p247 = pneg %p118
        %p248 = pneg %p115
        %p249 = pneg %p146
        %p250 = pneg %p143
        %s251 = sand.u32 %s133, 1
        %s252 = scalar_lea.sflag [#allocation7], %s251
        %s253 = sand.u32 %s133, 1
        %s254 = smul.addr %s253, 8
        %s255 = scalar_lea.vmem [#allocation11], %s254
        %p256 = scmp.eq.s32.totalorder %s27, 0
        // Predicated region
        $region49: #{tpu_custom_call.1} parent=35 // pred_check
          %p257 = pneg %p256
        $region50: #{tpu_custom_call.1} parent=35 // pred_check_branch
          %259 = sbr.rel (%p257) target = $region52
        $region51: #{tpu_custom_call.1} parent=35 // pred_region
          %v260 = vld [vmem:[%s223] sm:$0xff]
          %v261 = vld [vmem:[#allocation8] sm:$0xff]
          %v262 = vld [vmem:[#allocation8 + $0x8] sm:$0xff]
          %v263 = vld [vmem:[#allocation8 + $0x10] sm:$0xff]
          %v264 = vld [vmem:[#allocation8 + $0x18] sm:$0xff]
          %v265 = vld [vmem:[#allocation8 + $0x20] sm:$0xff]
          %v266 = vld [vmem:[#allocation8 + $0x28] sm:$0xff]
          %v267 = vld [vmem:[#allocation8 + $0x30] sm:$0xff]
          %v268 = vld [vmem:[#allocation8 + $0x38] sm:$0xff]
          %v269 = vld [vmem:[#allocation8 + $0x40] sm:$0xff]
          %v270 = vld [vmem:[#allocation8 + $0x48] sm:$0xff]
          %v271 = vld [vmem:[#allocation8 + $0x50] sm:$0xff]
          %v272 = vld [vmem:[#allocation8 + $0x58] sm:$0xff]
          %v273 = vld [vmem:[#allocation8 + $0x60] sm:$0xff]
          %v274 = vld [vmem:[#allocation8 + $0x68] sm:$0xff]
          %v275 = vld [vmem:[#allocation8 + $0x70] sm:$0xff]
          %v276 = vld [vmem:[#allocation8 + $0x78] sm:$0xff]
          %vm277 = vcmask 261120
          %v279 = vsel %vm277, %v260, 0
          %281 = vmatprep.subr.mxu0 0.0
          %282 = vmatpush1.msra.mxu0 0.0
          %283 = vmatprep.subr.mxu0 0.0
          %284 = vmatpush1.msra.mxu0 0.0
          %285 = vmatprep.subr.mxu0 0.0
          %286 = vmatpush1.msra.mxu0 0.0
          %287 = vmatprep.subr.mxu0 0.0
          %288 = vmatpush1.msra.mxu0 0.0
          %289 = vmatprep.subr.mxu0 0.0
          %290 = vmatpush1.msra.mxu0 0.0
          %291 = vmatprep.subr.mxu0 0.0
          %292 = vmatpush1.msra.mxu0 0.0
          %293 = vmatprep.subr.mxu0 0.0
          %294 = vmatpush1.msra.mxu0 0.0
          %295 = vmatprep.subr.mxu0 0.0
          %296 = vmatpush1.msra.mxu0 0.0
          %297 = vmatprep.subr.mxu0 0.0
          %298 = vmatpush1.msra.mxu0 0.0
          %299 = vmatprep.subr.mxu0 0.0
          %300 = vmatpush1.msra.mxu0 0.0
          %301 = vmatprep.subr.mxu0 0.0
          %302 = vmatpush1.msra.mxu0 0.0
          %303 = vmatprep.subr.mxu0 0.0
          %304 = vmatpush1.msra.mxu0 0.0
          %305 = vmatprep.subr.mxu0 0.0
          %306 = vmatpush1.msra.mxu0 %v264
          %307 = vmatprep.subr.mxu0 0.0
          %308 = vmatpush1.msra.mxu0 %v263
          %309 = vmatprep.subr.mxu0 0.0
          %310 = vmatpush1.msra.mxu0 %v262
          %311 = vmatprep.subr.mxu0 0.0
          %312 = vmatpush1.msra.mxu0 %v261
          %313 = vmatprep.subr.mxu0 0.0
          %314 = vmatpush2.msra.mxu0 0.0
          %315 = vmatprep.subr.mxu0 0.0
          %316 = vmatpush2.msra.mxu0 0.0
          %317 = vmatprep.subr.mxu0 0.0
          %318 = vmatpush2.msra.mxu0 0.0
          %319 = vmatprep.subr.mxu0 0.0
          %320 = vmatpush2.msra.mxu0 0.0
          %321 = vmatprep.subr.mxu0 0.0
          %322 = vmatpush2.msra.mxu0 0.0
          %323 = vmatprep.subr.mxu0 0.0
          %324 = vmatpush2.msra.mxu0 0.0
          %325 = vmatprep.subr.mxu0 0.0
          %326 = vmatpush2.msra.mxu0 0.0
          %327 = vmatprep.subr.mxu0 0.0
          %328 = vmatpush2.msra.mxu0 0.0
          %329 = vmatprep.subr.mxu0 0.0
          %330 = vmatpush2.msra.mxu0 0.0
          %331 = vmatprep.subr.mxu0 0.0
          %332 = vmatpush2.msra.mxu0 0.0
          %333 = vmatprep.subr.mxu0 0.0
          %334 = vmatpush2.msra.mxu0 0.0
          %335 = vmatprep.subr.mxu0 0.0
          %336 = vmatpush2.msra.mxu0 0.0
          %337 = vmatprep.subr.mxu0 0.0
          %338 = vmatpush2.msra.mxu0 0.0
          %339 = vmatprep.subr.mxu0 0.0
          %340 = vmatpush2.msra.mxu0 0.0
          %341 = vmatprep.subr.mxu0 0.0
          %342 = vmatpush2.msra.mxu0 0.0
          %343 = vmatprep.subr.mxu0 0.0
          %344 = vmatpush2.msra.mxu0 0.0
          %345 = vmatprep.mubr.f32.mxu0 0.0
          %346 = vmatmul.mubr.f32.gmra.mxu0 %v279
          %v347 = vpop.f32.mrf.mxu0
          %v348 = vadd.f32 0.0, %v347
          %v349 = vpop.f32.mrf.mxu0
          %350 = vdwg.mxu0
          %351 = vmatprep.subr.mxu0 0.0
          %352 = vmatpush1.msra.mxu0 0.0
          %353 = vmatprep.subr.mxu0 0.0
          %354 = vmatpush1.msra.mxu0 0.0
          %355 = vmatprep.subr.mxu0 0.0
          %356 = vmatpush1.msra.mxu0 0.0
          %357 = vmatprep.subr.mxu0 0.0
          %358 = vmatpush1.msra.mxu0 0.0
          %359 = vmatprep.subr.mxu0 0.0
          %360 = vmatpush1.msra.mxu0 0.0
          %361 = vmatprep.subr.mxu0 0.0
          %362 = vmatpush1.msra.mxu0 0.0
          %363 = vmatprep.subr.mxu0 0.0
          %364 = vmatpush1.msra.mxu0 0.0
          %365 = vmatprep.subr.mxu0 0.0
          %366 = vmatpush1.msra.mxu0 0.0
          %367 = vmatprep.subr.mxu0 0.0
          %368 = vmatpush1.msra.mxu0 0.0
          %369 = vmatprep.subr.mxu0 0.0
          %370 = vmatpush1.msra.mxu0 0.0
          %371 = vmatprep.subr.mxu0 0.0
          %372 = vmatpush1.msra.mxu0 0.0
          %373 = vmatprep.subr.mxu0 0.0
          %374 = vmatpush1.msra.mxu0 0.0
          %375 = vmatprep.subr.mxu0 0.0
          %376 = vmatpush1.msra.mxu0 %v268
          %377 = vmatprep.subr.mxu0 0.0
          %378 = vmatpush1.msra.mxu0 %v267
          %379 = vmatprep.subr.mxu0 0.0
          %380 = vmatpush1.msra.mxu0 %v266
          %381 = vmatprep.subr.mxu0 0.0
          %382 = vmatpush1.msra.mxu0 %v265
          %383 = vmatprep.subr.mxu0 0.0
          %384 = vmatpush2.msra.mxu0 0.0
          %385 = vmatprep.subr.mxu0 0.0
          %386 = vmatpush2.msra.mxu0 0.0
          %387 = vmatprep.subr.mxu0 0.0
          %388 = vmatpush2.msra.mxu0 0.0
          %389 = vmatprep.subr.mxu0 0.0
          %390 = vmatpush2.msra.mxu0 0.0
          %391 = vmatprep.subr.mxu0 0.0
          %392 = vmatpush2.msra.mxu0 0.0
          %393 = vmatprep.subr.mxu0 0.0
          %394 = vmatpush2.msra.mxu0 0.0
          %395 = vmatprep.subr.mxu0 0.0
          %396 = vmatpush2.msra.mxu0 0.0
          %397 = vmatprep.subr.mxu0 0.0
          %398 = vmatpush2.msra.mxu0 0.0
          %399 = vmatprep.subr.mxu0 0.0
          %400 = vmatpush2.msra.mxu0 0.0
          %401 = vmatprep.subr.mxu0 0.0
          %402 = vmatpush2.msra.mxu0 0.0
          %403 = vmatprep.subr.mxu0 0.0
          %404 = vmatpush2.msra.mxu0 0.0
          %405 = vmatprep.subr.mxu0 0.0
          %406 = vmatpush2.msra.mxu0 0.0
          %407 = vmatprep.subr.mxu0 0.0
          %408 = vmatpush2.msra.mxu0 0.0
          %409 = vmatprep.subr.mxu0 0.0
          %410 = vmatpush2.msra.mxu0 0.0
          %411 = vmatprep.subr.mxu0 0.0
          %412 = vmatpush2.msra.mxu0 0.0
          %413 = vmatprep.subr.mxu0 0.0
          %414 = vmatpush2.msra.mxu0 0.0
          %415 = vmatprep.mubr.f32.mxu0 0.0
          %416 = vmatmul.mubr.f32.gmra.mxu0 %v279
          %v417 = vpop.f32.mrf.mxu0
          %v418 = vadd.f32 0.0, %v417
          %v419 = vpop.f32.mrf.mxu0
          %420 = vdwg.mxu0
          %421 = vmatprep.subr.mxu0 0.0
          %422 = vmatpush1.msra.mxu0 0.0
          %423 = vmatprep.subr.mxu0 0.0
          %424 = vmatpush1.msra.mxu0 0.0
          %425 = vmatprep.subr.mxu0 0.0
          %426 = vmatpush1.msra.mxu0 0.0
          %427 = vmatprep.subr.mxu0 0.0
          %428 = vmatpush1.msra.mxu0 0.0
          %429 = vmatprep.subr.mxu0 0.0
          %430 = vmatpush1.msra.mxu0 0.0
          %431 = vmatprep.subr.mxu0 0.0
          %432 = vmatpush1.msra.mxu0 0.0
          %433 = vmatprep.subr.mxu0 0.0
          %434 = vmatpush1.msra.mxu0 0.0
          %435 = vmatprep.subr.mxu0 0.0
          %436 = vmatpush1.msra.mxu0 0.0
          %437 = vmatprep.subr.mxu0 0.0
          %438 = vmatpush1.msra.mxu0 0.0
          %439 = vmatprep.subr.mxu0 0.0
          %440 = vmatpush1.msra.mxu0 0.0
          %441 = vmatprep.subr.mxu0 0.0
          %442 = vmatpush1.msra.mxu0 0.0
          %443 = vmatprep.subr.mxu0 0.0
          %444 = vmatpush1.msra.mxu0 0.0
          %445 = vmatprep.subr.mxu0 0.0
          %446 = vmatpush1.msra.mxu0 %v272
          %447 = vmatprep.subr.mxu0 0.0
          %448 = vmatpush1.msra.mxu0 %v271
          %449 = vmatprep.subr.mxu0 0.0
          %450 = vmatpush1.msra.mxu0 %v270
          %451 = vmatprep.subr.mxu0 0.0
          %452 = vmatpush1.msra.mxu0 %v269
          %453 = vmatprep.subr.mxu0 0.0
          %454 = vmatpush2.msra.mxu0 0.0
          %455 = vmatprep.subr.mxu0 0.0
          %456 = vmatpush2.msra.mxu0 0.0
          %457 = vmatprep.subr.mxu0 0.0
          %458 = vmatpush2.msra.mxu0 0.0
          %459 = vmatprep.subr.mxu0 0.0
          %460 = vmatpush2.msra.mxu0 0.0
          %461 = vmatprep.subr.mxu0 0.0
          %462 = vmatpush2.msra.mxu0 0.0
          %463 = vmatprep.subr.mxu0 0.0
          %464 = vmatpush2.msra.mxu0 0.0
          %465 = vmatprep.subr.mxu0 0.0
          %466 = vmatpush2.msra.mxu0 0.0
          %467 = vmatprep.subr.mxu0 0.0
          %468 = vmatpush2.msra.mxu0 0.0
          %469 = vmatprep.subr.mxu0 0.0
          %470 = vmatpush2.msra.mxu0 0.0
          %471 = vmatprep.subr.mxu0 0.0
          %472 = vmatpush2.msra.mxu0 0.0
          %473 = vmatprep.subr.mxu0 0.0
          %474 = vmatpush2.msra.mxu0 0.0
          %475 = vmatprep.subr.mxu0 0.0
          %476 = vmatpush2.msra.mxu0 0.0
          %477 = vmatprep.subr.mxu0 0.0
          %478 = vmatpush2.msra.mxu0 0.0
          %479 = vmatprep.subr.mxu0 0.0
          %480 = vmatpush2.msra.mxu0 0.0
          %481 = vmatprep.subr.mxu0 0.0
          %482 = vmatpush2.msra.mxu0 0.0
          %483 = vmatprep.subr.mxu0 0.0
          %484 = vmatpush2.msra.mxu0 0.0
          %485 = vmatprep.mubr.f32.mxu0 0.0
          %486 = vmatmul.mubr.f32.gmra.mxu0 %v279
          %v487 = vpop.f32.mrf.mxu0
          %v488 = vadd.f32 0.0, %v487
          %v489 = vpop.f32.mrf.mxu0
          %490 = vdwg.mxu0
          %491 = vmatprep.subr.mxu0 0.0
          %492 = vmatpush1.msra.mxu0 0.0
          %493 = vmatprep.subr.mxu0 0.0
          %494 = vmatpush1.msra.mxu0 0.0
          %495 = vmatprep.subr.mxu0 0.0
          %496 = vmatpush1.msra.mxu0 0.0
          %497 = vmatprep.subr.mxu0 0.0
          %498 = vmatpush1.msra.mxu0 0.0
          %499 = vmatprep.subr.mxu0 0.0
          %500 = vmatpush1.msra.mxu0 0.0
          %501 = vmatprep.subr.mxu0 0.0
          %502 = vmatpush1.msra.mxu0 0.0
          %503 = vmatprep.subr.mxu0 0.0
          %504 = vmatpush1.msra.mxu0 0.0
          %505 = vmatprep.subr.mxu0 0.0
          %506 = vmatpush1.msra.mxu0 0.0
          %507 = vmatprep.subr.mxu0 0.0
          %508 = vmatpush1.msra.mxu0 0.0
          %509 = vmatprep.subr.mxu0 0.0
          %510 = vmatpush1.msra.mxu0 0.0
          %511 = vmatprep.subr.mxu0 0.0
          %512 = vmatpush1.msra.mxu0 0.0
          %513 = vmatprep.subr.mxu0 0.0
          %514 = vmatpush1.msra.mxu0 0.0
          %515 = vmatprep.subr.mxu0 0.0
          %516 = vmatpush1.msra.mxu0 %v276
          %517 = vmatprep.subr.mxu0 0.0
          %518 = vmatpush1.msra.mxu0 %v275
          %519 = vmatprep.subr.mxu0 0.0
          %520 = vmatpush1.msra.mxu0 %v274
          %521 = vmatprep.subr.mxu0 0.0
          %522 = vmatpush1.msra.mxu0 %v273
          %523 = vmatprep.subr.mxu0 0.0
          %524 = vmatpush2.msra.mxu0 0.0
          %525 = vmatprep.subr.mxu0 0.0
          %526 = vmatpush2.msra.mxu0 0.0
          %527 = vmatprep.subr.mxu0 0.0
          %528 = vmatpush2.msra.mxu0 0.0
          %529 = vmatprep.subr.mxu0 0.0
          %530 = vmatpush2.msra.mxu0 0.0
          %531 = vmatprep.subr.mxu0 0.0
          %532 = vmatpush2.msra.mxu0 0.0
          %533 = vmatprep.subr.mxu0 0.0
          %534 = vmatpush2.msra.mxu0 0.0
          %535 = vmatprep.subr.mxu0 0.0
          %536 = vmatpush2.msra.mxu0 0.0
          %537 = vmatprep.subr.mxu0 0.0
          %538 = vmatpush2.msra.mxu0 0.0
          %539 = vmatprep.subr.mxu0 0.0
          %540 = vmatpush2.msra.mxu0 0.0
          %541 = vmatprep.subr.mxu0 0.0
          %542 = vmatpush2.msra.mxu0 0.0
          %543 = vmatprep.subr.mxu0 0.0
          %544 = vmatpush2.msra.mxu0 0.0
          %545 = vmatprep.subr.mxu0 0.0
          %546 = vmatpush2.msra.mxu0 0.0
          %547 = vmatprep.subr.mxu0 0.0
          %548 = vmatpush2.msra.mxu0 0.0
          %549 = vmatprep.subr.mxu0 0.0
          %550 = vmatpush2.msra.mxu0 0.0
          %551 = vmatprep.subr.mxu0 0.0
          %552 = vmatpush2.msra.mxu0 0.0
          %553 = vmatprep.subr.mxu0 0.0
          %554 = vmatpush2.msra.mxu0 0.0
          %555 = vmatprep.mubr.f32.mxu0 0.0
          %556 = vmatmul.mubr.f32.gmra.mxu0 %v279
          %v557 = vpop.f32.mrf.mxu0
          %v558 = vadd.f32 0.0, %v557
          %v559 = vpop.f32.mrf.mxu0
          %560 = vdwg.mxu0
          %vm561 = vcmask 130048
          %562 = vst.msk [vmem:[#allocation2] sm:$0xff] %vm561, %v348
          %563 = vst.msk [vmem:[#allocation2 + $0x8] sm:$0xff] %vm561, %v418
          %564 = vst.msk [vmem:[#allocation2 + $0x10] sm:$0xff] %vm561, %v488
          %565 = vst.msk [vmem:[#allocation2 + $0x18] sm:$0xff] %vm561, %v558
          %570 = vrot.lane.b32.xlu0 %v348, 112
          %v571 = vpop.permute.xlu0 %570
          %572 = vrot.lane.b32.xlu0 %v418, 112
          %v573 = vpop.permute.xlu0 %572
          %574 = vrot.lane.b32.xlu0 %v488, 112
          %v575 = vpop.permute.xlu0 %574
          %576 = vrot.lane.b32.xlu0 %v558, 112
          %v577 = vpop.permute.xlu0 %576
          %582 = vst.msk [vmem:[#allocation3] sm:$0xff] %vm561, %v571
          %583 = vst.msk [vmem:[#allocation3 + $0x8] sm:$0xff] %vm561, %v573
          %584 = vst.msk [vmem:[#allocation3 + $0x10] sm:$0xff] %vm561, %v575
          %585 = vst.msk [vmem:[#allocation3 + $0x18] sm:$0xff] %vm561, %v577
          %586 = vrot.lane.b32.xlu0 %v348, 96
          %v587 = vpop.permute.xlu0 %586
          %588 = vrot.lane.b32.xlu0 %v418, 96
          %v589 = vpop.permute.xlu0 %588
          %590 = vrot.lane.b32.xlu0 %v488, 96
          %v591 = vpop.permute.xlu0 %590
          %592 = vrot.lane.b32.xlu0 %v558, 96
          %v593 = vpop.permute.xlu0 %592
          %598 = vst.msk [vmem:[#allocation4] sm:$0xff] %vm561, %v587
          %599 = vst.msk [vmem:[#allocation4 + $0x8] sm:$0xff] %vm561, %v589
          %600 = vst.msk [vmem:[#allocation4 + $0x10] sm:$0xff] %vm561, %v591
          %601 = vst.msk [vmem:[#allocation4 + $0x18] sm:$0xff] %vm561, %v593
        $region52: #{tpu_custom_call.1} parent=35 // pred_fallthru
          _
        %s602 = smul.u32 %s27, 8
        %s603 = scalar_lea.vmem [#allocation2], %s602
        %v604 = vld [vmem:[%s603] sm:$0xff]
        %v605 = vld [vmem:[%s603 + $0x8] sm:$0xff]
        %v606 = vld [vmem:[%s603 + $0x10] sm:$0xff]
        %v607 = vld [vmem:[%s603 + $0x18] sm:$0xff]
        %v608 = vld [vmem:[#allocation3] sm:$0xff]
        %v609 = vld [vmem:[#allocation3 + $0x8] sm:$0xff]
        %v610 = vld [vmem:[#allocation3 + $0x10] sm:$0xff]
        %v611 = vld [vmem:[#allocation3 + $0x18] sm:$0xff]
        %v612 = vld [vmem:[#allocation4] sm:$0xff]
        %v613 = vld [vmem:[#allocation4 + $0x8] sm:$0xff]
        %v614 = vld [vmem:[#allocation4 + $0x10] sm:$0xff]
        %v615 = vld [vmem:[#allocation4 + $0x18] sm:$0xff]
        %vm616 = vcmask 130048
        %v618 = vsel %vm616, %v604, 0
        %v621 = vsel %vm616, %v608, 0
        %623 = vmatprep.subr.mxu0 0.0
        %624 = vmatpush1.xpose.msra.mxu0 0.0
        %625 = vmatprep.subr.mxu0 0.0
        %626 = vmatpush1.xpose.msra.mxu0 0.0
        %627 = vmatprep.subr.mxu0 0.0
        %628 = vmatpush1.xpose.msra.mxu0 0.0
        %629 = vmatprep.subr.mxu0 0.0
        %630 = vmatpush1.xpose.msra.mxu0 0.0
        %631 = vmatprep.subr.mxu0 0.0
        %632 = vmatpush1.xpose.msra.mxu0 0.0
        %633 = vmatprep.subr.mxu0 0.0
        %634 = vmatpush1.xpose.msra.mxu0 0.0
        %635 = vmatprep.subr.mxu0 0.0
        %636 = vmatpush1.xpose.msra.mxu0 0.0
        %637 = vmatprep.subr.mxu0 0.0
        %638 = vmatpush1.xpose.msra.mxu0 0.0
        %639 = vmatprep.subr.mxu0 0.0
        %640 = vmatpush1.xpose.msra.mxu0 0.0
        %641 = vmatprep.subr.mxu0 0.0
        %642 = vmatpush1.xpose.msra.mxu0 0.0
        %643 = vmatprep.subr.mxu0 0.0
        %644 = vmatpush1.xpose.msra.mxu0 0.0
        %645 = vmatprep.subr.mxu0 0.0
        %646 = vmatpush1.xpose.msra.mxu0 0.0
        %647 = vmatprep.subr.mxu0 0.0
        %648 = vmatpush1.xpose.msra.mxu0 0.0
        %649 = vmatprep.subr.mxu0 0.0
        %650 = vmatpush1.xpose.msra.mxu0 0.0
        %651 = vmatprep.subr.mxu0 0.0
        %652 = vmatpush1.xpose.msra.mxu0 0.0
        %653 = vmatprep.subr.mxu0 0.0
        %654 = vmatpush1.xpose.msra.mxu0 %v621
        %655 = vmatprep.subr.mxu0 0.0
        %656 = vmatpush2.xpose.msra.mxu0 0.0
        %657 = vmatprep.subr.mxu0 0.0
        %658 = vmatpush2.xpose.msra.mxu0 0.0
        %659 = vmatprep.subr.mxu0 0.0
        %660 = vmatpush2.xpose.msra.mxu0 0.0
        %661 = vmatprep.subr.mxu0 0.0
        %662 = vmatpush2.xpose.msra.mxu0 0.0
        %663 = vmatprep.subr.mxu0 0.0
        %664 = vmatpush2.xpose.msra.mxu0 0.0
        %665 = vmatprep.subr.mxu0 0.0
        %666 = vmatpush2.xpose.msra.mxu0 0.0
        %667 = vmatprep.subr.mxu0 0.0
        %668 = vmatpush2.xpose.msra.mxu0 0.0
        %669 = vmatprep.subr.mxu0 0.0
        %670 = vmatpush2.xpose.msra.mxu0 0.0
        %671 = vmatprep.subr.mxu0 0.0
        %672 = vmatpush2.xpose.msra.mxu0 0.0
        %673 = vmatprep.subr.mxu0 0.0
        %674 = vmatpush2.xpose.msra.mxu0 0.0
        %675 = vmatprep.subr.mxu0 0.0
        %676 = vmatpush2.xpose.msra.mxu0 0.0
        %677 = vmatprep.subr.mxu0 0.0
        %678 = vmatpush2.xpose.msra.mxu0 0.0
        %679 = vmatprep.subr.mxu0 0.0
        %680 = vmatpush2.xpose.msra.mxu0 0.0
        %681 = vmatprep.subr.mxu0 0.0
        %682 = vmatpush2.xpose.msra.mxu0 0.0
        %683 = vmatprep.subr.mxu0 0.0
        %684 = vmatpush2.xpose.msra.mxu0 0.0
        %685 = vmatprep.subr.mxu0 0.0
        %686 = vmatpush2.xpose.msra.mxu0 0.0
        %687 = vmatprep.mubr.f32.mxu0 0.0
        %688 = vmatmul.mubr.f32.gmra.mxu0 %v618
        %v689 = vpop.f32.mrf.mxu0
        %v690 = vadd.f32 0.0, %v689
        %v691 = vpop.f32.mrf.mxu0
        %692 = vdwg.mxu0
        %v694 = vsel %vm616, %v605, 0
        %v697 = vsel %vm616, %v609, 0
        %699 = vmatprep.subr.mxu0 0.0
        %700 = vmatpush1.xpose.msra.mxu0 0.0
        %701 = vmatprep.subr.mxu0 0.0
        %702 = vmatpush1.xpose.msra.mxu0 0.0
        %703 = vmatprep.subr.mxu0 0.0
        %704 = vmatpush1.xpose.msra.mxu0 0.0
        %705 = vmatprep.subr.mxu0 0.0
        %706 = vmatpush1.xpose.msra.mxu0 0.0
        %707 = vmatprep.subr.mxu0 0.0
        %708 = vmatpush1.xpose.msra.mxu0 0.0
        %709 = vmatprep.subr.mxu0 0.0
        %710 = vmatpush1.xpose.msra.mxu0 0.0
        %711 = vmatprep.subr.mxu0 0.0
        %712 = vmatpush1.xpose.msra.mxu0 0.0
        %713 = vmatprep.subr.mxu0 0.0
        %714 = vmatpush1.xpose.msra.mxu0 0.0
        %715 = vmatprep.subr.mxu0 0.0
        %716 = vmatpush1.xpose.msra.mxu0 0.0
        %717 = vmatprep.subr.mxu0 0.0
        %718 = vmatpush1.xpose.msra.mxu0 0.0
        %719 = vmatprep.subr.mxu0 0.0
        %720 = vmatpush1.xpose.msra.mxu0 0.0
        %721 = vmatprep.subr.mxu0 0.0
        %722 = vmatpush1.xpose.msra.mxu0 0.0
        %723 = vmatprep.subr.mxu0 0.0
        %724 = vmatpush1.xpose.msra.mxu0 0.0
        %725 = vmatprep.subr.mxu0 0.0
        %726 = vmatpush1.xpose.msra.mxu0 0.0
        %727 = vmatprep.subr.mxu0 0.0
        %728 = vmatpush1.xpose.msra.mxu0 0.0
        %729 = vmatprep.subr.mxu0 0.0
        %730 = vmatpush1.xpose.msra.mxu0 %v697
        %731 = vmatprep.subr.mxu0 0.0
        %732 = vmatpush2.xpose.msra.mxu0 0.0
        %733 = vmatprep.subr.mxu0 0.0
        %734 = vmatpush2.xpose.msra.mxu0 0.0
        %735 = vmatprep.subr.mxu0 0.0
        %736 = vmatpush2.xpose.msra.mxu0 0.0
        %737 = vmatprep.subr.mxu0 0.0
        %738 = vmatpush2.xpose.msra.mxu0 0.0
        %739 = vmatprep.subr.mxu0 0.0
        %740 = vmatpush2.xpose.msra.mxu0 0.0
        %741 = vmatprep.subr.mxu0 0.0
        %742 = vmatpush2.xpose.msra.mxu0 0.0
        %743 = vmatprep.subr.mxu0 0.0
        %744 = vmatpush2.xpose.msra.mxu0 0.0
        %745 = vmatprep.subr.mxu0 0.0
        %746 = vmatpush2.xpose.msra.mxu0 0.0
        %747 = vmatprep.subr.mxu0 0.0
        %748 = vmatpush2.xpose.msra.mxu0 0.0
        %749 = vmatprep.subr.mxu0 0.0
        %750 = vmatpush2.xpose.msra.mxu0 0.0
        %751 = vmatprep.subr.mxu0 0.0
        %752 = vmatpush2.xpose.msra.mxu0 0.0
        %753 = vmatprep.subr.mxu0 0.0
        %754 = vmatpush2.xpose.msra.mxu0 0.0
        %755 = vmatprep.subr.mxu0 0.0
        %756 = vmatpush2.xpose.msra.mxu0 0.0
        %757 = vmatprep.subr.mxu0 0.0
        %758 = vmatpush2.xpose.msra.mxu0 0.0
        %759 = vmatprep.subr.mxu0 0.0
        %760 = vmatpush2.xpose.msra.mxu0 0.0
        %761 = vmatprep.subr.mxu0 0.0
        %762 = vmatpush2.xpose.msra.mxu0 0.0
        %763 = vmatprep.mubr.f32.mxu0 0.0
        %764 = vmatmul.mubr.f32.gmra.mxu0 %v694
        %v765 = vpop.f32.mrf.mxu0
        %v766 = vadd.f32 0.0, %v765
        %v767 = vpop.f32.mrf.mxu0
        %768 = vdwg.mxu0
        %v770 = vsel %vm616, %v606, 0
        %v773 = vsel %vm616, %v610, 0
        %775 = vmatprep.subr.mxu0 0.0
        %776 = vmatpush1.xpose.msra.mxu0 0.0
        %777 = vmatprep.subr.mxu0 0.0
        %778 = vmatpush1.xpose.msra.mxu0 0.0
        %779 = vmatprep.subr.mxu0 0.0
        %780 = vmatpush1.xpose.msra.mxu0 0.0
        %781 = vmatprep.subr.mxu0 0.0
        %782 = vmatpush1.xpose.msra.mxu0 0.0
        %783 = vmatprep.subr.mxu0 0.0
        %784 = vmatpush1.xpose.msra.mxu0 0.0
        %785 = vmatprep.subr.mxu0 0.0
        %786 = vmatpush1.xpose.msra.mxu0 0.0
        %787 = vmatprep.subr.mxu0 0.0
        %788 = vmatpush1.xpose.msra.mxu0 0.0
        %789 = vmatprep.subr.mxu0 0.0
        %790 = vmatpush1.xpose.msra.mxu0 0.0
        %791 = vmatprep.subr.mxu0 0.0
        %792 = vmatpush1.xpose.msra.mxu0 0.0
        %793 = vmatprep.subr.mxu0 0.0
        %794 = vmatpush1.xpose.msra.mxu0 0.0
        %795 = vmatprep.subr.mxu0 0.0
        %796 = vmatpush1.xpose.msra.mxu0 0.0
        %797 = vmatprep.subr.mxu0 0.0
        %798 = vmatpush1.xpose.msra.mxu0 0.0
        %799 = vmatprep.subr.mxu0 0.0
        %800 = vmatpush1.xpose.msra.mxu0 0.0
        %801 = vmatprep.subr.mxu0 0.0
        %802 = vmatpush1.xpose.msra.mxu0 0.0
        %803 = vmatprep.subr.mxu0 0.0
        %804 = vmatpush1.xpose.msra.mxu0 0.0
        %805 = vmatprep.subr.mxu0 0.0
        %806 = vmatpush1.xpose.msra.mxu0 %v773
        %807 = vmatprep.subr.mxu0 0.0
        %808 = vmatpush2.xpose.msra.mxu0 0.0
        %809 = vmatprep.subr.mxu0 0.0
        %810 = vmatpush2.xpose.msra.mxu0 0.0
        %811 = vmatprep.subr.mxu0 0.0
        %812 = vmatpush2.xpose.msra.mxu0 0.0
        %813 = vmatprep.subr.mxu0 0.0
        %814 = vmatpush2.xpose.msra.mxu0 0.0
        %815 = vmatprep.subr.mxu0 0.0
        %816 = vmatpush2.xpose.msra.mxu0 0.0
        %817 = vmatprep.subr.mxu0 0.0
        %818 = vmatpush2.xpose.msra.mxu0 0.0
        %819 = vmatprep.subr.mxu0 0.0
        %820 = vmatpush2.xpose.msra.mxu0 0.0
        %821 = vmatprep.subr.mxu0 0.0
        %822 = vmatpush2.xpose.msra.mxu0 0.0
        %823 = vmatprep.subr.mxu0 0.0
        %824 = vmatpush2.xpose.msra.mxu0 0.0
        %825 = vmatprep.subr.mxu0 0.0
        %826 = vmatpush2.xpose.msra.mxu0 0.0
        %827 = vmatprep.subr.mxu0 0.0
        %828 = vmatpush2.xpose.msra.mxu0 0.0
        %829 = vmatprep.subr.mxu0 0.0
        %830 = vmatpush2.xpose.msra.mxu0 0.0
        %831 = vmatprep.subr.mxu0 0.0
        %832 = vmatpush2.xpose.msra.mxu0 0.0
        %833 = vmatprep.subr.mxu0 0.0
        %834 = vmatpush2.xpose.msra.mxu0 0.0
        %835 = vmatprep.subr.mxu0 0.0
        %836 = vmatpush2.xpose.msra.mxu0 0.0
        %837 = vmatprep.subr.mxu0 0.0
        %838 = vmatpush2.xpose.msra.mxu0 0.0
        %839 = vmatprep.mubr.f32.mxu0 0.0
        %840 = vmatmul.mubr.f32.gmra.mxu0 %v770
        %v841 = vpop.f32.mrf.mxu0
        %v842 = vadd.f32 0.0, %v841
        %v843 = vpop.f32.mrf.mxu0
        %844 = vdwg.mxu0
        %v846 = vsel %vm616, %v607, 0
        %v849 = vsel %vm616, %v611, 0
        %851 = vmatprep.subr.mxu0 0.0
        %852 = vmatpush1.xpose.msra.mxu0 0.0
        %853 = vmatprep.subr.mxu0 0.0
        %854 = vmatpush1.xpose.msra.mxu0 0.0
        %855 = vmatprep.subr.mxu0 0.0
        %856 = vmatpush1.xpose.msra.mxu0 0.0
        %857 = vmatprep.subr.mxu0 0.0
        %858 = vmatpush1.xpose.msra.mxu0 0.0
        %859 = vmatprep.subr.mxu0 0.0
        %860 = vmatpush1.xpose.msra.mxu0 0.0
        %861 = vmatprep.subr.mxu0 0.0
        %862 = vmatpush1.xpose.msra.mxu0 0.0
        %863 = vmatprep.subr.mxu0 0.0
        %864 = vmatpush1.xpose.msra.mxu0 0.0
        %865 = vmatprep.subr.mxu0 0.0
        %866 = vmatpush1.xpose.msra.mxu0 0.0
        %867 = vmatprep.subr.mxu0 0.0
        %868 = vmatpush1.xpose.msra.mxu0 0.0
        %869 = vmatprep.subr.mxu0 0.0
        %870 = vmatpush1.xpose.msra.mxu0 0.0
        %871 = vmatprep.subr.mxu0 0.0
        %872 = vmatpush1.xpose.msra.mxu0 0.0
        %873 = vmatprep.subr.mxu0 0.0
        %874 = vmatpush1.xpose.msra.mxu0 0.0
        %875 = vmatprep.subr.mxu0 0.0
        %876 = vmatpush1.xpose.msra.mxu0 0.0
        %877 = vmatprep.subr.mxu0 0.0
        %878 = vmatpush1.xpose.msra.mxu0 0.0
        %879 = vmatprep.subr.mxu0 0.0
        %880 = vmatpush1.xpose.msra.mxu0 0.0
        %881 = vmatprep.subr.mxu0 0.0
        %882 = vmatpush1.xpose.msra.mxu0 %v849
        %883 = vmatprep.subr.mxu0 0.0
        %884 = vmatpush2.xpose.msra.mxu0 0.0
        %885 = vmatprep.subr.mxu0 0.0
        %886 = vmatpush2.xpose.msra.mxu0 0.0
        %887 = vmatprep.subr.mxu0 0.0
        %888 = vmatpush2.xpose.msra.mxu0 0.0
        %889 = vmatprep.subr.mxu0 0.0
        %890 = vmatpush2.xpose.msra.mxu0 0.0
        %891 = vmatprep.subr.mxu0 0.0
        %892 = vmatpush2.xpose.msra.mxu0 0.0
        %893 = vmatprep.subr.mxu0 0.0
        %894 = vmatpush2.xpose.msra.mxu0 0.0
        %895 = vmatprep.subr.mxu0 0.0
        %896 = vmatpush2.xpose.msra.mxu0 0.0
        %897 = vmatprep.subr.mxu0 0.0
        %898 = vmatpush2.xpose.msra.mxu0 0.0
        %899 = vmatprep.subr.mxu0 0.0
        %900 = vmatpush2.xpose.msra.mxu0 0.0
        %901 = vmatprep.subr.mxu0 0.0
        %902 = vmatpush2.xpose.msra.mxu0 0.0
        %903 = vmatprep.subr.mxu0 0.0
        %904 = vmatpush2.xpose.msra.mxu0 0.0
        %905 = vmatprep.subr.mxu0 0.0
        %906 = vmatpush2.xpose.msra.mxu0 0.0
        %907 = vmatprep.subr.mxu0 0.0
        %908 = vmatpush2.xpose.msra.mxu0 0.0
        %909 = vmatprep.subr.mxu0 0.0
        %910 = vmatpush2.xpose.msra.mxu0 0.0
        %911 = vmatprep.subr.mxu0 0.0
        %912 = vmatpush2.xpose.msra.mxu0 0.0
        %913 = vmatprep.subr.mxu0 0.0
        %914 = vmatpush2.xpose.msra.mxu0 0.0
        %915 = vmatprep.mubr.f32.mxu0 0.0
        %916 = vmatmul.mubr.f32.gmra.mxu0 %v846
        %v917 = vpop.f32.mrf.mxu0
        %v918 = vadd.f32 0.0, %v917
        %v919 = vpop.f32.mrf.mxu0
        %920 = vdwg.mxu0
        %vm921 = vcmask 64512
        %v922 = vsel %vm921, %v690, -inf
        %923 = vmax.xlane.f32.xlu0 %v922
        %v924 = vpop.xlane.xlu0 %923
        %v925 = vsel %vm921, %v766, -inf
        %926 = vmax.xlane.f32.xlu0 %v925
        %v927 = vpop.xlane.xlu0 %926
        %v928 = vsel %vm921, %v842, -inf
        %929 = vmax.xlane.f32.xlu0 %v928
        %v930 = vpop.xlane.xlu0 %929
        %v931 = vsel %vm921, %v918, -inf
        %932 = vmax.xlane.f32.xlu0 %v931
        %v933 = vpop.xlane.xlu0 %932
        %v934 = vsub.f32 %v690, %v924
        %v935 = vsub.f32 %v766, %v927
        %v936 = vsub.f32 %v842, %v930
        %v937 = vsub.f32 %v918, %v933
        %v938 = vmul.f32 %v934, 1.442695
        %v939 = vpow.pop %v938
        %v940 = vmul.f32 %v935, 1.442695
        %v941 = vpow.pop %v940
        %v942 = vmul.f32 %v936, 1.442695
        %v943 = vpow.pop %v942
        %v944 = vmul.f32 %v937, 1.442695
        %v945 = vpow.pop %v944
        %v946 = vsel %vm921, %v939, 0.0
        %947 = vadd.xlane.f32.xlu0 %v946
        %v948 = vpop.xlane.xlu0 %947
        %v949 = vsel %vm921, %v941, 0.0
        %950 = vadd.xlane.f32.xlu0 %v949
        %v951 = vpop.xlane.xlu0 %950
        %v952 = vsel %vm921, %v943, 0.0
        %953 = vadd.xlane.f32.xlu0 %v952
        %v954 = vpop.xlane.xlu0 %953
        %v955 = vsel %vm921, %v945, 0.0
        %956 = vadd.xlane.f32.xlu0 %v955
        %v957 = vpop.xlane.xlu0 %956
        %v958 = vrcp.pop %v948
        %v959 = vrcp.pop %v951
        %v960 = vrcp.pop %v954
        %v961 = vrcp.pop %v957
        %v962 = vmul.f32 %v939, %v958
        %v963 = vmul.f32 %v941, %v959
        %v964 = vmul.f32 %v943, %v960
        %v965 = vmul.f32 %v945, %v961
        %v967 = vsel %vm921, %v962, 0
        %969 = vmatprep.subr.mxu0 0.0
        %970 = vmatpush1.msra.mxu0 0.0
        %971 = vmatprep.subr.mxu0 0.0
        %972 = vmatpush1.msra.mxu0 0.0
        %973 = vmatprep.subr.mxu0 0.0
        %974 = vmatpush1.msra.mxu0 0.0
        %975 = vmatprep.subr.mxu0 0.0
        %976 = vmatpush1.msra.mxu0 0.0
        %977 = vmatprep.subr.mxu0 0.0
        %978 = vmatpush1.msra.mxu0 0.0
        %979 = vmatprep.subr.mxu0 0.0
        %980 = vmatpush1.msra.mxu0 0.0
        %981 = vmatprep.subr.mxu0 0.0
        %982 = vmatpush1.msra.mxu0 0.0
        %983 = vmatprep.subr.mxu0 0.0
        %984 = vmatpush1.msra.mxu0 0.0
        %985 = vmatprep.subr.mxu0 0.0
        %986 = vmatpush1.msra.mxu0 0.0
        %987 = vmatprep.subr.mxu0 0.0
        %988 = vmatpush1.msra.mxu0 0.0
        %989 = vmatprep.subr.mxu0 0.0
        %990 = vmatpush1.msra.mxu0 0.0
        %991 = vmatprep.subr.mxu0 0.0
        %992 = vmatpush1.msra.mxu0 0.0
        %993 = vmatprep.subr.mxu0 0.0
        %994 = vmatpush1.msra.mxu0 0.0
        %995 = vmatprep.subr.mxu0 0.0
        %996 = vmatpush1.msra.mxu0 0.0
        %997 = vmatprep.subr.mxu0 0.0
        %998 = vmatpush1.msra.mxu0 0.0
        %999 = vmatprep.subr.mxu0 0.0
        %1000 = vmatpush1.msra.mxu0 %v612
        %1001 = vmatprep.subr.mxu0 0.0
        %1002 = vmatpush2.msra.mxu0 0.0
        %1003 = vmatprep.subr.mxu0 0.0
        %1004 = vmatpush2.msra.mxu0 0.0
        %1005 = vmatprep.subr.mxu0 0.0
        %1006 = vmatpush2.msra.mxu0 0.0
        %1007 = vmatprep.subr.mxu0 0.0
        %1008 = vmatpush2.msra.mxu0 0.0
        %1009 = vmatprep.subr.mxu0 0.0
        %1010 = vmatpush2.msra.mxu0 0.0
        %1011 = vmatprep.subr.mxu0 0.0
        %1012 = vmatpush2.msra.mxu0 0.0
        %1013 = vmatprep.subr.mxu0 0.0
        %1014 = vmatpush2.msra.mxu0 0.0
        %1015 = vmatprep.subr.mxu0 0.0
        %1016 = vmatpush2.msra.mxu0 0.0
        %1017 = vmatprep.subr.mxu0 0.0
        %1018 = vmatpush2.msra.mxu0 0.0
        %1019 = vmatprep.subr.mxu0 0.0
        %1020 = vmatpush2.msra.mxu0 0.0
        %1021 = vmatprep.subr.mxu0 0.0
        %1022 = vmatpush2.msra.mxu0 0.0
        %1023 = vmatprep.subr.mxu0 0.0
        %1024 = vmatpush2.msra.mxu0 0.0
        %1025 = vmatprep.subr.mxu0 0.0
        %1026 = vmatpush2.msra.mxu0 0.0
        %1027 = vmatprep.subr.mxu0 0.0
        %1028 = vmatpush2.msra.mxu0 0.0
        %1029 = vmatprep.subr.mxu0 0.0
        %1030 = vmatpush2.msra.mxu0 0.0
        %1031 = vmatprep.subr.mxu0 0.0
        %1032 = vmatpush2.msra.mxu0 0.0
        %1033 = vmatprep.mubr.f32.mxu0 0.0
        %1034 = vmatmul.mubr.f32.gmra.mxu0 %v967
        %v1035 = vpop.f32.mrf.mxu0
        %v1036 = vadd.f32 0.0, %v1035
        %v1037 = vpop.f32.mrf.mxu0
        %1038 = vdwg.mxu0
        %v1040 = vsel %vm921, %v963, 0
        %1042 = vmatprep.subr.mxu0 0.0
        %1043 = vmatpush1.msra.mxu0 0.0
        %1044 = vmatprep.subr.mxu0 0.0
        %1045 = vmatpush1.msra.mxu0 0.0
        %1046 = vmatprep.subr.mxu0 0.0
        %1047 = vmatpush1.msra.mxu0 0.0
        %1048 = vmatprep.subr.mxu0 0.0
        %1049 = vmatpush1.msra.mxu0 0.0
        %1050 = vmatprep.subr.mxu0 0.0
        %1051 = vmatpush1.msra.mxu0 0.0
        %1052 = vmatprep.subr.mxu0 0.0
        %1053 = vmatpush1.msra.mxu0 0.0
        %1054 = vmatprep.subr.mxu0 0.0
        %1055 = vmatpush1.msra.mxu0 0.0
        %1056 = vmatprep.subr.mxu0 0.0
        %1057 = vmatpush1.msra.mxu0 0.0
        %1058 = vmatprep.subr.mxu0 0.0
        %1059 = vmatpush1.msra.mxu0 0.0
        %1060 = vmatprep.subr.mxu0 0.0
        %1061 = vmatpush1.msra.mxu0 0.0
        %1062 = vmatprep.subr.mxu0 0.0
        %1063 = vmatpush1.msra.mxu0 0.0
        %1064 = vmatprep.subr.mxu0 0.0
        %1065 = vmatpush1.msra.mxu0 0.0
        %1066 = vmatprep.subr.mxu0 0.0
        %1067 = vmatpush1.msra.mxu0 0.0
        %1068 = vmatprep.subr.mxu0 0.0
        %1069 = vmatpush1.msra.mxu0 0.0
        %1070 = vmatprep.subr.mxu0 0.0
        %1071 = vmatpush1.msra.mxu0 0.0
        %1072 = vmatprep.subr.mxu0 0.0
        %1073 = vmatpush1.msra.mxu0 %v613
        %1074 = vmatprep.subr.mxu0 0.0
        %1075 = vmatpush2.msra.mxu0 0.0
        %1076 = vmatprep.subr.mxu0 0.0
        %1077 = vmatpush2.msra.mxu0 0.0
        %1078 = vmatprep.subr.mxu0 0.0
        %1079 = vmatpush2.msra.mxu0 0.0
        %1080 = vmatprep.subr.mxu0 0.0
        %1081 = vmatpush2.msra.mxu0 0.0
        %1082 = vmatprep.subr.mxu0 0.0
        %1083 = vmatpush2.msra.mxu0 0.0
        %1084 = vmatprep.subr.mxu0 0.0
        %1085 = vmatpush2.msra.mxu0 0.0
        %1086 = vmatprep.subr.mxu0 0.0
        %1087 = vmatpush2.msra.mxu0 0.0
        %1088 = vmatprep.subr.mxu0 0.0
        %1089 = vmatpush2.msra.mxu0 0.0
        %1090 = vmatprep.subr.mxu0 0.0
        %1091 = vmatpush2.msra.mxu0 0.0
        %1092 = vmatprep.subr.mxu0 0.0
        %1093 = vmatpush2.msra.mxu0 0.0
        %1094 = vmatprep.subr.mxu0 0.0
        %1095 = vmatpush2.msra.mxu0 0.0
        %1096 = vmatprep.subr.mxu0 0.0
        %1097 = vmatpush2.msra.mxu0 0.0
        %1098 = vmatprep.subr.mxu0 0.0
        %1099 = vmatpush2.msra.mxu0 0.0
        %1100 = vmatprep.subr.mxu0 0.0
        %1101 = vmatpush2.msra.mxu0 0.0
        %1102 = vmatprep.subr.mxu0 0.0
        %1103 = vmatpush2.msra.mxu0 0.0
        %1104 = vmatprep.subr.mxu0 0.0
        %1105 = vmatpush2.msra.mxu0 0.0
        %1106 = vmatprep.mubr.f32.mxu0 0.0
        %1107 = vmatmul.mubr.f32.gmra.mxu0 %v1040
        %v1108 = vpop.f32.mrf.mxu0
        %v1109 = vadd.f32 0.0, %v1108
        %v1110 = vpop.f32.mrf.mxu0
        %1111 = vdwg.mxu0
        %v1113 = vsel %vm921, %v964, 0
        %1115 = vmatprep.subr.mxu0 0.0
        %1116 = vmatpush1.msra.mxu0 0.0
        %1117 = vmatprep.subr.mxu0 0.0
        %1118 = vmatpush1.msra.mxu0 0.0
        %1119 = vmatprep.subr.mxu0 0.0
        %1120 = vmatpush1.msra.mxu0 0.0
        %1121 = vmatprep.subr.mxu0 0.0
        %1122 = vmatpush1.msra.mxu0 0.0
        %1123 = vmatprep.subr.mxu0 0.0
        %1124 = vmatpush1.msra.mxu0 0.0
        %1125 = vmatprep.subr.mxu0 0.0
        %1126 = vmatpush1.msra.mxu0 0.0
        %1127 = vmatprep.subr.mxu0 0.0
        %1128 = vmatpush1.msra.mxu0 0.0
        %1129 = vmatprep.subr.mxu0 0.0
        %1130 = vmatpush1.msra.mxu0 0.0
        %1131 = vmatprep.subr.mxu0 0.0
        %1132 = vmatpush1.msra.mxu0 0.0
        %1133 = vmatprep.subr.mxu0 0.0
        %1134 = vmatpush1.msra.mxu0 0.0
        %1135 = vmatprep.subr.mxu0 0.0
        %1136 = vmatpush1.msra.mxu0 0.0
        %1137 = vmatprep.subr.mxu0 0.0
        %1138 = vmatpush1.msra.mxu0 0.0
        %1139 = vmatprep.subr.mxu0 0.0
        %1140 = vmatpush1.msra.mxu0 0.0
        %1141 = vmatprep.subr.mxu0 0.0
        %1142 = vmatpush1.msra.mxu0 0.0
        %1143 = vmatprep.subr.mxu0 0.0
        %1144 = vmatpush1.msra.mxu0 0.0
        %1145 = vmatprep.subr.mxu0 0.0
        %1146 = vmatpush1.msra.mxu0 %v614
        %1147 = vmatprep.subr.mxu0 0.0
        %1148 = vmatpush2.msra.mxu0 0.0
        %1149 = vmatprep.subr.mxu0 0.0
        %1150 = vmatpush2.msra.mxu0 0.0
        %1151 = vmatprep.subr.mxu0 0.0
        %1152 = vmatpush2.msra.mxu0 0.0
        %1153 = vmatprep.subr.mxu0 0.0
        %1154 = vmatpush2.msra.mxu0 0.0
        %1155 = vmatprep.subr.mxu0 0.0
        %1156 = vmatpush2.msra.mxu0 0.0
        %1157 = vmatprep.subr.mxu0 0.0
        %1158 = vmatpush2.msra.mxu0 0.0
        %1159 = vmatprep.subr.mxu0 0.0
        %1160 = vmatpush2.msra.mxu0 0.0
        %1161 = vmatprep.subr.mxu0 0.0
        %1162 = vmatpush2.msra.mxu0 0.0
        %1163 = vmatprep.subr.mxu0 0.0
        %1164 = vmatpush2.msra.mxu0 0.0
        %1165 = vmatprep.subr.mxu0 0.0
        %1166 = vmatpush2.msra.mxu0 0.0
        %1167 = vmatprep.subr.mxu0 0.0
        %1168 = vmatpush2.msra.mxu0 0.0
        %1169 = vmatprep.subr.mxu0 0.0
        %1170 = vmatpush2.msra.mxu0 0.0
        %1171 = vmatprep.subr.mxu0 0.0
        %1172 = vmatpush2.msra.mxu0 0.0
        %1173 = vmatprep.subr.mxu0 0.0
        %1174 = vmatpush2.msra.mxu0 0.0
        %1175 = vmatprep.subr.mxu0 0.0
        %1176 = vmatpush2.msra.mxu0 0.0
        %1177 = vmatprep.subr.mxu0 0.0
        %1178 = vmatpush2.msra.mxu0 0.0
        %1179 = vmatprep.mubr.f32.mxu0 0.0
        %1180 = vmatmul.mubr.f32.gmra.mxu0 %v1113
        %v1181 = vpop.f32.mrf.mxu0
        %v1182 = vadd.f32 0.0, %v1181
        %v1183 = vpop.f32.mrf.mxu0
        %1184 = vdwg.mxu0
        %v1186 = vsel %vm921, %v965, 0
        %1188 = vmatprep.subr.mxu0 0.0
        %1189 = vmatpush1.msra.mxu0 0.0
        %1190 = vmatprep.subr.mxu0 0.0
        %1191 = vmatpush1.msra.mxu0 0.0
        %1192 = vmatprep.subr.mxu0 0.0
        %1193 = vmatpush1.msra.mxu0 0.0
        %1194 = vmatprep.subr.mxu0 0.0
        %1195 = vmatpush1.msra.mxu0 0.0
        %1196 = vmatprep.subr.mxu0 0.0
        %1197 = vmatpush1.msra.mxu0 0.0
        %1198 = vmatprep.subr.mxu0 0.0
        %1199 = vmatpush1.msra.mxu0 0.0
        %1200 = vmatprep.subr.mxu0 0.0
        %1201 = vmatpush1.msra.mxu0 0.0
        %1202 = vmatprep.subr.mxu0 0.0
        %1203 = vmatpush1.msra.mxu0 0.0
        %1204 = vmatprep.subr.mxu0 0.0
        %1205 = vmatpush1.msra.mxu0 0.0
        %1206 = vmatprep.subr.mxu0 0.0
        %1207 = vmatpush1.msra.mxu0 0.0
        %1208 = vmatprep.subr.mxu0 0.0
        %1209 = vmatpush1.msra.mxu0 0.0
        %1210 = vmatprep.subr.mxu0 0.0
        %1211 = vmatpush1.msra.mxu0 0.0
        %1212 = vmatprep.subr.mxu0 0.0
        %1213 = vmatpush1.msra.mxu0 0.0
        %1214 = vmatprep.subr.mxu0 0.0
        %1215 = vmatpush1.msra.mxu0 0.0
        %1216 = vmatprep.subr.mxu0 0.0
        %1217 = vmatpush1.msra.mxu0 0.0
        %1218 = vmatprep.subr.mxu0 0.0
        %1219 = vmatpush1.msra.mxu0 %v615
        %1220 = vmatprep.subr.mxu0 0.0
        %1221 = vmatpush2.msra.mxu0 0.0
        %1222 = vmatprep.subr.mxu0 0.0
        %1223 = vmatpush2.msra.mxu0 0.0
        %1224 = vmatprep.subr.mxu0 0.0
        %1225 = vmatpush2.msra.mxu0 0.0
        %1226 = vmatprep.subr.mxu0 0.0
        %1227 = vmatpush2.msra.mxu0 0.0
        %1228 = vmatprep.subr.mxu0 0.0
        %1229 = vmatpush2.msra.mxu0 0.0
        %1230 = vmatprep.subr.mxu0 0.0
        %1231 = vmatpush2.msra.mxu0 0.0
        %1232 = vmatprep.subr.mxu0 0.0
        %1233 = vmatpush2.msra.mxu0 0.0
        %1234 = vmatprep.subr.mxu0 0.0
        %1235 = vmatpush2.msra.mxu0 0.0
        %1236 = vmatprep.subr.mxu0 0.0
        %1237 = vmatpush2.msra.mxu0 0.0
        %1238 = vmatprep.subr.mxu0 0.0
        %1239 = vmatpush2.msra.mxu0 0.0
        %1240 = vmatprep.subr.mxu0 0.0
        %1241 = vmatpush2.msra.mxu0 0.0
        %1242 = vmatprep.subr.mxu0 0.0
        %1243 = vmatpush2.msra.mxu0 0.0
        %1244 = vmatprep.subr.mxu0 0.0
        %1245 = vmatpush2.msra.mxu0 0.0
        %1246 = vmatprep.subr.mxu0 0.0
        %1247 = vmatpush2.msra.mxu0 0.0
        %1248 = vmatprep.subr.mxu0 0.0
        %1249 = vmatpush2.msra.mxu0 0.0
        %1250 = vmatprep.subr.mxu0 0.0
        %1251 = vmatpush2.msra.mxu0 0.0
        %1252 = vmatprep.mubr.f32.mxu0 0.0
        %1253 = vmatmul.mubr.f32.gmra.mxu0 %v1186
        %v1254 = vpop.f32.mrf.mxu0
        %v1255 = vadd.f32 0.0, %v1254
        %v1256 = vpop.f32.mrf.mxu0
        %1257 = vdwg.mxu0
        %v1258 = vld [vmem:[#allocation10] sm:$0xff]
        %v1259 = vld [vmem:[#allocation10 + $0x8] sm:$0xff]
        %v1260 = vld [vmem:[#allocation10 + $0x10] sm:$0xff]
        %v1261 = vld [vmem:[#allocation10 + $0x18] sm:$0xff]
        %v1262 = vld [vmem:[#allocation10 + $0x20] sm:$0xff]
        %v1263 = vld [vmem:[#allocation10 + $0x28] sm:$0xff]
        %v1264 = vld [vmem:[#allocation10 + $0x30] sm:$0xff]
        %v1265 = vld [vmem:[#allocation10 + $0x38] sm:$0xff]
        %v1267 = vsel %vm616, %v1036, 0
        %1269 = vmatprep.subr.mxu0 0.0
        %1270 = vmatpush1.msra.mxu0 0.0
        %1271 = vmatprep.subr.mxu0 0.0
        %1272 = vmatpush1.msra.mxu0 0.0
        %1273 = vmatprep.subr.mxu0 0.0
        %1274 = vmatpush1.msra.mxu0 0.0
        %1275 = vmatprep.subr.mxu0 0.0
        %1276 = vmatpush1.msra.mxu0 0.0
        %1277 = vmatprep.subr.mxu0 0.0
        %1278 = vmatpush1.msra.mxu0 0.0
        %1279 = vmatprep.subr.mxu0 0.0
        %1280 = vmatpush1.msra.mxu0 0.0
        %1281 = vmatprep.subr.mxu0 0.0
        %1282 = vmatpush1.msra.mxu0 0.0
        %1283 = vmatprep.subr.mxu0 0.0
        %1284 = vmatpush1.msra.mxu0 0.0
        %1285 = vmatprep.subr.mxu0 0.0
        %1286 = vmatpush1.msra.mxu0 0.0
        %1287 = vmatprep.subr.mxu0 0.0
        %1288 = vmatpush1.msra.mxu0 0.0
        %1289 = vmatprep.subr.mxu0 0.0
        %1290 = vmatpush1.msra.mxu0 0.0
        %1291 = vmatprep.subr.mxu0 0.0
        %1292 = vmatpush1.msra.mxu0 0.0
        %1293 = vmatprep.subr.mxu0 0.0
        %1294 = vmatpush1.msra.mxu0 0.0
        %1295 = vmatprep.subr.mxu0 0.0
        %1296 = vmatpush1.msra.mxu0 0.0
        %1297 = vmatprep.subr.mxu0 0.0
        %1298 = vmatpush1.msra.mxu0 %v1259
        %1299 = vmatprep.subr.mxu0 0.0
        %1300 = vmatpush1.msra.mxu0 %v1258
        %1301 = vmatprep.subr.mxu0 0.0
        %1302 = vmatpush2.msra.mxu0 0.0
        %1303 = vmatprep.subr.mxu0 0.0
        %1304 = vmatpush2.msra.mxu0 0.0
        %1305 = vmatprep.subr.mxu0 0.0
        %1306 = vmatpush2.msra.mxu0 0.0
        %1307 = vmatprep.subr.mxu0 0.0
        %1308 = vmatpush2.msra.mxu0 0.0
        %1309 = vmatprep.subr.mxu0 0.0
        %1310 = vmatpush2.msra.mxu0 0.0
        %1311 = vmatprep.subr.mxu0 0.0
        %1312 = vmatpush2.msra.mxu0 0.0
        %1313 = vmatprep.subr.mxu0 0.0
        %1314 = vmatpush2.msra.mxu0 0.0
        %1315 = vmatprep.subr.mxu0 0.0
        %1316 = vmatpush2.msra.mxu0 0.0
        %1317 = vmatprep.subr.mxu0 0.0
        %1318 = vmatpush2.msra.mxu0 0.0
        %1319 = vmatprep.subr.mxu0 0.0
        %1320 = vmatpush2.msra.mxu0 0.0
        %1321 = vmatprep.subr.mxu0 0.0
        %1322 = vmatpush2.msra.mxu0 0.0
        %1323 = vmatprep.subr.mxu0 0.0
        %1324 = vmatpush2.msra.mxu0 0.0
        %1325 = vmatprep.subr.mxu0 0.0
        %1326 = vmatpush2.msra.mxu0 0.0
        %1327 = vmatprep.subr.mxu0 0.0
        %1328 = vmatpush2.msra.mxu0 0.0
        %1329 = vmatprep.subr.mxu0 0.0
        %1330 = vmatpush2.msra.mxu0 0.0
        %1331 = vmatprep.subr.mxu0 0.0
        %1332 = vmatpush2.msra.mxu0 0.0
        %1333 = vmatprep.mubr.f32.mxu0 0.0
        %1334 = vmatmul.mubr.f32.gmra.mxu0 %v1267
        %v1335 = vpop.f32.mrf.mxu0
        %v1336 = vadd.f32 0.0, %v1335
        %v1337 = vpop.f32.mrf.mxu0
        %1338 = vdwg.mxu0
        %v1340 = vsel %vm616, %v1109, 0
        %1342 = vmatprep.subr.mxu0 0.0
        %1343 = vmatpush1.msra.mxu0 0.0
        %1344 = vmatprep.subr.mxu0 0.0
        %1345 = vmatpush1.msra.mxu0 0.0
        %1346 = vmatprep.subr.mxu0 0.0
        %1347 = vmatpush1.msra.mxu0 0.0
        %1348 = vmatprep.subr.mxu0 0.0
        %1349 = vmatpush1.msra.mxu0 0.0
        %1350 = vmatprep.subr.mxu0 0.0
        %1351 = vmatpush1.msra.mxu0 0.0
        %1352 = vmatprep.subr.mxu0 0.0
        %1353 = vmatpush1.msra.mxu0 0.0
        %1354 = vmatprep.subr.mxu0 0.0
        %1355 = vmatpush1.msra.mxu0 0.0
        %1356 = vmatprep.subr.mxu0 0.0
        %1357 = vmatpush1.msra.mxu0 0.0
        %1358 = vmatprep.subr.mxu0 0.0
        %1359 = vmatpush1.msra.mxu0 0.0
        %1360 = vmatprep.subr.mxu0 0.0
        %1361 = vmatpush1.msra.mxu0 0.0
        %1362 = vmatprep.subr.mxu0 0.0
        %1363 = vmatpush1.msra.mxu0 0.0
        %1364 = vmatprep.subr.mxu0 0.0
        %1365 = vmatpush1.msra.mxu0 0.0
        %1366 = vmatprep.subr.mxu0 0.0
        %1367 = vmatpush1.msra.mxu0 0.0
        %1368 = vmatprep.subr.mxu0 0.0
        %1369 = vmatpush1.msra.mxu0 0.0
        %1370 = vmatprep.subr.mxu0 0.0
        %1371 = vmatpush1.msra.mxu0 %v1261
        %1372 = vmatprep.subr.mxu0 0.0
        %1373 = vmatpush1.msra.mxu0 %v1260
        %1374 = vmatprep.subr.mxu0 0.0
        %1375 = vmatpush2.msra.mxu0 0.0
        %1376 = vmatprep.subr.mxu0 0.0
        %1377 = vmatpush2.msra.mxu0 0.0
        %1378 = vmatprep.subr.mxu0 0.0
        %1379 = vmatpush2.msra.mxu0 0.0
        %1380 = vmatprep.subr.mxu0 0.0
        %1381 = vmatpush2.msra.mxu0 0.0
        %1382 = vmatprep.subr.mxu0 0.0
        %1383 = vmatpush2.msra.mxu0 0.0
        %1384 = vmatprep.subr.mxu0 0.0
        %1385 = vmatpush2.msra.mxu0 0.0
        %1386 = vmatprep.subr.mxu0 0.0
        %1387 = vmatpush2.msra.mxu0 0.0
        %1388 = vmatprep.subr.mxu0 0.0
        %1389 = vmatpush2.msra.mxu0 0.0
        %1390 = vmatprep.subr.mxu0 0.0
        %1391 = vmatpush2.msra.mxu0 0.0
        %1392 = vmatprep.subr.mxu0 0.0
        %1393 = vmatpush2.msra.mxu0 0.0
        %1394 = vmatprep.subr.mxu0 0.0
        %1395 = vmatpush2.msra.mxu0 0.0
        %1396 = vmatprep.subr.mxu0 0.0
        %1397 = vmatpush2.msra.mxu0 0.0
        %1398 = vmatprep.subr.mxu0 0.0
        %1399 = vmatpush2.msra.mxu0 0.0
        %1400 = vmatprep.subr.mxu0 0.0
        %1401 = vmatpush2.msra.mxu0 0.0
        %1402 = vmatprep.subr.mxu0 0.0
        %1403 = vmatpush2.msra.mxu0 0.0
        %1404 = vmatprep.subr.mxu0 0.0
        %1405 = vmatpush2.msra.mxu0 0.0
        %1406 = vmatprep.mubr.f32.mxu0 0.0
        %1407 = vmatmul.mubr.f32.gmra.mxu0 %v1340
        %v1408 = vpop.f32.mrf.mxu0
        %v1409 = vadd.f32 0.0, %v1408
        %v1410 = vpop.f32.mrf.mxu0
        %1411 = vdwg.mxu0
        %v1413 = vsel %vm616, %v1182, 0
        %1415 = vmatprep.subr.mxu0 0.0
        %1416 = vmatpush1.msra.mxu0 0.0
        %1417 = vmatprep.subr.mxu0 0.0
        %1418 = vmatpush1.msra.mxu0 0.0
        %1419 = vmatprep.subr.mxu0 0.0
        %1420 = vmatpush1.msra.mxu0 0.0
        %1421 = vmatprep.subr.mxu0 0.0
        %1422 = vmatpush1.msra.mxu0 0.0
        %1423 = vmatprep.subr.mxu0 0.0
        %1424 = vmatpush1.msra.mxu0 0.0
        %1425 = vmatprep.subr.mxu0 0.0
        %1426 = vmatpush1.msra.mxu0 0.0
        %1427 = vmatprep.subr.mxu0 0.0
        %1428 = vmatpush1.msra.mxu0 0.0
        %1429 = vmatprep.subr.mxu0 0.0
        %1430 = vmatpush1.msra.mxu0 0.0
        %1431 = vmatprep.subr.mxu0 0.0
        %1432 = vmatpush1.msra.mxu0 0.0
        %1433 = vmatprep.subr.mxu0 0.0
        %1434 = vmatpush1.msra.mxu0 0.0
        %1435 = vmatprep.subr.mxu0 0.0
        %1436 = vmatpush1.msra.mxu0 0.0
        %1437 = vmatprep.subr.mxu0 0.0
        %1438 = vmatpush1.msra.mxu0 0.0
        %1439 = vmatprep.subr.mxu0 0.0
        %1440 = vmatpush1.msra.mxu0 0.0
        %1441 = vmatprep.subr.mxu0 0.0
        %1442 = vmatpush1.msra.mxu0 0.0
        %1443 = vmatprep.subr.mxu0 0.0
        %1444 = vmatpush1.msra.mxu0 %v1263
        %1445 = vmatprep.subr.mxu0 0.0
        %1446 = vmatpush1.msra.mxu0 %v1262
        %1447 = vmatprep.subr.mxu0 0.0
        %1448 = vmatpush2.msra.mxu0 0.0
        %1449 = vmatprep.subr.mxu0 0.0
        %1450 = vmatpush2.msra.mxu0 0.0
        %1451 = vmatprep.subr.mxu0 0.0
        %1452 = vmatpush2.msra.mxu0 0.0
        %1453 = vmatprep.subr.mxu0 0.0
        %1454 = vmatpush2.msra.mxu0 0.0
        %1455 = vmatprep.subr.mxu0 0.0
        %1456 = vmatpush2.msra.mxu0 0.0
        %1457 = vmatprep.subr.mxu0 0.0
        %1458 = vmatpush2.msra.mxu0 0.0
        %1459 = vmatprep.subr.mxu0 0.0
        %1460 = vmatpush2.msra.mxu0 0.0
        %1461 = vmatprep.subr.mxu0 0.0
        %1462 = vmatpush2.msra.mxu0 0.0
        %1463 = vmatprep.subr.mxu0 0.0
        %1464 = vmatpush2.msra.mxu0 0.0
        %1465 = vmatprep.subr.mxu0 0.0
        %1466 = vmatpush2.msra.mxu0 0.0
        %1467 = vmatprep.subr.mxu0 0.0
        %1468 = vmatpush2.msra.mxu0 0.0
        %1469 = vmatprep.subr.mxu0 0.0
        %1470 = vmatpush2.msra.mxu0 0.0
        %1471 = vmatprep.subr.mxu0 0.0
        %1472 = vmatpush2.msra.mxu0 0.0
        %1473 = vmatprep.subr.mxu0 0.0
        %1474 = vmatpush2.msra.mxu0 0.0
        %1475 = vmatprep.subr.mxu0 0.0
        %1476 = vmatpush2.msra.mxu0 0.0
        %1477 = vmatprep.subr.mxu0 0.0
        %1478 = vmatpush2.msra.mxu0 0.0
        %1479 = vmatprep.mubr.f32.mxu0 0.0
        %1480 = vmatmul.mubr.f32.gmra.mxu0 %v1413
        %v1481 = vpop.f32.mrf.mxu0
        %v1482 = vadd.f32 0.0, %v1481
        %v1483 = vpop.f32.mrf.mxu0
        %1484 = vdwg.mxu0
        %v1486 = vsel %vm616, %v1255, 0
        %1488 = vmatprep.subr.mxu0 0.0
        %1489 = vmatpush1.msra.mxu0 0.0
        %1490 = vmatprep.subr.mxu0 0.0
        %1491 = vmatpush1.msra.mxu0 0.0
        %1492 = vmatprep.subr.mxu0 0.0
        %1493 = vmatpush1.msra.mxu0 0.0
        %1494 = vmatprep.subr.mxu0 0.0
        %1495 = vmatpush1.msra.mxu0 0.0
        %1496 = vmatprep.subr.mxu0 0.0
        %1497 = vmatpush1.msra.mxu0 0.0
        %1498 = vmatprep.subr.mxu0 0.0
        %1499 = vmatpush1.msra.mxu0 0.0
        %1500 = vmatprep.subr.mxu0 0.0
        %1501 = vmatpush1.msra.mxu0 0.0
        %1502 = vmatprep.subr.mxu0 0.0
        %1503 = vmatpush1.msra.mxu0 0.0
        %1504 = vmatprep.subr.mxu0 0.0
        %1505 = vmatpush1.msra.mxu0 0.0
        %1506 = vmatprep.subr.mxu0 0.0
        %1507 = vmatpush1.msra.mxu0 0.0
        %1508 = vmatprep.subr.mxu0 0.0
        %1509 = vmatpush1.msra.mxu0 0.0
        %1510 = vmatprep.subr.mxu0 0.0
        %1511 = vmatpush1.msra.mxu0 0.0
        %1512 = vmatprep.subr.mxu0 0.0
        %1513 = vmatpush1.msra.mxu0 0.0
        %1514 = vmatprep.subr.mxu0 0.0
        %1515 = vmatpush1.msra.mxu0 0.0
        %1516 = vmatprep.subr.mxu0 0.0
        %1517 = vmatpush1.msra.mxu0 %v1265
        %1518 = vmatprep.subr.mxu0 0.0
        %1519 = vmatpush1.msra.mxu0 %v1264
        %1520 = vmatprep.subr.mxu0 0.0
        %1521 = vmatpush2.msra.mxu0 0.0
        %1522 = vmatprep.subr.mxu0 0.0
        %1523 = vmatpush2.msra.mxu0 0.0
        %1524 = vmatprep.subr.mxu0 0.0
        %1525 = vmatpush2.msra.mxu0 0.0
        %1526 = vmatprep.subr.mxu0 0.0
        %1527 = vmatpush2.msra.mxu0 0.0
        %1528 = vmatprep.subr.mxu0 0.0
        %1529 = vmatpush2.msra.mxu0 0.0
        %1530 = vmatprep.subr.mxu0 0.0
        %1531 = vmatpush2.msra.mxu0 0.0
        %1532 = vmatprep.subr.mxu0 0.0
        %1533 = vmatpush2.msra.mxu0 0.0
        %1534 = vmatprep.subr.mxu0 0.0
        %1535 = vmatpush2.msra.mxu0 0.0
        %1536 = vmatprep.subr.mxu0 0.0
        %1537 = vmatpush2.msra.mxu0 0.0
        %1538 = vmatprep.subr.mxu0 0.0
        %1539 = vmatpush2.msra.mxu0 0.0
        %1540 = vmatprep.subr.mxu0 0.0
        %1541 = vmatpush2.msra.mxu0 0.0
        %1542 = vmatprep.subr.mxu0 0.0
        %1543 = vmatpush2.msra.mxu0 0.0
        %1544 = vmatprep.subr.mxu0 0.0
        %1545 = vmatpush2.msra.mxu0 0.0
        %1546 = vmatprep.subr.mxu0 0.0
        %1547 = vmatpush2.msra.mxu0 0.0
        %1548 = vmatprep.subr.mxu0 0.0
        %1549 = vmatpush2.msra.mxu0 0.0
        %1550 = vmatprep.subr.mxu0 0.0
        %1551 = vmatpush2.msra.mxu0 0.0
        %1552 = vmatprep.mubr.f32.mxu0 0.0
        %1553 = vmatmul.mubr.f32.gmra.mxu0 %v1486
        %v1554 = vpop.f32.mrf.mxu0
        %v1555 = vadd.f32 0.0, %v1554
        %v1556 = vpop.f32.mrf.mxu0
        %1557 = vdwg.mxu0
        %vm1558 = vcmask 261120
        %v1559 = vsel %vm1558, %v1336, 0.0
        %v1560 = vsel %vm1558, %v1409, 0.0
        %v1561 = vadd.f32 %v1559, %v1560
        %v1562 = vsel %vm1558, %v1482, 0.0
        %v1563 = vadd.f32 %v1561, %v1562
        %v1564 = vsel %vm1558, %v1555, 0.0
        %v1565 = vadd.f32 %v1563, %v1564
        %v1566 = vld [vmem:[%s3] sm:$0x1]
        %v1568 = vlaneseq
        %v1569 = vshrl.u32 %v1568, 7
        %v1570 = vsub.s32 0, %v1569
        %v1571 = vrot.slane %v1566, %v1570
        %v1573 = vadd.f32 %v1565, %v1571
        %1574 = vst.msk [vmem:[%s255] sm:$0xff] %vm1558, %v1573
        %s1575 = sand.u32 %s133, 1
        %s1576 = scalar_lea.sflag [#allocation7], %s1575
        %s1577 = sand.u32 %s133, 1
        %s1578 = smul.addr %s1577, 8
        %s1579 = scalar_lea.vmem [#allocation11], %s1578
        // Predicated region
        $region53: #{tpu_custom_call.1} parent=35 // pred_check
          %p1580 = pneg %p143
        $region54: #{tpu_custom_call.1} parent=35 // pred_check_branch
          %1582 = sbr.rel (%p1580) target = $region56
        $region55: #{tpu_custom_call.1} parent=35 // pred_region
          %s1584 = ssub.s32 128, 128
          %1585 = vsyncadd %s1576, %s1584
          %s1586 = sadd.s32 %s27, %s26
          %s1587 = smul.addr %s1586, 128
          %s1588 = scalar_lea.hbm %s4, %s1587
          %s1590 = sshll.u32 %s1579, 4
          %s1591 = int_to_ptr.vmem [resolvable:$true] %s1590
          %1593 = dma.vmem_to_hbm [thread:$0]  %s1591, 128, %s1588, %s1576
        $region56: #{tpu_custom_call.1} parent=35 // pred_fallthru
          _
      $region36: #{tpu_custom_call.1} parent=5 // pred_fallthru
        _
      %p1594 = scmp.le.s32.totalorder 2, %s17
      // Predicated region
      $region57: #{tpu_custom_call.1} parent=5 // pred_check
        %p1595 = pneg %p1594
      $region58: #{tpu_custom_call.1} parent=5 // pred_check_branch
        %1597 = sbr.rel (%p1595) target = $region60
      $region59: #{tpu_custom_call.1} parent=5 // pred_region
        %s1598 = ssub.s32 %s17, 2
        // Predicated region
        $region61: #{tpu_custom_call.1} parent=59 // pred_check
          %p1599 = pneg %p149
        $region62: #{tpu_custom_call.1} parent=59 // pred_check_branch
          %1601 = sbr.rel (%p1599) target = $region64
        $region63: #{tpu_custom_call.1} parent=59 // pred_region
          %s1602 = sand.u32 %s134, 1
          %s1603 = scalar_lea.sflag [#allocation7], %s1602
          %s1604 = sand.u32 %s134, 1
          %s1605 = smul.addr %s1604, 8
          %s1606 = scalar_lea.vmem [#allocation11], %s1605
          %1607 = dma.done %s1603, 128
        $region64: #{tpu_custom_call.1} parent=59 // pred_fallthru
          _
      $region60: #{tpu_custom_call.1} parent=5 // pred_fallthru
        _
    $region6: #{tpu_custom_call.1} parent=1 // loop_footer
      %s21 = sadd.s32 1, %s17
    $region7: #{tpu_custom_call.1} parent=1 // loop_footer_branch
      %16 = sbr.rel target = $region3
    $region8: #{tpu_custom_call.1} parent=1 // loop_exit
      _
    %1608 = vsyncpa [#allocation6], 1
    %s1609 = scalar_lea.sflag [#allocation6], 1
    %1610 = vsyncpa %s1609, 1
    %1611 = vsyncpa [#allocation9], 1
    %1612 = vsyncpa [#allocation7], 1
    %s1613 = scalar_lea.sflag [#allocation7], 1
    %1614 = vsyncpa %s1613, 1

</llo_original>
